<compile_context>
chip_gen: v6e
topology: v6e:2x2x1
jax: 0.10.0
libtpu: 0.0.40
codegen_flags: <defaults>
</compile_context>

<pallas_src>
import functools

import numpy as np
import jax
import jax.numpy as jnp
from jax.experimental import pallas as pl
from jax.experimental.pallas import tpu as pltpu

S_PAD = 128  # padded text-context length (lane-dense attention keys)


# ----------------------------------------------------------------------------
# Fused Pallas kernel: text-encode + UNet-surrogate + get_x0, one batch / step
# ----------------------------------------------------------------------------
def _fused_kernel(inv_sa_ref, sb_ref,                      # SMEM scalars (B,)
                  x_tok_ref, x_chw_ref, tok_ref, cond_ref, # per-batch blocks
                  w_text_ref, w_pool_ref, w_add_text_ref,  # resident weights
                  w_in_ref, w_q_ref, w_k_ref, w_v_ref, w_o_ref, w_outT_ref,
                  img_ref, emb_ref, pooled_ref,            # outputs
                  *, seq_len, scale):
    f32 = jnp.float32
    bf16 = jnp.bfloat16
    b = pl.program_id(0)

    # --- surrogate SDXL text encoder (padded context rows are zero) --------
    tok = tok_ref[...]                                             # (S_PAD, HID) f32
    emb_full = jnp.dot(tok.astype(bf16), w_text_ref[...],
                       preferred_element_type=f32)                 # (S_PAD, D) f32
    emb_ref[...] = emb_full[:seq_len, :]                           # (S, D)

    pooled_row = jnp.sum(tok, axis=0, keepdims=True) * (1.0 / seq_len)   # (1, HID)
    pooled = jnp.dot(pooled_row.astype(bf16), w_pool_ref[...],
                     preferred_element_type=f32)                   # (1, D)
    pooled_ref[...] = pooled

    # --- conditioning: precomputed time/time-ids part + pooled-text part ---
    cond = cond_ref[...] + jnp.dot(pooled.astype(bf16), w_add_text_ref[...],
                                   preferred_element_type=f32)     # (1, D)

    # --- surrogate UNet: input projection + conditioning add ---------------
    h = jnp.dot(x_tok_ref[...].astype(bf16), w_in_ref[...],
                preferred_element_type=f32)                        # (HW, D)
    h = h + cond                                                   # row broadcast

    # --- cross attention against the (padded) text context -----------------
    h_bf = h.astype(bf16)
    emb_bf = emb_full.astype(bf16)
    q = jnp.dot(h_bf, w_q_ref[...], preferred_element_type=f32)    # (HW, D)
    k = jnp.dot(emb_bf, w_k_ref[...], preferred_element_type=f32)  # (S_PAD, D)
    v = jnp.dot(emb_bf, w_v_ref[...], preferred_element_type=f32)  # (S_PAD, D)

    s = jax.lax.dot_general(q.astype(bf16), k.astype(bf16),
                            (((1,), (1,)), ((), ())),
                            preferred_element_type=f32) * scale    # (HW, S_PAD)
    col = jax.lax.broadcasted_iota(jnp.int32, s.shape, 1)
    s = jnp.where(col < seq_len, s, -1e30)                         # mask padding
    m = jnp.max(s, axis=-1, keepdims=True)
    p = jnp.exp(s - m)
    denom = jnp.sum(p, axis=-1, keepdims=True)
    attn = jnp.dot(p.astype(bf16), v.astype(bf16),
                   preferred_element_type=f32)                     # (HW, D)
    attn = attn * pl.reciprocal(denom, approx=True)

    h = h + jnp.dot(attn.astype(bf16), w_o_ref[...],
                    preferred_element_type=f32)                    # residual

    # --- eps projection directly in channel-major layout (lane-dense HW) ---
    # eps[c, hw] = sum_d w_outT[c, d] * h[hw, d]
    eps_chw = jax.lax.dot_general(w_outT_ref[...], h.astype(bf16),
                                  (((1,), (1,)), ((), ())),
                                  preferred_element_type=f32)      # (C, HW)

    # --- get_x0_from_noise fused epilogue -----------------------------------
    # TODO(synk): reference runs get_x0 in float64; TPU Pallas computes in f32.
    inv_sa = inv_sa_ref[b]
    sb = sb_ref[b]
    img_ref[...] = (x_chw_ref[...] - sb * eps_chw) * inv_sa        # (C, HW)


def fused_text_unet_x0(x_tok, x_chw, tok_pad, cond_base, inv_sa, sb, wb, *, seq_len):
    """One pallas_call per forward: grid over batch, weights VMEM-resident."""
    B, HW, C = x_tok.shape
    _, S_pad, HID = tok_pad.shape
    D = wb["w_in"].shape[1]
    scale = 1.0 / float(D) ** 0.5

    kernel = functools.partial(_fused_kernel, seq_len=seq_len, scale=scale)
    smem = pl.BlockSpec(memory_space=pltpu.MemorySpace.SMEM)

    grid_spec = pl.GridSpec(
        grid=(B,),
        in_specs=[
            smem,                                                   # inv_sa (B,)
            smem,                                                   # sb     (B,)
            pl.BlockSpec((None, HW, C), lambda b: (b, 0, 0)),       # x_tok
            pl.BlockSpec((None, C, HW), lambda b: (b, 0, 0)),       # x_chw
            pl.BlockSpec((None, S_pad, HID), lambda b: (b, 0, 0)),  # tokens (padded)
            pl.BlockSpec((None, 1, D), lambda b: (b, 0, 0)),        # cond_base
            pl.BlockSpec((HID, D), lambda b: (0, 0)),               # w_text
            pl.BlockSpec((HID, D), lambda b: (0, 0)),               # w_pool
            pl.BlockSpec((D, D), lambda b: (0, 0)),                 # w_add_text
            pl.BlockSpec((C, D), lambda b: (0, 0)),                 # w_in
            pl.BlockSpec((D, D), lambda b: (0, 0)),                 # w_q
            pl.BlockSpec((D, D), lambda b: (0, 0)),                 # w_k
            pl.BlockSpec((D, D), lambda b: (0, 0)),                 # w_v
            pl.BlockSpec((D, D), lambda b: (0, 0)),                 # w_o
            pl.BlockSpec((C, D), lambda b: (0, 0)),                 # w_outT
        ],
        out_specs=[
            pl.BlockSpec((None, C, HW), lambda b: (b, 0, 0)),       # x0 image (NCHW-flat)
            pl.BlockSpec((None, seq_len, D), lambda b: (b, 0, 0)),  # text embedding
            pl.BlockSpec((None, 1, D), lambda b: (b, 0, 0)),        # pooled embedding
        ],
    )
    out_shapes = (
        jax.ShapeDtypeStruct((B, C, HW), jnp.float32),
        jax.ShapeDtypeStruct((B, seq_len, D), jnp.float32),
        jax.ShapeDtypeStruct((B, 1, D), jnp.float32),
    )
    return pl.pallas_call(
        kernel,
        out_shape=out_shapes,
        grid_spec=grid_spec,
        compiler_params=pltpu.CompilerParams(
            dimension_semantics=("parallel",)),     # shards batch across v7x TCs
    )(inv_sa, sb, x_tok, x_chw, tok_pad, cond_base,
      wb["w_text"], wb["w_pool"], wb["w_add_text"], wb["w_in"],
      wb["w_q"], wb["w_k"], wb["w_v"], wb["w_o"], wb["w_outT"])


# ----------------------------------------------------------------------------
# Plain-JAX glue (tiny M=B work; lives inside one jit with the pallas_call)
# ----------------------------------------------------------------------------
def silu(x):
    return x * jax.nn.sigmoid(x)


def timestep_embedding(t, dim):
    half = dim // 2
    freqs = jnp.exp(-jnp.log(10000.0) * jnp.arange(half, dtype=jnp.float32) / half)
    args = t.astype(jnp.float32)[:, None] * freqs[None, :]
    return jnp.concatenate([jnp.sin(args), jnp.cos(args)], axis=-1)


@jax.jit
def _generator_step(params, alphas_cumprod, add_time_ids_row, noise, tokens, timesteps):
    """text-encode + UNet-surrogate epsilon + get_x0 -> (image, emb, pooled)."""
    B, C, H, W = noise.shape
    S = tokens.shape[1]
    D = params["w_in"].shape[1]
    HW = H * W
    f32 = jnp.float32

    # Scheduler scalars (multiply by 1/sqrt(alpha) in-kernel instead of divide).
    alpha_t = alphas_cumprod[timesteps].astype(f32)          # (B,)
    inv_sa = 1.0 / jnp.sqrt(alpha_t)
    sb = jnp.sqrt(1.0 - alpha_t)

    # Time / added-time-ids conditioning prologue (M=B=2 -> plain JAX, not kernels).
    temb = timestep_embedding(timesteps, D)                  # (B, D)
    temb = silu(temb @ params["w_t1"]) @ params["w_t2"]
    add_time_ids = jnp.tile(add_time_ids_row, (B, 1))        # (B, 6)
    cond_base = temb + add_time_ids @ params["w_add_time"]   # (B, D)
    cond_base = cond_base.reshape(B, 1, D).astype(f32)

    # Latent layouts (tiny tensors; real-sized models would keep NHWC end-to-end).
    x_chw = noise.reshape(B, C, HW).astype(f32)              # NCHW-flat (lane-dense HW)
    x_tok = x_chw.transpose(0, 2, 1)                         # (B, HW, C) token rows

    # Pad the text context to 128 keys (zeros; masked in-kernel).
    tok_pad = jnp.pad(tokens.astype(f32), ((0, 0), (0, S_PAD - S), (0, 0)))

    # bf16 weights for the MXU (f32 accumulation inside the kernel).
    wb = {k: params[k].astype(jnp.bfloat16)
          for k in ("w_text", "w_pool", "w_add_text", "w_in",
                    "w_q", "w_k", "w_v", "w_o", "w_outT")}

    img, emb, pooled = fused_text_unet_x0(
        x_tok, x_chw, tok_pad, cond_base, inv_sa, sb, wb, seq_len=S)
    return img.reshape(B, C, H, W), emb, pooled.reshape(B, D)


# ----------------------------------------------------------------------------
# SDUniModel (Pallas / JAX)
# ----------------------------------------------------------------------------
class SDUniModelPallas:
    def __init__(self, key, *, resolution=64, num_train_timesteps=1000,
                 conditioning_timestep=999, d_model=64, token_dim=32,
                 latent_channels=4):
        self.num_train_timesteps = num_train_timesteps
        self.conditioning_timestep = conditioning_timestep
        self.sdxl = True
        self.denoising = False

        # DDPM "scaled_linear" schedule (Stable Diffusion defaults).
        betas = np.linspace(0.00085 ** 0.5, 0.012 ** 0.5,
                            num_train_timesteps, dtype=np.float64) ** 2
        self.alphas_cumprod = jnp.asarray(np.cumprod(1.0 - betas), dtype=jnp.float32)

        self.add_time_ids = self.build_condition_input(resolution)   # (1, 6)

        # TODO(synk): pretrained UNet / SDXL text encoder / VAE checkpoints are
        # not loadable in-script; deterministic surrogate weights below.
        keys = jax.random.split(key, 12)
        s = 0.02
        D, HID, C = d_model, token_dim, latent_channels
        self.params = {
            "w_text":     jax.random.normal(keys[0], (HID, D), jnp.float32) * s,
            "w_pool":     jax.random.normal(keys[1], (HID, D), jnp.float32) * s,
            "w_in":       jax.random.normal(keys[2], (C, D), jnp.float32) * s,
            "w_t1":       jax.random.normal(keys[3], (D, D), jnp.float32) * s,
            "w_t2":       jax.random.normal(keys[4], (D, D), jnp.float32) * s,
            "w_add_time": jax.random.normal(keys[5], (6, D), jnp.float32) * s,
            "w_add_text": jax.random.normal(keys[6], (D, D), jnp.float32) * s,
            "w_q":        jax.random.normal(keys[7], (D, D), jnp.float32) * s,
            "w_k":        jax.random.normal(keys[8], (D, D), jnp.float32) * s,
            "w_v":        jax.random.normal(keys[9], (D, D), jnp.float32) * s,
            "w_o":        jax.random.normal(keys[10], (D, D), jnp.float32) * s,
            # output projection stored transposed (C, D) so eps is produced
            # directly in channel-major layout inside the kernel.
            "w_outT":     jax.random.normal(keys[11], (C, D), jnp.float32) * s,
        }

    def build_condition_input(self, resolution):
        # original_size + crop_top_left + target_size
        add_time_ids = [resolution, resolution, 0, 0, resolution, resolution]
        return jnp.asarray([add_time_ids], dtype=jnp.float32)

    def forward(self, noise, text_embedding, uncond_embedding,
                compute_generator_gradient=False, generator_turn=True,
                guidance_turn=False, real_train_dict=None):
        assert (generator_turn and not guidance_turn) or \
               (guidance_turn and not generator_turn)
        assert generator_turn, "guidance_turn requires the pretrained teacher"

        B = noise.shape[0]
        # denoising=False branch: fixed conditioning timestep.
        timesteps = jnp.full((B,), self.conditioning_timestep, dtype=jnp.int32)

        # TODO(synk): real_train_dict text-encoding path omitted (None in this run).
        generated_image, text_emb, pooled_text_embedding = _generator_step(
            self.params, self.alphas_cumprod, self.add_time_ids,
            noise, text_embedding, timesteps)

        # sdxl branch bookkeeping (same dict structure as the reference).
        add_time_ids = jnp.tile(self.add_time_ids, (B, 1))
        unet_added_conditions = {"time_ids": add_time_ids,
                                 "text_embeds": pooled_text_embedding}
        uncond_unet_added_conditions = {
            "time_ids": add_time_ids,
            "text_embeds": jnp.zeros_like(pooled_text_embedding)}
        uncond_embedding = jnp.zeros_like(text_emb)

        # compute_generator_gradient=False path: no guidance_model call.
        # TODO(synk): SDGuidance (pretrained teacher/fake UNet losses) has no
        # in-script equivalent; the reference also returns empty dicts here.
        loss_dict = {}
        log_dict = {}
        log_dict["guidance_data_dict"] = {
            "image": generated_image,
            "text_embedding": text_emb,
            "pooled_text_embedding": pooled_text_embedding,
            "uncond_embedding": uncond_embedding,
            "real_train_dict": real_train_dict,
            "unet_added_conditions": unet_added_conditions,
            "uncond_unet_added_conditions": uncond_unet_added_conditions,
        }
        log_dict["denoising_timestep"] = timesteps
        return loss_dict, log_dict


# ----------------------------------------------------------------------------
if __name__ == "__main__":
    B, C, H, W = 2, 4, 16, 16
    SEQ, HID = 8, 32

    key = jax.random.PRNGKey(0)
    k_noise, k_text, k_model = jax.random.split(key, 3)

    noise = jax.random.normal(k_noise, (B, C, H, W), dtype=jnp.float32)
    text_tokens = jax.random.normal(k_text, (B, SEQ, HID), dtype=jnp.float32)
    uncond_tokens = jnp.zeros_like(text_tokens)

    model = SDUniModelPallas(k_model, resolution=64, d_model=64, token_dim=HID,
                             latent_channels=C)

    loss_dict, log_dict = model.forward(
        noise, text_tokens, uncond_tokens,
        compute_generator_gradient=False, generator_turn=True,
        guidance_turn=False)

    gen = jax.block_until_ready(log_dict["guidance_data_dict"]["image"])
    emb = jax.block_until_ready(log_dict["guidance_data_dict"]["text_embedding"])
    jax.block_until_ready(log_dict["denoising_timestep"])
    assert gen.shape == (B, C, H, W)
    assert emb.shape == (B, SEQ, 64)
    assert bool(jnp.all(jnp.isfinite(gen)))
    assert bool(jnp.all(jnp.isfinite(emb)))
    print("KERNEL_OK")
</pallas_src>

<mosaic_0001>
module attributes {stable_mosaic.version = 11 : i64} {
  func.func @_fused_kernel(%arg0: i32, %arg1: memref<2xf32, #tpu.memory_space<smem>>, %arg2: memref<2xf32, #tpu.memory_space<smem>>, %arg3: memref<1x256x4xf32, #tpu.memory_space<vmem>>, %arg4: memref<1x4x256xf32, #tpu.memory_space<vmem>>, %arg5: memref<1x128x32xf32, #tpu.memory_space<vmem>>, %arg6: memref<1x1x64xf32, #tpu.memory_space<vmem>>, %arg7: memref<32x64xbf16, #tpu.memory_space<vmem>>, %arg8: memref<32x64xbf16, #tpu.memory_space<vmem>>, %arg9: memref<64x64xbf16, #tpu.memory_space<vmem>>, %arg10: memref<4x64xbf16, #tpu.memory_space<vmem>>, %arg11: memref<64x64xbf16, #tpu.memory_space<vmem>>, %arg12: memref<64x64xbf16, #tpu.memory_space<vmem>>, %arg13: memref<64x64xbf16, #tpu.memory_space<vmem>>, %arg14: memref<64x64xbf16, #tpu.memory_space<vmem>>, %arg15: memref<4x64xbf16, #tpu.memory_space<vmem>>, %arg16: memref<1x4x256xf32, #tpu.memory_space<vmem>>, %arg17: memref<1x8x64xf32, #tpu.memory_space<vmem>>, %arg18: memref<1x1x64xf32, #tpu.memory_space<vmem>>) attributes {dimension_semantics = [#tpu.dimension_semantics<parallel>], iteration_bounds = array<i64: 2>, scalar_prefetch = 0 : i64, scratch_operands = 0 : i64, tpu.core_type = #tpu.core_type<tc>, window_params = [{transform_indices = @transform_0, window_bounds = array<i64: 2>}, {transform_indices = @transform_1, window_bounds = array<i64: 2>}, {transform_indices = @transform_2, window_bounds = array<i64: 1, 256, 4>}, {transform_indices = @transform_3, window_bounds = array<i64: 1, 4, 256>}, {transform_indices = @transform_4, window_bounds = array<i64: 1, 128, 32>}, {transform_indices = @transform_5, window_bounds = array<i64: 1, 1, 64>}, {pipeline_mode = #tpu.pipeline_mode<synchronous>, transform_indices = @transform_6, window_bounds = array<i64: 32, 64>}, {pipeline_mode = #tpu.pipeline_mode<synchronous>, transform_indices = @transform_7, window_bounds = array<i64: 32, 64>}, {pipeline_mode = #tpu.pipeline_mode<synchronous>, transform_indices = @transform_8, window_bounds = array<i64: 64, 64>}, {pipeline_mode = #tpu.pipeline_mode<synchronous>, transform_indices = @transform_9, window_bounds = array<i64: 4, 64>}, {pipeline_mode = #tpu.pipeline_mode<synchronous>, transform_indices = @transform_10, window_bounds = array<i64: 64, 64>}, {pipeline_mode = #tpu.pipeline_mode<synchronous>, transform_indices = @transform_11, window_bounds = array<i64: 64, 64>}, {pipeline_mode = #tpu.pipeline_mode<synchronous>, transform_indices = @transform_12, window_bounds = array<i64: 64, 64>}, {pipeline_mode = #tpu.pipeline_mode<synchronous>, transform_indices = @transform_13, window_bounds = array<i64: 64, 64>}, {pipeline_mode = #tpu.pipeline_mode<synchronous>, transform_indices = @transform_14, window_bounds = array<i64: 4, 64>}, {transform_indices = @transform_15, window_bounds = array<i64: 1, 4, 256>}, {transform_indices = @transform_16, window_bounds = array<i64: 1, 8, 64>}, {transform_indices = @transform_17, window_bounds = array<i64: 1, 1, 64>}]} {
    %c0 = arith.constant 0 : index
    %c0_0 = arith.constant 0 : index
    %c0_1 = arith.constant 0 : index
    %0 = vector.load %arg5[%c0, %c0_0, %c0_1] : memref<1x128x32xf32, #tpu.memory_space<vmem>>, vector<1x128x32xf32>
    %1 = vector.shape_cast %0 : vector<1x128x32xf32> to vector<128x32xf32>
    %2 = arith.truncf %1 : vector<128x32xf32> to vector<128x32xbf16>
    %c0_2 = arith.constant 0 : index
    %c0_3 = arith.constant 0 : index
    %3 = vector.load %arg7[%c0_2, %c0_3] : memref<32x64xbf16, #tpu.memory_space<vmem>>, vector<32x64xbf16>
    %cst = arith.constant dense<0.000000e+00> : vector<128x64xf32>
    %4 = tpu.matmul %2, %3, %cst {dimension_numbers = #tpu.dot_dimension_numbers<[1], [0], [0], [1], [0, 0, 1, 1], [], []>} : vector<128x32xbf16>, vector<32x64xbf16>, vector<128x64xf32> -> vector<128x64xf32>
    %5 = vector.extract_strided_slice %4 {offsets = [0, 0], sizes = [8, 64], strides = [1, 1]} : vector<128x64xf32> to vector<8x64xf32>
    %c0_4 = arith.constant 0 : index
    %c0_5 = arith.constant 0 : index
    %c0_6 = arith.constant 0 : index
    %6 = vector.load %arg17[%c0_4, %c0_5, %c0_6] : memref<1x8x64xf32, #tpu.memory_space<vmem>>, vector<1x8x64xf32>
    %7 = vector.shape_cast %6 : vector<1x8x64xf32> to vector<8x64xf32>
    %8 = vector.shape_cast %5 : vector<8x64xf32> to vector<1x8x64xf32>
    tpu.vector_store %arg17[%c0_4, %c0_5, %c0_6], %8 {strides = array<i32>} : memref<1x8x64xf32, #tpu.memory_space<vmem>>, vector<1x8x64xf32>,
    %cst_7 = arith.constant dense<0.000000e+00> : vector<32xf32>
    %9 = vector.multi_reduction <add>, %1, %cst_7 [0] : vector<128x32xf32> to vector<32xf32>
    %10 = vector.shape_cast %9 : vector<32xf32> to vector<1x32xf32>
    %cst_8 = arith.constant 1.250000e-01 : f32
    %11 = vector.broadcast %cst_8 : f32 to vector<1x32xf32>
    %12 = arith.mulf %10, %11 : vector<1x32xf32>
    %13 = arith.truncf %12 : vector<1x32xf32> to vector<1x32xbf16>
    %c0_9 = arith.constant 0 : index
    %c0_10 = arith.constant 0 : index
    %14 = vector.load %arg8[%c0_9, %c0_10] : memref<32x64xbf16, #tpu.memory_space<vmem>>, vector<32x64xbf16>
    %cst_11 = arith.constant dense<0.000000e+00> : vector<1x64xf32>
    %15 = tpu.matmul %13, %14, %cst_11 {dimension_numbers = #tpu.dot_dimension_numbers<[1], [0], [0], [1], [0, 0, 1, 1], [], []>} : vector<1x32xbf16>, vector<32x64xbf16>, vector<1x64xf32> -> vector<1x64xf32>
    %c0_12 = arith.constant 0 : index
    %c0_13 = arith.constant 0 : index
    %c0_14 = arith.constant 0 : index
    %16 = vector.load %arg18[%c0_12, %c0_13, %c0_14] : memref<1x1x64xf32, #tpu.memory_space<vmem>>, vector<1x1x64xf32>
    %17 = vector.shape_cast %16 : vector<1x1x64xf32> to vector<1x64xf32>
    %18 = vector.shape_cast %15 : vector<1x64xf32> to vector<1x1x64xf32>
    tpu.vector_store %arg18[%c0_12, %c0_13, %c0_14], %18 {strides = array<i32>} : memref<1x1x64xf32, #tpu.memory_space<vmem>>, vector<1x1x64xf32>,
    %c0_15 = arith.constant 0 : index
    %c0_16 = arith.constant 0 : index
    %c0_17 = arith.constant 0 : index
    %19 = vector.load %arg6[%c0_15, %c0_16, %c0_17] : memref<1x1x64xf32, #tpu.memory_space<vmem>>, vector<1x1x64xf32>
    %20 = vector.shape_cast %19 : vector<1x1x64xf32> to vector<1x64xf32>
    %21 = arith.truncf %15 : vector<1x64xf32> to vector<1x64xbf16>
    %c0_18 = arith.constant 0 : index
    %c0_19 = arith.constant 0 : index
    %22 = vector.load %arg9[%c0_18, %c0_19] : memref<64x64xbf16, #tpu.memory_space<vmem>>, vector<64x64xbf16>
    %cst_20 = arith.constant dense<0.000000e+00> : vector<1x64xf32>
    %23 = tpu.matmul %21, %22, %cst_20 {dimension_numbers = #tpu.dot_dimension_numbers<[1], [0], [0], [1], [0, 0, 1, 1], [], []>} : vector<1x64xbf16>, vector<64x64xbf16>, vector<1x64xf32> -> vector<1x64xf32>
    %24 = arith.addf %20, %23 : vector<1x64xf32>
    %c0_21 = arith.constant 0 : index
    %c0_22 = arith.constant 0 : index
    %c0_23 = arith.constant 0 : index
    %25 = vector.load %arg3[%c0_21, %c0_22, %c0_23] : memref<1x256x4xf32, #tpu.memory_space<vmem>>, vector<1x256x4xf32>
    %26 = vector.shape_cast %25 : vector<1x256x4xf32> to vector<256x4xf32>
    %27 = arith.truncf %26 : vector<256x4xf32> to vector<256x4xbf16>
    %c0_24 = arith.constant 0 : index
    %c0_25 = arith.constant 0 : index
    %28 = vector.load %arg10[%c0_24, %c0_25] : memref<4x64xbf16, #tpu.memory_space<vmem>>, vector<4x64xbf16>
    %cst_26 = arith.constant dense<0.000000e+00> : vector<256x64xf32>
    %29 = tpu.matmul %27, %28, %cst_26 {dimension_numbers = #tpu.dot_dimension_numbers<[1], [0], [0], [1], [0, 0, 1, 1], [], []>} : vector<256x4xbf16>, vector<4x64xbf16>, vector<256x64xf32> -> vector<256x64xf32>
    %30 = vector.broadcast %24 : vector<1x64xf32> to vector<256x64xf32>
    %31 = arith.addf %29, %30 : vector<256x64xf32>
    %32 = arith.truncf %31 : vector<256x64xf32> to vector<256x64xbf16>
    %33 = arith.truncf %4 : vector<128x64xf32> to vector<128x64xbf16>
    %c0_27 = arith.constant 0 : index
    %c0_28 = arith.constant 0 : index
    %34 = vector.load %arg11[%c0_27, %c0_28] : memref<64x64xbf16, #tpu.memory_space<vmem>>, vector<64x64xbf16>
    %cst_29 = arith.constant dense<0.000000e+00> : vector<256x64xf32>
    %35 = tpu.matmul %32, %34, %cst_29 {dimension_numbers = #tpu.dot_dimension_numbers<[1], [0], [0], [1], [0, 0, 1, 1], [], []>} : vector<256x64xbf16>, vector<64x64xbf16>, vector<256x64xf32> -> vector<256x64xf32>
    %c0_30 = arith.constant 0 : index
    %c0_31 = arith.constant 0 : index
    %36 = vector.load %arg12[%c0_30, %c0_31] : memref<64x64xbf16, #tpu.memory_space<vmem>>, vector<64x64xbf16>
    %cst_32 = arith.constant dense<0.000000e+00> : vector<128x64xf32>
    %37 = tpu.matmul %33, %36, %cst_32 {dimension_numbers = #tpu.dot_dimension_numbers<[1], [0], [0], [1], [0, 0, 1, 1], [], []>} : vector<128x64xbf16>, vector<64x64xbf16>, vector<128x64xf32> -> vector<128x64xf32>
    %c0_33 = arith.constant 0 : index
    %c0_34 = arith.constant 0 : index
    %38 = vector.load %arg13[%c0_33, %c0_34] : memref<64x64xbf16, #tpu.memory_space<vmem>>, vector<64x64xbf16>
    %cst_35 = arith.constant dense<0.000000e+00> : vector<128x64xf32>
    %39 = tpu.matmul %33, %38, %cst_35 {dimension_numbers = #tpu.dot_dimension_numbers<[1], [0], [0], [1], [0, 0, 1, 1], [], []>} : vector<128x64xbf16>, vector<64x64xbf16>, vector<128x64xf32> -> vector<128x64xf32>
    %40 = arith.truncf %35 : vector<256x64xf32> to vector<256x64xbf16>
    %41 = arith.truncf %37 : vector<128x64xf32> to vector<128x64xbf16>
    %cst_36 = arith.constant dense<0.000000e+00> : vector<256x128xf32>
    %42 = tpu.matmul %40, %41, %cst_36 {dimension_numbers = #tpu.dot_dimension_numbers<[1], [1], [0], [0], [0, 0, 1, 0], [], []>} : vector<256x64xbf16>, vector<128x64xbf16>, vector<256x128xf32> -> vector<256x128xf32>
    %cst_37 = arith.constant 1.250000e-01 : f32
    %43 = vector.broadcast %cst_37 : f32 to vector<256x128xf32>
    %44 = arith.mulf %42, %43 : vector<256x128xf32>
    %45 = tpu.iota {dimensions = array<i32: 1>} : vector<256x128xi32>
    %c8_i32 = arith.constant 8 : i32
    %46 = vector.broadcast %c8_i32 : i32 to vector<256x128xi32>
    %47 = arith.cmpi slt, %45, %46 : vector<256x128xi32>
    %cst_38 = arith.constant -1.000000e+30 : f32
    %48 = vector.broadcast %cst_38 : f32 to vector<256x128xf32>
    %49 = arith.select %47, %44, %48 : vector<256x128xi1>, vector<256x128xf32>
    %cst_39 = arith.constant dense<0xFF800000> : vector<256xf32>
    %50 = vector.multi_reduction <maximumf>, %49, %cst_39 [1] : vector<256x128xf32> to vector<256xf32>
    %51 = vector.shape_cast %50 : vector<256xf32> to vector<256x1xf32>
    %52 = vector.broadcast %51 : vector<256x1xf32> to vector<256x128xf32>
    %53 = arith.subf %49, %52 : vector<256x128xf32>
    %54 = math.exp %53 : vector<256x128xf32>
    %cst_40 = arith.constant dense<0.000000e+00> : vector<256xf32>
    %55 = vector.multi_reduction <add>, %54, %cst_40 [1] : vector<256x128xf32> to vector<256xf32>
    %56 = vector.shape_cast %55 : vector<256xf32> to vector<256x1xf32>
    %57 = arith.truncf %54 : vector<256x128xf32> to vector<256x128xbf16>
    %58 = arith.truncf %39 : vector<128x64xf32> to vector<128x64xbf16>
    %cst_41 = arith.constant dense<0.000000e+00> : vector<256x64xf32>
    %59 = tpu.matmul %57, %58, %cst_41 {dimension_numbers = #tpu.dot_dimension_numbers<[1], [0], [0], [1], [0, 0, 1, 1], [], []>} : vector<256x128xbf16>, vector<128x64xbf16>, vector<256x64xf32> -> vector<256x64xf32>
    %60 = tpu.reciprocal %56 {approx = true} : vector<256x1xf32> -> vector<256x1xf32>
    %61 = vector.broadcast %60 : vector<256x1xf32> to vector<256x64xf32>
    %62 = arith.mulf %59, %61 : vector<256x64xf32>
    %63 = arith.truncf %62 : vector<256x64xf32> to vector<256x64xbf16>
    %c0_42 = arith.constant 0 : index
    %c0_43 = arith.constant 0 : index
    %64 = vector.load %arg14[%c0_42, %c0_43] : memref<64x64xbf16, #tpu.memory_space<vmem>>, vector<64x64xbf16>
    %cst_44 = arith.constant dense<0.000000e+00> : vector<256x64xf32>
    %65 = tpu.matmul %63, %64, %cst_44 {dimension_numbers = #tpu.dot_dimension_numbers<[1], [0], [0], [1], [0, 0, 1, 1], [], []>} : vector<256x64xbf16>, vector<64x64xbf16>, vector<256x64xf32> -> vector<256x64xf32>
    %66 = arith.addf %31, %65 : vector<256x64xf32>
    %c0_45 = arith.constant 0 : index
    %c0_46 = arith.constant 0 : index
    %67 = vector.load %arg15[%c0_45, %c0_46] : memref<4x64xbf16, #tpu.memory_space<vmem>>, vector<4x64xbf16>
    %68 = arith.truncf %66 : vector<256x64xf32> to vector<256x64xbf16>
    %cst_47 = arith.constant dense<0.000000e+00> : vector<4x256xf32>
    %69 = tpu.matmul %67, %68, %cst_47 {dimension_numbers = #tpu.dot_dimension_numbers<[1], [1], [0], [0], [0, 0, 1, 0], [], []>} : vector<4x64xbf16>, vector<256x64xbf16>, vector<4x256xf32> -> vector<4x256xf32>
    %70 = arith.index_cast %arg0 : i32 to index
    %71 = memref.load %arg1[%70] : memref<2xf32, #tpu.memory_space<smem>>
    %72 = arith.index_cast %arg0 : i32 to index
    %73 = memref.load %arg2[%72] : memref<2xf32, #tpu.memory_space<smem>>
    %c0_48 = arith.constant 0 : index
    %c0_49 = arith.constant 0 : index
    %c0_50 = arith.constant 0 : index
    %74 = vector.load %arg4[%c0_48, %c0_49, %c0_50] : memref<1x4x256xf32, #tpu.memory_space<vmem>>, vector<1x4x256xf32>
    %75 = vector.shape_cast %74 : vector<1x4x256xf32> to vector<4x256xf32>
    %76 = vector.broadcast %73 : f32 to vector<4x256xf32>
    %77 = arith.mulf %76, %69 : vector<4x256xf32>
    %78 = arith.subf %75, %77 : vector<4x256xf32>
    %79 = vector.broadcast %71 : f32 to vector<4x256xf32>
    %80 = arith.mulf %78, %79 : vector<4x256xf32>
    %c0_51 = arith.constant 0 : index
    %c0_52 = arith.constant 0 : index
    %c0_53 = arith.constant 0 : index
    %81 = vector.load %arg16[%c0_51, %c0_52, %c0_53] : memref<1x4x256xf32, #tpu.memory_space<vmem>>, vector<1x4x256xf32>
    %82 = vector.shape_cast %81 : vector<1x4x256xf32> to vector<4x256xf32>
    %83 = vector.shape_cast %80 : vector<4x256xf32> to vector<1x4x256xf32>
    tpu.vector_store %arg16[%c0_51, %c0_52, %c0_53], %83 {strides = array<i32>} : memref<1x4x256xf32, #tpu.memory_space<vmem>>, vector<1x4x256xf32>,
    return
  }
  func.func @transform_0(%arg0: i32) -> i32 {
    %c0_i32 = arith.constant 0 : i32
    %c0_i32_0 = arith.constant 0 : i32
    return %c0_i32 : i32
  }
  func.func @transform_1(%arg0: i32) -> i32 {
    %c0_i32 = arith.constant 0 : i32
    %c0_i32_0 = arith.constant 0 : i32
    return %c0_i32 : i32
  }
  func.func @transform_2(%arg0: i32) -> (i32, i32, i32) {
    %c0_i32 = arith.constant 0 : i32
    %c0_i32_0 = arith.constant 0 : i32
    %c0_i32_1 = arith.constant 0 : i32
    return %arg0, %c0_i32, %c0_i32_0 : i32, i32, i32
  }
  func.func @transform_3(%arg0: i32) -> (i32, i32, i32) {
    %c0_i32 = arith.constant 0 : i32
    %c0_i32_0 = arith.constant 0 : i32
    %c0_i32_1 = arith.constant 0 : i32
    return %arg0, %c0_i32, %c0_i32_0 : i32, i32, i32
  }
  func.func @transform_4(%arg0: i32) -> (i32, i32, i32) {
    %c0_i32 = arith.constant 0 : i32
    %c0_i32_0 = arith.constant 0 : i32
    %c0_i32_1 = arith.constant 0 : i32
    return %arg0, %c0_i32, %c0_i32_0 : i32, i32, i32
  }
  func.func @transform_5(%arg0: i32) -> (i32, i32, i32) {
    %c0_i32 = arith.constant 0 : i32
    %c0_i32_0 = arith.constant 0 : i32
    %c0_i32_1 = arith.constant 0 : i32
    return %arg0, %c0_i32, %c0_i32_0 : i32, i32, i32
  }
  func.func @transform_6(%arg0: i32) -> (i32, i32) {
    %c0_i32 = arith.constant 0 : i32
    %c0_i32_0 = arith.constant 0 : i32
    %c0_i32_1 = arith.constant 0 : i32
    return %c0_i32, %c0_i32_0 : i32, i32
  }
  func.func @transform_7(%arg0: i32) -> (i32, i32) {
    %c0_i32 = arith.constant 0 : i32
    %c0_i32_0 = arith.constant 0 : i32
    %c0_i32_1 = arith.constant 0 : i32
    return %c0_i32, %c0_i32_0 : i32, i32
  }
  func.func @transform_8(%arg0: i32) -> (i32, i32) {
    %c0_i32 = arith.constant 0 : i32
    %c0_i32_0 = arith.constant 0 : i32
    %c0_i32_1 = arith.constant 0 : i32
    return %c0_i32, %c0_i32_0 : i32, i32
  }
  func.func @transform_9(%arg0: i32) -> (i32, i32) {
    %c0_i32 = arith.constant 0 : i32
    %c0_i32_0 = arith.constant 0 : i32
    %c0_i32_1 = arith.constant 0 : i32
    return %c0_i32, %c0_i32_0 : i32, i32
  }
  func.func @transform_10(%arg0: i32) -> (i32, i32) {
    %c0_i32 = arith.constant 0 : i32
    %c0_i32_0 = arith.constant 0 : i32
    %c0_i32_1 = arith.constant 0 : i32
    return %c0_i32, %c0_i32_0 : i32, i32
  }
  func.func @transform_11(%arg0: i32) -> (i32, i32) {
    %c0_i32 = arith.constant 0 : i32
    %c0_i32_0 = arith.constant 0 : i32
    %c0_i32_1 = arith.constant 0 : i32
    return %c0_i32, %c0_i32_0 : i32, i32
  }
  func.func @transform_12(%arg0: i32) -> (i32, i32) {
    %c0_i32 = arith.constant 0 : i32
    %c0_i32_0 = arith.constant 0 : i32
    %c0_i32_1 = arith.constant 0 : i32
    return %c0_i32, %c0_i32_0 : i32, i32
  }
  func.func @transform_13(%arg0: i32) -> (i32, i32) {
    %c0_i32 = arith.constant 0 : i32
    %c0_i32_0 = arith.constant 0 : i32
    %c0_i32_1 = arith.constant 0 : i32
    return %c0_i32, %c0_i32_0 : i32, i32
  }
  func.func @transform_14(%arg0: i32) -> (i32, i32) {
    %c0_i32 = arith.constant 0 : i32
    %c0_i32_0 = arith.constant 0 : i32
    %c0_i32_1 = arith.constant 0 : i32
    return %c0_i32, %c0_i32_0 : i32, i32
  }
  func.func @transform_15(%arg0: i32) -> (i32, i32, i32) {
    %c0_i32 = arith.constant 0 : i32
    %c0_i32_0 = arith.constant 0 : i32
    %c0_i32_1 = arith.constant 0 : i32
    return %arg0, %c0_i32, %c0_i32_0 : i32, i32, i32
  }
  func.func @transform_16(%arg0: i32) -> (i32, i32, i32) {
    %c0_i32 = arith.constant 0 : i32
    %c0_i32_0 = arith.constant 0 : i32
    %c0_i32_1 = arith.constant 0 : i32
    return %arg0, %c0_i32, %c0_i32_0 : i32, i32, i32
  }
  func.func @transform_17(%arg0: i32) -> (i32, i32, i32) {
    %c0_i32 = arith.constant 0 : i32
    %c0_i32_0 = arith.constant 0 : i32
    %c0_i32_1 = arith.constant 0 : i32
    return %arg0, %c0_i32, %c0_i32_0 : i32, i32, i32
  }
}

</mosaic_0001>

<llo_original>
// kernel: _generator_step.1
$region0: #{_generator_step.1}
  #allocation0 [shape = 'u32[]', space=smem, size = 0x4, offset = 0x4, fixed_abs, tag = 'smem constant byte address 0x4 - core index']
  #allocation1 [shape = 'u32[144,128]{1,0:T(1,128)}', space=vmem, size = 0x12000, scoped, tag = 'internal scratch']
  %s0 = inlined_call_operand.vmem [shape: f32[2], index: 0, kind: input, shape index: {}]
  %s1 = inlined_call_operand.vmem [shape: f32[2], index: 1, kind: input, shape index: {}]
  %s2 = inlined_call_operand.vmem [shape: f32[2,256,4], index: 2, kind: input, shape index: {}]
  %s3 = inlined_call_operand.vmem [shape: f32[2,4,256], index: 3, kind: input, shape index: {}]
  %s4 = inlined_call_operand.vmem [shape: f32[2,128,32], index: 4, kind: input, shape index: {}]
  %s5 = inlined_call_operand.vmem [shape: f32[2,1,64], index: 5, kind: input, shape index: {}]
  %s6 = inlined_call_operand.vmem [shape: bf16[32,64], index: 6, kind: input, shape index: {}]
  %s7 = inlined_call_operand.vmem [shape: bf16[32,64], index: 7, kind: input, shape index: {}]
  %s8 = inlined_call_operand.vmem [shape: bf16[64,64], index: 8, kind: input, shape index: {}]
  %s9 = inlined_call_operand.vmem [shape: bf16[4,64], index: 9, kind: input, shape index: {}]
  %s10 = inlined_call_operand.vmem [shape: bf16[64,64], index: 10, kind: input, shape index: {}]
  %s11 = inlined_call_operand.vmem [shape: bf16[64,64], index: 11, kind: input, shape index: {}]
  %s12 = inlined_call_operand.vmem [shape: bf16[64,64], index: 12, kind: input, shape index: {}]
  %s13 = inlined_call_operand.vmem [shape: bf16[64,64], index: 13, kind: input, shape index: {}]
  %s14 = inlined_call_operand.vmem [shape: bf16[4,64], index: 14, kind: input, shape index: {}]
  %s15 = inlined_call_operand.vmem [shape: f32[2,4,256], index: 15, kind: output, shape index: {0}]
  %s16 = inlined_call_operand.hbm [shape: f32[2,8,64], index: 16, kind: output, shape index: {1}]
  %s17 = inlined_call_operand.hbm [shape: f32[2,1,64], index: 17, kind: output, shape index: {2}]
  %18 = xla_tuple %s15, %s16, %s17
  %s19 = sld [smem:[#allocation0]]
  $region117: #{_generator_step.1} parent=0
    _
  %s21 = ssub.s32 1, %s19
  %s22 = scalar_select 0, %s21, %s19
  $region1: #{_generator_step.1} parent=0
    #allocation2 [shape = 'u8[512]{0}', space=smem, size = 0x200, scoped, tag = 'input window, operand 0, single buffered']
    #allocation3 [shape = 's32[2]{0}', space=sflag, size = 0x8, scoped, tag = 'scoped memory for _generator_step.1']
    #allocation4 [shape = 's32[2]{0}', space=sflag, size = 0x8, scoped, tag = 'scoped memory for _generator_step.1']
    #allocation5 [shape = 'u8[512]{0}', space=smem, size = 0x200, scoped, tag = 'input window, operand 1, single buffered']
    #allocation6 [shape = 's32[1]{0}', space=sflag, size = 0x4, scoped, tag = 'scoped memory for _generator_step.1']
    #allocation7 [shape = 'u8[8192]{0}', space=vmem, size = 0x2000, scoped, tag = 'output window, operand 1']
    #allocation8 [shape = 'u8[1024]{0}', space=vmem, size = 0x400, scoped, tag = 'output window, operand 2']
    #allocation9 [shape = 's32[2]{0}', space=sflag, size = 0x8, scoped, tag = 'scoped memory for _generator_step.1']
    %23 = vsyncpa [#allocation4], 0
    %24 = vsyncpa [#allocation6], 0
    %25 = vsyncpa [#allocation3], 0
    %s26 = scalar_lea.sflag [#allocation3], 1
    %27 = vsyncpa %s26, 0
    %28 = vsyncpa [#allocation9], 0
    %s29 = scalar_lea.sflag [#allocation9], 1
    %30 = vsyncpa %s29, 0
    loop: start=0, step=1, limit=4
    $region2: #{_generator_step.1} parent=1 // loop_pre_header
      _
    $region3: #{_generator_step.1} parent=1 // loop_header
      %s32 = sphi 0, %s36
      %p33 = scmp.ge.s32.totalorder %s32, 4
      %s40 = sphi 0, %s40
      %s42 = sphi 0, %s40
      %s43 = sphi 0, %s42
      %s57 = sphi 0, %s43
      %s61 = sphi 0, %s61
      %s63 = sphi 0, %s61
      %s64 = sphi 0, %s63
      %s78 = sphi 0, %s64
      %s84 = sphi 0, %s86
      %s87 = sphi 0, %s84
      %s88 = sphi 0, %s87
      %s104 = sphi 0, %s88
      %s110 = sphi 0, %s112
      %s113 = sphi 0, %s110
      %s114 = sphi 0, %s113
      %s130 = sphi 0, %s114
      %s136 = sphi 0, %s138
      %s139 = sphi 0, %s136
      %s140 = sphi 0, %s139
      %s156 = sphi 0, %s140
      %s162 = sphi 0, %s164
      %s165 = sphi 0, %s162
      %s166 = sphi 0, %s165
      %s182 = sphi 0, %s166
      %s186 = sphi 0, %s186
      %s188 = sphi 0, %s186
      %s189 = sphi 0, %s188
      %s203 = sphi 0, %s189
      %s207 = sphi 0, %s207
      %s209 = sphi 0, %s207
      %s210 = sphi 0, %s209
      %s224 = sphi 0, %s210
      %s228 = sphi 0, %s228
      %s230 = sphi 0, %s228
      %s231 = sphi 0, %s230
      %s245 = sphi 0, %s231
      %s249 = sphi 0, %s249
      %s251 = sphi 0, %s249
      %s252 = sphi 0, %s251
      %s266 = sphi 0, %s252
      %s270 = sphi 0, %s270
      %s272 = sphi 0, %s270
      %s273 = sphi 0, %s272
      %s287 = sphi 0, %s273
      %s291 = sphi 0, %s291
      %s293 = sphi 0, %s291
      %s294 = sphi 0, %s293
      %s308 = sphi 0, %s294
      %s312 = sphi 0, %s312
      %s314 = sphi 0, %s312
      %s315 = sphi 0, %s314
      %s329 = sphi 0, %s315
      %s333 = sphi 0, %s333
      %s335 = sphi 0, %s333
      %s336 = sphi 0, %s335
      %s350 = sphi 0, %s336
      %s354 = sphi 0, %s354
      %s356 = sphi 0, %s354
      %s357 = sphi 0, %s356
      %s371 = sphi 0, %s357
      %s377 = sphi 0, %s379
      %s380 = sphi 0, %s377
      %s381 = sphi 0, %s380
      %s397 = sphi 0, %s381
      %s403 = sphi 0, %s405
      %s406 = sphi 0, %s403
      %s407 = sphi 0, %s406
      %s423 = sphi 0, %s407
      %s429 = sphi 0, %s431
      %s432 = sphi 0, %s429
      %s433 = sphi 0, %s432
      %s449 = sphi 0, %s433
    $region4: #{_generator_step.1} parent=1 // loop_header_branch
      %35 = sbr.rel (%p33) target = $region8
    $region5: #{_generator_step.1} parent=1 // loop_body
      %s37 = ssub.s32 %s32, 1
      %s38 = ssub.s32 %s32, 2
      %s39 = sadd.s32 %s32, 1
      %s41 = sadd.s32 %s40, 1
      %p44 = scmp.eq.s32.totalorder %s32, 1
      %p45 = scmp.ne.s32.totalorder %s40, %s42
      %p46 = scmp.eq.s32.totalorder %s32, 0
      %p47 = por %p45, %p46
      %p48 = scmp.ne.s32.totalorder %s40, %s42
      %p49 = scmp.eq.s32.totalorder %s37, 1
      %p50 = por %p48, %p49
      %p51 = scmp.ne.s32.totalorder %s42, %s43
      %p52 = scmp.eq.s32.totalorder %s37, 0
      %p53 = por %p51, %p52
      %p54 = scmp.ne.s32.totalorder %s42, %s43
      %p55 = scmp.eq.s32.totalorder %s38, 1
      %p56 = por %p54, %p55
      %p58 = scmp.ne.s32.totalorder %s43, %s57
      %p59 = scmp.eq.s32.totalorder %s38, 0
      %p60 = por %p58, %p59
      %s62 = sadd.s32 %s61, 1
      %p65 = scmp.eq.s32.totalorder %s32, 1
      %p66 = scmp.ne.s32.totalorder %s61, %s63
      %p67 = scmp.eq.s32.totalorder %s32, 0
      %p68 = por %p66, %p67
      %p69 = scmp.ne.s32.totalorder %s61, %s63
      %p70 = scmp.eq.s32.totalorder %s37, 1
      %p71 = por %p69, %p70
      %p72 = scmp.ne.s32.totalorder %s63, %s64
      %p73 = scmp.eq.s32.totalorder %s37, 0
      %p74 = por %p72, %p73
      %p75 = scmp.ne.s32.totalorder %s63, %s64
      %p76 = scmp.eq.s32.totalorder %s38, 1
      %p77 = por %p75, %p76
      %p79 = scmp.ne.s32.totalorder %s64, %s78
      %p80 = scmp.eq.s32.totalorder %s38, 0
      %p81 = por %p79, %p80
      %s82 = ssub.s32 %s32, %s39
      %p83 = scmp.eq.s32.totalorder %s82, 0
      %s85 = sadd.s32 %s84, 1
      %s86 = scalar_select %p83, %s84, %s85
      %p89 = pneg %p83
      %p90 = scmp.eq.s32.totalorder %s32, 1
      %p91 = por %p89, %p90
      %p92 = scmp.ne.s32.totalorder %s84, %s87
      %p93 = scmp.eq.s32.totalorder %s32, 0
      %p94 = por %p92, %p93
      %p95 = scmp.ne.s32.totalorder %s84, %s87
      %p96 = scmp.eq.s32.totalorder %s37, 1
      %p97 = por %p95, %p96
      %p98 = scmp.ne.s32.totalorder %s87, %s88
      %p99 = scmp.eq.s32.totalorder %s37, 0
      %p100 = por %p98, %p99
      %p101 = scmp.ne.s32.totalorder %s87, %s88
      %p102 = scmp.eq.s32.totalorder %s38, 1
      %p103 = por %p101, %p102
      %p105 = scmp.ne.s32.totalorder %s88, %s104
      %p106 = scmp.eq.s32.totalorder %s38, 0
      %p107 = por %p105, %p106
      %s108 = ssub.s32 %s32, %s39
      %p109 = scmp.eq.s32.totalorder %s108, 0
      %s111 = sadd.s32 %s110, 1
      %s112 = scalar_select %p109, %s110, %s111
      %p115 = pneg %p109
      %p116 = scmp.eq.s32.totalorder %s32, 1
      %p117 = por %p115, %p116
      %p118 = scmp.ne.s32.totalorder %s110, %s113
      %p119 = scmp.eq.s32.totalorder %s32, 0
      %p120 = por %p118, %p119
      %p121 = scmp.ne.s32.totalorder %s110, %s113
      %p122 = scmp.eq.s32.totalorder %s37, 1
      %p123 = por %p121, %p122
      %p124 = scmp.ne.s32.totalorder %s113, %s114
      %p125 = scmp.eq.s32.totalorder %s37, 0
      %p126 = por %p124, %p125
      %p127 = scmp.ne.s32.totalorder %s113, %s114
      %p128 = scmp.eq.s32.totalorder %s38, 1
      %p129 = por %p127, %p128
      %p131 = scmp.ne.s32.totalorder %s114, %s130
      %p132 = scmp.eq.s32.totalorder %s38, 0
      %p133 = por %p131, %p132
      %s134 = ssub.s32 %s32, %s39
      %p135 = scmp.eq.s32.totalorder %s134, 0
      %s137 = sadd.s32 %s136, 1
      %s138 = scalar_select %p135, %s136, %s137
      %p141 = pneg %p135
      %p142 = scmp.eq.s32.totalorder %s32, 1
      %p143 = por %p141, %p142
      %p144 = scmp.ne.s32.totalorder %s136, %s139
      %p145 = scmp.eq.s32.totalorder %s32, 0
      %p146 = por %p144, %p145
      %p147 = scmp.ne.s32.totalorder %s136, %s139
      %p148 = scmp.eq.s32.totalorder %s37, 1
      %p149 = por %p147, %p148
      %p150 = scmp.ne.s32.totalorder %s139, %s140
      %p151 = scmp.eq.s32.totalorder %s37, 0
      %p152 = por %p150, %p151
      %p153 = scmp.ne.s32.totalorder %s139, %s140
      %p154 = scmp.eq.s32.totalorder %s38, 1
      %p155 = por %p153, %p154
      %p157 = scmp.ne.s32.totalorder %s140, %s156
      %p158 = scmp.eq.s32.totalorder %s38, 0
      %p159 = por %p157, %p158
      %s160 = ssub.s32 %s32, %s39
      %p161 = scmp.eq.s32.totalorder %s160, 0
      %s163 = sadd.s32 %s162, 1
      %s164 = scalar_select %p161, %s162, %s163
      %p167 = pneg %p161
      %p168 = scmp.eq.s32.totalorder %s32, 1
      %p169 = por %p167, %p168
      %p170 = scmp.ne.s32.totalorder %s162, %s165
      %p171 = scmp.eq.s32.totalorder %s32, 0
      %p172 = por %p170, %p171
      %p173 = scmp.ne.s32.totalorder %s162, %s165
      %p174 = scmp.eq.s32.totalorder %s37, 1
      %p175 = por %p173, %p174
      %p176 = scmp.ne.s32.totalorder %s165, %s166
      %p177 = scmp.eq.s32.totalorder %s37, 0
      %p178 = por %p176, %p177
      %p179 = scmp.ne.s32.totalorder %s165, %s166
      %p180 = scmp.eq.s32.totalorder %s38, 1
      %p181 = por %p179, %p180
      %p183 = scmp.ne.s32.totalorder %s166, %s182
      %p184 = scmp.eq.s32.totalorder %s38, 0
      %p185 = por %p183, %p184
      %s187 = sadd.s32 %s186, 1
      %p190 = scmp.eq.s32.totalorder %s32, 1
      %p191 = scmp.ne.s32.totalorder %s186, %s188
      %p192 = scmp.eq.s32.totalorder %s32, 0
      %p193 = por %p191, %p192
      %p194 = scmp.ne.s32.totalorder %s186, %s188
      %p195 = scmp.eq.s32.totalorder %s37, 1
      %p196 = por %p194, %p195
      %p197 = scmp.ne.s32.totalorder %s188, %s189
      %p198 = scmp.eq.s32.totalorder %s37, 0
      %p199 = por %p197, %p198
      %p200 = scmp.ne.s32.totalorder %s188, %s189
      %p201 = scmp.eq.s32.totalorder %s38, 1
      %p202 = por %p200, %p201
      %p204 = scmp.ne.s32.totalorder %s189, %s203
      %p205 = scmp.eq.s32.totalorder %s38, 0
      %p206 = por %p204, %p205
      %s208 = sadd.s32 %s207, 1
      %p211 = scmp.eq.s32.totalorder %s32, 1
      %p212 = scmp.ne.s32.totalorder %s207, %s209
      %p213 = scmp.eq.s32.totalorder %s32, 0
      %p214 = por %p212, %p213
      %p215 = scmp.ne.s32.totalorder %s207, %s209
      %p216 = scmp.eq.s32.totalorder %s37, 1
      %p217 = por %p215, %p216
      %p218 = scmp.ne.s32.totalorder %s209, %s210
      %p219 = scmp.eq.s32.totalorder %s37, 0
      %p220 = por %p218, %p219
      %p221 = scmp.ne.s32.totalorder %s209, %s210
      %p222 = scmp.eq.s32.totalorder %s38, 1
      %p223 = por %p221, %p222
      %p225 = scmp.ne.s32.totalorder %s210, %s224
      %p226 = scmp.eq.s32.totalorder %s38, 0
      %p227 = por %p225, %p226
      %s229 = sadd.s32 %s228, 1
      %p232 = scmp.eq.s32.totalorder %s32, 1
      %p233 = scmp.ne.s32.totalorder %s228, %s230
      %p234 = scmp.eq.s32.totalorder %s32, 0
      %p235 = por %p233, %p234
      %p236 = scmp.ne.s32.totalorder %s228, %s230
      %p237 = scmp.eq.s32.totalorder %s37, 1
      %p238 = por %p236, %p237
      %p239 = scmp.ne.s32.totalorder %s230, %s231
      %p240 = scmp.eq.s32.totalorder %s37, 0
      %p241 = por %p239, %p240
      %p242 = scmp.ne.s32.totalorder %s230, %s231
      %p243 = scmp.eq.s32.totalorder %s38, 1
      %p244 = por %p242, %p243
      %p246 = scmp.ne.s32.totalorder %s231, %s245
      %p247 = scmp.eq.s32.totalorder %s38, 0
      %p248 = por %p246, %p247
      %s250 = sadd.s32 %s249, 1
      %p253 = scmp.eq.s32.totalorder %s32, 1
      %p254 = scmp.ne.s32.totalorder %s249, %s251
      %p255 = scmp.eq.s32.totalorder %s32, 0
      %p256 = por %p254, %p255
      %p257 = scmp.ne.s32.totalorder %s249, %s251
      %p258 = scmp.eq.s32.totalorder %s37, 1
      %p259 = por %p257, %p258
      %p260 = scmp.ne.s32.totalorder %s251, %s252
      %p261 = scmp.eq.s32.totalorder %s37, 0
      %p262 = por %p260, %p261
      %p263 = scmp.ne.s32.totalorder %s251, %s252
      %p264 = scmp.eq.s32.totalorder %s38, 1
      %p265 = por %p263, %p264
      %p267 = scmp.ne.s32.totalorder %s252, %s266
      %p268 = scmp.eq.s32.totalorder %s38, 0
      %p269 = por %p267, %p268
      %s271 = sadd.s32 %s270, 1
      %p274 = scmp.eq.s32.totalorder %s32, 1
      %p275 = scmp.ne.s32.totalorder %s270, %s272
      %p276 = scmp.eq.s32.totalorder %s32, 0
      %p277 = por %p275, %p276
      %p278 = scmp.ne.s32.totalorder %s270, %s272
      %p279 = scmp.eq.s32.totalorder %s37, 1
      %p280 = por %p278, %p279
      %p281 = scmp.ne.s32.totalorder %s272, %s273
      %p282 = scmp.eq.s32.totalorder %s37, 0
      %p283 = por %p281, %p282
      %p284 = scmp.ne.s32.totalorder %s272, %s273
      %p285 = scmp.eq.s32.totalorder %s38, 1
      %p286 = por %p284, %p285
      %p288 = scmp.ne.s32.totalorder %s273, %s287
      %p289 = scmp.eq.s32.totalorder %s38, 0
      %p290 = por %p288, %p289
      %s292 = sadd.s32 %s291, 1
      %p295 = scmp.eq.s32.totalorder %s32, 1
      %p296 = scmp.ne.s32.totalorder %s291, %s293
      %p297 = scmp.eq.s32.totalorder %s32, 0
      %p298 = por %p296, %p297
      %p299 = scmp.ne.s32.totalorder %s291, %s293
      %p300 = scmp.eq.s32.totalorder %s37, 1
      %p301 = por %p299, %p300
      %p302 = scmp.ne.s32.totalorder %s293, %s294
      %p303 = scmp.eq.s32.totalorder %s37, 0
      %p304 = por %p302, %p303
      %p305 = scmp.ne.s32.totalorder %s293, %s294
      %p306 = scmp.eq.s32.totalorder %s38, 1
      %p307 = por %p305, %p306
      %p309 = scmp.ne.s32.totalorder %s294, %s308
      %p310 = scmp.eq.s32.totalorder %s38, 0
      %p311 = por %p309, %p310
      %s313 = sadd.s32 %s312, 1
      %p316 = scmp.eq.s32.totalorder %s32, 1
      %p317 = scmp.ne.s32.totalorder %s312, %s314
      %p318 = scmp.eq.s32.totalorder %s32, 0
      %p319 = por %p317, %p318
      %p320 = scmp.ne.s32.totalorder %s312, %s314
      %p321 = scmp.eq.s32.totalorder %s37, 1
      %p322 = por %p320, %p321
      %p323 = scmp.ne.s32.totalorder %s314, %s315
      %p324 = scmp.eq.s32.totalorder %s37, 0
      %p325 = por %p323, %p324
      %p326 = scmp.ne.s32.totalorder %s314, %s315
      %p327 = scmp.eq.s32.totalorder %s38, 1
      %p328 = por %p326, %p327
      %p330 = scmp.ne.s32.totalorder %s315, %s329
      %p331 = scmp.eq.s32.totalorder %s38, 0
      %p332 = por %p330, %p331
      %s334 = sadd.s32 %s333, 1
      %p337 = scmp.eq.s32.totalorder %s32, 1
      %p338 = scmp.ne.s32.totalorder %s333, %s335
      %p339 = scmp.eq.s32.totalorder %s32, 0
      %p340 = por %p338, %p339
      %p341 = scmp.ne.s32.totalorder %s333, %s335
      %p342 = scmp.eq.s32.totalorder %s37, 1
      %p343 = por %p341, %p342
      %p344 = scmp.ne.s32.totalorder %s335, %s336
      %p345 = scmp.eq.s32.totalorder %s37, 0
      %p346 = por %p344, %p345
      %p347 = scmp.ne.s32.totalorder %s335, %s336
      %p348 = scmp.eq.s32.totalorder %s38, 1
      %p349 = por %p347, %p348
      %p351 = scmp.ne.s32.totalorder %s336, %s350
      %p352 = scmp.eq.s32.totalorder %s38, 0
      %p353 = por %p351, %p352
      %s355 = sadd.s32 %s354, 1
      %p358 = scmp.eq.s32.totalorder %s32, 1
      %p359 = scmp.ne.s32.totalorder %s354, %s356
      %p360 = scmp.eq.s32.totalorder %s32, 0
      %p361 = por %p359, %p360
      %p362 = scmp.ne.s32.totalorder %s354, %s356
      %p363 = scmp.eq.s32.totalorder %s37, 1
      %p364 = por %p362, %p363
      %p365 = scmp.ne.s32.totalorder %s356, %s357
      %p366 = scmp.eq.s32.totalorder %s37, 0
      %p367 = por %p365, %p366
      %p368 = scmp.ne.s32.totalorder %s356, %s357
      %p369 = scmp.eq.s32.totalorder %s38, 1
      %p370 = por %p368, %p369
      %p372 = scmp.ne.s32.totalorder %s357, %s371
      %p373 = scmp.eq.s32.totalorder %s38, 0
      %p374 = por %p372, %p373
      %s375 = ssub.s32 %s32, %s39
      %p376 = scmp.eq.s32.totalorder %s375, 0
      %s378 = sadd.s32 %s377, 1
      %s379 = scalar_select %p376, %s377, %s378
      %p382 = pneg %p376
      %p383 = scmp.eq.s32.totalorder %s32, 1
      %p384 = por %p382, %p383
      %p385 = scmp.ne.s32.totalorder %s377, %s380
      %p386 = scmp.eq.s32.totalorder %s32, 0
      %p387 = por %p385, %p386
      %p388 = scmp.ne.s32.totalorder %s377, %s380
      %p389 = scmp.eq.s32.totalorder %s37, 1
      %p390 = por %p388, %p389
      %p391 = scmp.ne.s32.totalorder %s380, %s381
      %p392 = scmp.eq.s32.totalorder %s37, 0
      %p393 = por %p391, %p392
      %p394 = scmp.ne.s32.totalorder %s380, %s381
      %p395 = scmp.eq.s32.totalorder %s38, 1
      %p396 = por %p394, %p395
      %p398 = scmp.ne.s32.totalorder %s381, %s397
      %p399 = scmp.eq.s32.totalorder %s38, 0
      %p400 = por %p398, %p399
      %s401 = ssub.s32 %s32, %s39
      %p402 = scmp.eq.s32.totalorder %s401, 0
      %s404 = sadd.s32 %s403, 1
      %s405 = scalar_select %p402, %s403, %s404
      %p408 = pneg %p402
      %p409 = scmp.eq.s32.totalorder %s32, 1
      %p410 = por %p408, %p409
      %p411 = scmp.ne.s32.totalorder %s403, %s406
      %p412 = scmp.eq.s32.totalorder %s32, 0
      %p413 = por %p411, %p412
      %p414 = scmp.ne.s32.totalorder %s403, %s406
      %p415 = scmp.eq.s32.totalorder %s37, 1
      %p416 = por %p414, %p415
      %p417 = scmp.ne.s32.totalorder %s406, %s407
      %p418 = scmp.eq.s32.totalorder %s37, 0
      %p419 = por %p417, %p418
      %p420 = scmp.ne.s32.totalorder %s406, %s407
      %p421 = scmp.eq.s32.totalorder %s38, 1
      %p422 = por %p420, %p421
      %p424 = scmp.ne.s32.totalorder %s407, %s423
      %p425 = scmp.eq.s32.totalorder %s38, 0
      %p426 = por %p424, %p425
      %s427 = ssub.s32 %s32, %s39
      %p428 = scmp.eq.s32.totalorder %s427, 0
      %s430 = sadd.s32 %s429, 1
      %s431 = scalar_select %p428, %s429, %s430
      %p434 = pneg %p428
      %p435 = scmp.eq.s32.totalorder %s32, 1
      %p436 = por %p434, %p435
      %p437 = scmp.ne.s32.totalorder %s429, %s432
      %p438 = scmp.eq.s32.totalorder %s32, 0
      %p439 = por %p437, %p438
      %p440 = scmp.ne.s32.totalorder %s429, %s432
      %p441 = scmp.eq.s32.totalorder %s37, 1
      %p442 = por %p440, %p441
      %p443 = scmp.ne.s32.totalorder %s432, %s433
      %p444 = scmp.eq.s32.totalorder %s37, 0
      %p445 = por %p443, %p444
      %p446 = scmp.ne.s32.totalorder %s432, %s433
      %p447 = scmp.eq.s32.totalorder %s38, 1
      %p448 = por %p446, %p447
      %p450 = scmp.ne.s32.totalorder %s433, %s449
      %p451 = scmp.eq.s32.totalorder %s38, 0
      %p452 = por %p450, %p451
      %p453 = scmp.le.s32.totalorder 1, %s32
      %p454 = scmp.lt.s32.totalorder %s32, 3
      %p455 = pnand %p453, %p454
      %p456 = pneg %p455
      // Predicated region
      $region9: #{_generator_step.1} parent=5 // pred_check
        _
      $region10: #{_generator_step.1} parent=5 // pred_check_branch
        %458 = sbr.rel (%p455) target = $region12
      $region11: #{_generator_step.1} parent=5 // pred_region
        %s459 = ssub.s32 %s32, 1
        // Predicated region
        $region13: #{_generator_step.1} parent=11 // pred_check
          %p460 = pneg %p53
        $region14: #{_generator_step.1} parent=11 // pred_check_branch
          %462 = sbr.rel (%p460) target = $region16
        $region15: #{_generator_step.1} parent=11 // pred_region
          %s464 = ssub.s32 16, 16
          %465 = vsyncadd [#allocation4], %s464
          %s467 = sshll.u32 %s0, 4
          %s468 = int_to_ptr.vmem [resolvable:$true] %s467
          %470 = dma.vmem_to_smem %s468, 16, [#allocation2], [#allocation4]
        $region16: #{_generator_step.1} parent=11 // pred_fallthru
          _
        // Predicated region
        $region17: #{_generator_step.1} parent=11 // pred_check
          %p471 = pneg %p74
        $region18: #{_generator_step.1} parent=11 // pred_check_branch
          %473 = sbr.rel (%p471) target = $region20
        $region19: #{_generator_step.1} parent=11 // pred_region
          %s475 = ssub.s32 16, 16
          %476 = vsyncadd [#allocation6], %s475
          %s478 = sshll.u32 %s1, 4
          %s479 = int_to_ptr.vmem [resolvable:$true] %s478
          %481 = dma.vmem_to_smem %s479, 16, [#allocation5], [#allocation6]
        $region20: #{_generator_step.1} parent=11 // pred_fallthru
          _
        // Predicated region
        $region21: #{_generator_step.1} parent=11 // pred_check
          %p482 = pneg %p199
        $region22: #{_generator_step.1} parent=11 // pred_check_branch
          %484 = sbr.rel (%p482) target = $region24
        $region23: #{_generator_step.1} parent=11 // pred_region
          _
        $region24: #{_generator_step.1} parent=11 // pred_fallthru
          _
        // Predicated region
        $region25: #{_generator_step.1} parent=11 // pred_check
          %p485 = pneg %p220
        $region26: #{_generator_step.1} parent=11 // pred_check_branch
          %487 = sbr.rel (%p485) target = $region28
        $region27: #{_generator_step.1} parent=11 // pred_region
          _
        $region28: #{_generator_step.1} parent=11 // pred_fallthru
          _
        // Predicated region
        $region29: #{_generator_step.1} parent=11 // pred_check
          %p488 = pneg %p241
        $region30: #{_generator_step.1} parent=11 // pred_check_branch
          %490 = sbr.rel (%p488) target = $region32
        $region31: #{_generator_step.1} parent=11 // pred_region
          _
        $region32: #{_generator_step.1} parent=11 // pred_fallthru
          _
        // Predicated region
        $region33: #{_generator_step.1} parent=11 // pred_check
          %p491 = pneg %p262
        $region34: #{_generator_step.1} parent=11 // pred_check_branch
          %493 = sbr.rel (%p491) target = $region36
        $region35: #{_generator_step.1} parent=11 // pred_region
          _
        $region36: #{_generator_step.1} parent=11 // pred_fallthru
          _
        // Predicated region
        $region37: #{_generator_step.1} parent=11 // pred_check
          %p494 = pneg %p283
        $region38: #{_generator_step.1} parent=11 // pred_check_branch
          %496 = sbr.rel (%p494) target = $region40
        $region39: #{_generator_step.1} parent=11 // pred_region
          _
        $region40: #{_generator_step.1} parent=11 // pred_fallthru
          _
        // Predicated region
        $region41: #{_generator_step.1} parent=11 // pred_check
          %p497 = pneg %p304
        $region42: #{_generator_step.1} parent=11 // pred_check_branch
          %499 = sbr.rel (%p497) target = $region44
        $region43: #{_generator_step.1} parent=11 // pred_region
          _
        $region44: #{_generator_step.1} parent=11 // pred_fallthru
          _
        // Predicated region
        $region45: #{_generator_step.1} parent=11 // pred_check
          %p500 = pneg %p325
        $region46: #{_generator_step.1} parent=11 // pred_check_branch
          %502 = sbr.rel (%p500) target = $region48
        $region47: #{_generator_step.1} parent=11 // pred_region
          _
        $region48: #{_generator_step.1} parent=11 // pred_fallthru
          _
        // Predicated region
        $region49: #{_generator_step.1} parent=11 // pred_check
          %p503 = pneg %p346
        $region50: #{_generator_step.1} parent=11 // pred_check_branch
          %505 = sbr.rel (%p503) target = $region52
        $region51: #{_generator_step.1} parent=11 // pred_region
          _
        $region52: #{_generator_step.1} parent=11 // pred_fallthru
          _
        // Predicated region
        $region53: #{_generator_step.1} parent=11 // pred_check
          %p506 = pneg %p367
        $region54: #{_generator_step.1} parent=11 // pred_check_branch
          %508 = sbr.rel (%p506) target = $region56
        $region55: #{_generator_step.1} parent=11 // pred_region
          _
        $region56: #{_generator_step.1} parent=11 // pred_fallthru
          _
      $region12: #{_generator_step.1} parent=5 // pred_fallthru
        _
      %p509 = scmp.lt.s32.totalorder %s32, 2
      // Predicated region
      $region57: #{_generator_step.1} parent=5 // pred_check
        %p510 = pneg %p509
      $region58: #{_generator_step.1} parent=5 // pred_check_branch
        %512 = sbr.rel (%p510) target = $region60
      $region59: #{_generator_step.1} parent=5 // pred_region
        // Predicated region
        $region61: #{_generator_step.1} parent=59 // pred_check
          %p513 = pneg %p94
        $region62: #{_generator_step.1} parent=59 // pred_check_branch
          %515 = sbr.rel (%p513) target = $region64
        $region63: #{_generator_step.1} parent=59 // pred_region
          %p516 = scmp.lt.s32.totalorder %s32, 1
          %s517 = scalar_select %p516, %s32, 1
          %s518 = smul.addr %s517, 32
          %s519 = smul.addr %s518, 8
          %s520 = scalar_lea.vmem %s2, %s519
        $region64: #{_generator_step.1} parent=59 // pred_fallthru
          _
        // Predicated region
        $region65: #{_generator_step.1} parent=59 // pred_check
          %p521 = pneg %p120
        $region66: #{_generator_step.1} parent=59 // pred_check_branch
          %523 = sbr.rel (%p521) target = $region68
        $region67: #{_generator_step.1} parent=59 // pred_region
          %p524 = scmp.lt.s32.totalorder %s32, 1
          %s525 = scalar_select %p524, %s32, 1
          %s526 = smul.addr %s525, 2
          %s527 = smul.addr %s526, 4
          %s528 = scalar_lea.vmem %s3, %s527
        $region68: #{_generator_step.1} parent=59 // pred_fallthru
          _
        // Predicated region
        $region69: #{_generator_step.1} parent=59 // pred_check
          %p529 = pneg %p146
        $region70: #{_generator_step.1} parent=59 // pred_check_branch
          %531 = sbr.rel (%p529) target = $region72
        $region71: #{_generator_step.1} parent=59 // pred_region
          %p532 = scmp.lt.s32.totalorder %s32, 1
          %s533 = scalar_select %p532, %s32, 1
          %s534 = smul.addr %s533, 16
          %s535 = smul.addr %s534, 8
          %s536 = scalar_lea.vmem %s4, %s535
        $region72: #{_generator_step.1} parent=59 // pred_fallthru
          _
        // Predicated region
        $region73: #{_generator_step.1} parent=59 // pred_check
          %p537 = pneg %p172
        $region74: #{_generator_step.1} parent=59 // pred_check_branch
          %539 = sbr.rel (%p537) target = $region76
        $region75: #{_generator_step.1} parent=59 // pred_region
          %p540 = scmp.lt.s32.totalorder %s32, 1
          %s541 = scalar_select %p540, %s32, 1
          %s542 = scalar_lea.vmem %s5, %s541
        $region76: #{_generator_step.1} parent=59 // pred_fallthru
          _
      $region60: #{_generator_step.1} parent=5 // pred_fallthru
        _
      %p543 = scmp.le.s32.totalorder 1, %s32
      %p544 = scmp.lt.s32.totalorder %s32, 3
      %p545 = pnand %p543, %p544
      %p546 = pneg %p545
      // Predicated region
      $region77: #{_generator_step.1} parent=5 // pred_check
        _
      $region78: #{_generator_step.1} parent=5 // pred_check_branch
        %548 = sbr.rel (%p545) target = $region80
      $region79: #{_generator_step.1} parent=5 // pred_region
        %s549 = ssub.s32 %s32, 1
        // Predicated region
        $region81: #{_generator_step.1} parent=79 // pred_check
          %p550 = pneg %p53
        $region82: #{_generator_step.1} parent=79 // pred_check_branch
          %552 = sbr.rel (%p550) target = $region84
        $region83: #{_generator_step.1} parent=79 // pred_region
          %553 = dma.done [#allocation4], 16
        $region84: #{_generator_step.1} parent=79 // pred_fallthru
          _
        // Predicated region
        $region85: #{_generator_step.1} parent=79 // pred_check
          %p554 = pneg %p74
        $region86: #{_generator_step.1} parent=79 // pred_check_branch
          %556 = sbr.rel (%p554) target = $region88
        $region87: #{_generator_step.1} parent=79 // pred_region
          %557 = dma.done [#allocation6], 16
        $region88: #{_generator_step.1} parent=79 // pred_fallthru
          _
        %558 = sfence
        %p559 = pneg %p53
        %p560 = pneg %p50
        %p561 = pneg %p74
        %p562 = pneg %p71
        %p563 = scmp.lt.s32.totalorder %s37, 1
        %s564 = scalar_select %p563, %s37, 1
        %s565 = smul.addr %s564, 32
        %s566 = smul.addr %s565, 8
        %s567 = scalar_lea.vmem %s2, %s566
        %p568 = pneg %p100
        %p569 = pneg %p97
        %p570 = scmp.lt.s32.totalorder %s37, 1
        %s571 = scalar_select %p570, %s37, 1
        %s572 = smul.addr %s571, 2
        %s573 = smul.addr %s572, 4
        %s574 = scalar_lea.vmem %s3, %s573
        %p575 = pneg %p126
        %p576 = pneg %p123
        %p577 = scmp.lt.s32.totalorder %s37, 1
        %s578 = scalar_select %p577, %s37, 1
        %s579 = smul.addr %s578, 16
        %s580 = smul.addr %s579, 8
        %s581 = scalar_lea.vmem %s4, %s580
        %p582 = pneg %p152
        %p583 = pneg %p149
        %p584 = scmp.lt.s32.totalorder %s37, 1
        %s585 = scalar_select %p584, %s37, 1
        %s586 = scalar_lea.vmem %s5, %s585
        %p587 = pneg %p178
        %p588 = pneg %p175
        %p589 = pneg %p199
        %p590 = pneg %p196
        %p591 = pneg %p220
        %p592 = pneg %p217
        %p593 = pneg %p241
        %p594 = pneg %p238
        %p595 = pneg %p262
        %p596 = pneg %p259
        %p597 = pneg %p283
        %p598 = pneg %p280
        %p599 = pneg %p304
        %p600 = pneg %p301
        %p601 = pneg %p325
        %p602 = pneg %p322
        %p603 = pneg %p346
        %p604 = pneg %p343
        %p605 = pneg %p367
        %p606 = pneg %p364
        %p607 = pneg %p393
        %p608 = pneg %p390
        %p609 = scmp.lt.s32.totalorder %s37, 1
        %s610 = scalar_select %p609, %s37, 1
        %s611 = smul.addr %s610, 2
        %s612 = smul.addr %s611, 4
        %s613 = scalar_lea.vmem %s15, %s612
        %p614 = pneg %p419
        %p615 = pneg %p416
        %s616 = sand.u32 %s406, 1
        %s617 = scalar_lea.sflag [#allocation3], %s616
        %s618 = sand.u32 %s406, 1
        %s619 = smul.addr %s618, 8
        %s620 = scalar_lea.vmem [#allocation7], %s619
        %p621 = pneg %p445
        %p622 = pneg %p442
        %s623 = sand.u32 %s432, 1
        %s624 = scalar_lea.sflag [#allocation9], %s623
        %s625 = sand.u32 %s432, 1
        %s626 = scalar_lea.vmem [#allocation8], %s625
        %p627 = scmp.lt.s32.totalorder %s37, 1
        %s628 = scalar_select %p627, %s37, 1
        %s629 = smul.addr %s628, 32
        %s630 = smul.addr %s629, 8
        %s631 = scalar_lea.vmem %s2, %s630
        %p632 = scmp.lt.s32.totalorder %s37, 1
        %s633 = scalar_select %p632, %s37, 1
        %s634 = smul.addr %s633, 2
        %s635 = smul.addr %s634, 4
        %s636 = scalar_lea.vmem %s3, %s635
        %p637 = scmp.lt.s32.totalorder %s37, 1
        %s638 = scalar_select %p637, %s37, 1
        %s639 = smul.addr %s638, 16
        %s640 = smul.addr %s639, 8
        %s641 = scalar_lea.vmem %s4, %s640
        %p642 = scmp.lt.s32.totalorder %s37, 1
        %s643 = scalar_select %p642, %s37, 1
        %s644 = scalar_lea.vmem %s5, %s643
        %p645 = scmp.lt.s32.totalorder %s37, 1
        %s646 = scalar_select %p645, %s37, 1
        %s647 = smul.addr %s646, 2
        %s648 = smul.addr %s647, 4
        %s649 = scalar_lea.vmem %s15, %s648
        %v651 = vld [vmem:[%s641] sm:$0xff]
        %v652 = vld [vmem:[%s641 + $0x8] sm:$0xff]
        %v653 = vld [vmem:[%s641 + $0x10] sm:$0xff]
        %v654 = vld [vmem:[%s641 + $0x18] sm:$0xff]
        %v655 = vld [vmem:[%s641 + $0x20] sm:$0xff]
        %v656 = vld [vmem:[%s641 + $0x28] sm:$0xff]
        %v657 = vld [vmem:[%s641 + $0x30] sm:$0xff]
        %v658 = vld [vmem:[%s641 + $0x38] sm:$0xff]
        %v659 = vld [vmem:[%s641 + $0x40] sm:$0xff]
        %v660 = vld [vmem:[%s641 + $0x48] sm:$0xff]
        %v661 = vld [vmem:[%s641 + $0x50] sm:$0xff]
        %v662 = vld [vmem:[%s641 + $0x58] sm:$0xff]
        %v663 = vld [vmem:[%s641 + $0x60] sm:$0xff]
        %v664 = vld [vmem:[%s641 + $0x68] sm:$0xff]
        %v665 = vld [vmem:[%s641 + $0x70] sm:$0xff]
        %v666 = vld [vmem:[%s641 + $0x78] sm:$0xff]
        %v667 = vpack.c.bf16 %v652, %v651
        %v668 = vpack.c.bf16 %v654, %v653
        %v669 = vpack.c.bf16 %v656, %v655
        %v670 = vpack.c.bf16 %v658, %v657
        %v671 = vpack.c.bf16 %v660, %v659
        %v672 = vpack.c.bf16 %v662, %v661
        %v673 = vpack.c.bf16 %v664, %v663
        %v674 = vpack.c.bf16 %v666, %v665
        %v675 = vld [vmem:[%s6] sm:$0xf]
        %v676 = vld [vmem:[%s6 + $0x4] sm:$0xf]
        %v677 = vld [vmem:[%s6 + $0x8] sm:$0xf]
        %v678 = vld [vmem:[%s6 + $0xc] sm:$0xf]
        %v683 = vunpack.c.l.b16 %v675
        %v684 = vunpack.c.l.b16 %v676
        %v685 = vunpack.c.l.b16 %v677
        %v686 = vunpack.c.l.b16 %v678
        %v687 = vpack.c.b16 %v684, %v683
        %v688 = vpack.c.b16 %v686, %v685
        %vm691 = vcmask 261120
        %v693 = vsel %vm691, %v667, 0
        %v696 = vsel %vm691, %v668, 0
        %v699 = vsel %vm691, %v669, 0
        %v702 = vsel %vm691, %v670, 0
        %v705 = vsel %vm691, %v671, 0
        %v708 = vsel %vm691, %v672, 0
        %v711 = vsel %vm691, %v673, 0
        %v714 = vsel %vm691, %v674, 0
        %716 = vmatprep.subr.bf16.mxu0 0
        %717 = vmatpush1.bf16.msra.mxu0 0
        %718 = vmatprep.subr.bf16.mxu0 0
        %719 = vmatpush1.bf16.msra.mxu0 0
        %720 = vmatprep.subr.bf16.mxu0 0
        %721 = vmatpush1.bf16.msra.mxu0 0
        %722 = vmatprep.subr.bf16.mxu0 0
        %723 = vmatpush1.bf16.msra.mxu0 0
        %724 = vmatprep.subr.bf16.mxu0 0
        %725 = vmatpush1.bf16.msra.mxu0 0
        %726 = vmatprep.subr.bf16.mxu0 0
        %727 = vmatpush1.bf16.msra.mxu0 0
        %728 = vmatprep.subr.bf16.mxu0 0
        %729 = vmatpush1.bf16.msra.mxu0 %v688
        %730 = vmatprep.subr.bf16.mxu0 0
        %731 = vmatpush1.bf16.msra.mxu0 %v687
        %732 = vmatprep.subr.bf16.mxu0 0
        %733 = vmatpush2.bf16.msra.mxu0 0
        %734 = vmatprep.subr.bf16.mxu0 0
        %735 = vmatpush2.bf16.msra.mxu0 0
        %736 = vmatprep.subr.bf16.mxu0 0
        %737 = vmatpush2.bf16.msra.mxu0 0
        %738 = vmatprep.subr.bf16.mxu0 0
        %739 = vmatpush2.bf16.msra.mxu0 0
        %740 = vmatprep.subr.bf16.mxu0 0
        %741 = vmatpush2.bf16.msra.mxu0 0
        %742 = vmatprep.subr.bf16.mxu0 0
        %743 = vmatpush2.bf16.msra.mxu0 0
        %744 = vmatprep.subr.bf16.mxu0 0
        %745 = vmatpush2.bf16.msra.mxu0 0
        %746 = vmatprep.subr.bf16.mxu0 0
        %747 = vmatpush2.bf16.msra.mxu0 0
        %748 = vmatprep.mubr.bf16.mxu0 0
        %749 = vmatmul.mubr.bf16.gmra.mxu0 %v693
        %v750 = vpop.f32.mrf.mxu0
        %v751 = vadd.f32 0.0, %v750
        %v752 = vpop.f32.mrf.mxu0
        %v753 = vpop.f32.mrf.mxu0
        %v754 = vadd.f32 0.0, %v753
        %v755 = vpop.f32.mrf.mxu0
        %756 = vmatprep.mubr.bf16.mxu0 0
        %757 = vmatmul.mubr.bf16.gmra.mxu0 %v696
        %v758 = vpop.f32.mrf.mxu0
        %v759 = vadd.f32 0.0, %v758
        %v760 = vpop.f32.mrf.mxu0
        %v761 = vpop.f32.mrf.mxu0
        %v762 = vadd.f32 0.0, %v761
        %v763 = vpop.f32.mrf.mxu0
        %764 = vmatprep.mubr.bf16.mxu0 0
        %765 = vmatmul.mubr.bf16.gmra.mxu0 %v699
        %v766 = vpop.f32.mrf.mxu0
        %v767 = vadd.f32 0.0, %v766
        %v768 = vpop.f32.mrf.mxu0
        %v769 = vpop.f32.mrf.mxu0
        %v770 = vadd.f32 0.0, %v769
        %v771 = vpop.f32.mrf.mxu0
        %772 = vmatprep.mubr.bf16.mxu0 0
        %773 = vmatmul.mubr.bf16.gmra.mxu0 %v702
        %v774 = vpop.f32.mrf.mxu0
        %v775 = vadd.f32 0.0, %v774
        %v776 = vpop.f32.mrf.mxu0
        %v777 = vpop.f32.mrf.mxu0
        %v778 = vadd.f32 0.0, %v777
        %v779 = vpop.f32.mrf.mxu0
        %780 = vmatprep.mubr.bf16.mxu0 0
        %781 = vmatmul.mubr.bf16.gmra.mxu0 %v705
        %v782 = vpop.f32.mrf.mxu0
        %v783 = vadd.f32 0.0, %v782
        %v784 = vpop.f32.mrf.mxu0
        %v785 = vpop.f32.mrf.mxu0
        %v786 = vadd.f32 0.0, %v785
        %v787 = vpop.f32.mrf.mxu0
        %788 = vmatprep.mubr.bf16.mxu0 0
        %789 = vmatmul.mubr.bf16.gmra.mxu0 %v708
        %v790 = vpop.f32.mrf.mxu0
        %v791 = vadd.f32 0.0, %v790
        %v792 = vpop.f32.mrf.mxu0
        %v793 = vpop.f32.mrf.mxu0
        %v794 = vadd.f32 0.0, %v793
        %v795 = vpop.f32.mrf.mxu0
        %796 = vmatprep.mubr.bf16.mxu0 0
        %797 = vmatmul.mubr.bf16.gmra.mxu0 %v711
        %v798 = vpop.f32.mrf.mxu0
        %v799 = vadd.f32 0.0, %v798
        %v800 = vpop.f32.mrf.mxu0
        %v801 = vpop.f32.mrf.mxu0
        %v802 = vadd.f32 0.0, %v801
        %v803 = vpop.f32.mrf.mxu0
        %804 = vmatprep.mubr.bf16.mxu0 0
        %805 = vmatmul.mubr.bf16.gmra.mxu0 %v714
        %v806 = vpop.f32.mrf.mxu0
        %v807 = vadd.f32 0.0, %v806
        %v808 = vpop.f32.mrf.mxu0
        %v809 = vpop.f32.mrf.mxu0
        %v810 = vadd.f32 0.0, %v809
        %v811 = vpop.f32.mrf.mxu0
        %812 = vdwg.mxu0
        %vm813 = vcmask 523264
        %814 = vst.msk [vmem:[%s620] sm:$0xff] %vm813, %v751
        %v815 = vsel %vm691, %v651, 0.0
        %v816 = vsel %vm691, %v652, 0.0
        %v817 = vadd.f32 %v815, %v816
        %v818 = vsel %vm691, %v653, 0.0
        %v819 = vadd.f32 %v817, %v818
        %v820 = vsel %vm691, %v654, 0.0
        %v821 = vadd.f32 %v819, %v820
        %v822 = vsel %vm691, %v655, 0.0
        %v823 = vadd.f32 %v821, %v822
        %v824 = vsel %vm691, %v656, 0.0
        %v825 = vadd.f32 %v823, %v824
        %v826 = vsel %vm691, %v657, 0.0
        %v827 = vadd.f32 %v825, %v826
        %v828 = vsel %vm691, %v658, 0.0
        %v829 = vadd.f32 %v827, %v828
        %v830 = vsel %vm691, %v659, 0.0
        %v831 = vadd.f32 %v829, %v830
        %v832 = vsel %vm691, %v660, 0.0
        %v833 = vadd.f32 %v831, %v832
        %v834 = vsel %vm691, %v661, 0.0
        %v835 = vadd.f32 %v833, %v834
        %v836 = vsel %vm691, %v662, 0.0
        %v837 = vadd.f32 %v835, %v836
        %v838 = vsel %vm691, %v663, 0.0
        %v839 = vadd.f32 %v837, %v838
        %v840 = vsel %vm691, %v664, 0.0
        %v841 = vadd.f32 %v839, %v840
        %v842 = vsel %vm691, %v665, 0.0
        %v843 = vadd.f32 %v841, %v842
        %v844 = vsel %vm691, %v666, 0.0
        %v845 = vadd.f32 %v843, %v844
        %v846 = vrot.slane %v845, 4
        %v847 = vadd.f32 %v845, %v846
        %v848 = vrot.slane %v847, 2
        %v849 = vadd.f32 %v847, %v848
        %v850 = vrot.slane %v849, 1
        %v851 = vadd.f32 %v849, %v850
        %v852 = vmul.f32 %v851, 0.125
        %v853 = vpack.c.bf16 %v852, %v852
        %v854 = vld [vmem:[%s7] sm:$0xf]
        %v855 = vld [vmem:[%s7 + $0x4] sm:$0xf]
        %v856 = vld [vmem:[%s7 + $0x8] sm:$0xf]
        %v857 = vld [vmem:[%s7 + $0xc] sm:$0xf]
        %v862 = vunpack.c.l.b16 %v854
        %v863 = vunpack.c.l.b16 %v855
        %v864 = vunpack.c.l.b16 %v856
        %v865 = vunpack.c.l.b16 %v857
        %v866 = vpack.c.b16 %v863, %v862
        %v867 = vpack.c.b16 %v865, %v864
        %v871 = vsel %vm691, %v853, 0
        %873 = vmatprep.subr.bf16.mxu0 0
        %874 = vmatpush1.bf16.msra.mxu0 0
        %875 = vmatprep.subr.bf16.mxu0 0
        %876 = vmatpush1.bf16.msra.mxu0 0
        %877 = vmatprep.subr.bf16.mxu0 0
        %878 = vmatpush1.bf16.msra.mxu0 0
        %879 = vmatprep.subr.bf16.mxu0 0
        %880 = vmatpush1.bf16.msra.mxu0 0
        %881 = vmatprep.subr.bf16.mxu0 0
        %882 = vmatpush1.bf16.msra.mxu0 0
        %883 = vmatprep.subr.bf16.mxu0 0
        %884 = vmatpush1.bf16.msra.mxu0 0
        %885 = vmatprep.subr.bf16.mxu0 0
        %886 = vmatpush1.bf16.msra.mxu0 %v867
        %887 = vmatprep.subr.bf16.mxu0 0
        %888 = vmatpush1.bf16.msra.mxu0 %v866
        %889 = vmatprep.subr.bf16.mxu0 0
        %890 = vmatpush2.bf16.msra.mxu0 0
        %891 = vmatprep.subr.bf16.mxu0 0
        %892 = vmatpush2.bf16.msra.mxu0 0
        %893 = vmatprep.subr.bf16.mxu0 0
        %894 = vmatpush2.bf16.msra.mxu0 0
        %895 = vmatprep.subr.bf16.mxu0 0
        %896 = vmatpush2.bf16.msra.mxu0 0
        %897 = vmatprep.subr.bf16.mxu0 0
        %898 = vmatpush2.bf16.msra.mxu0 0
        %899 = vmatprep.subr.bf16.mxu0 0
        %900 = vmatpush2.bf16.msra.mxu0 0
        %901 = vmatprep.subr.bf16.mxu0 0
        %902 = vmatpush2.bf16.msra.mxu0 0
        %903 = vmatprep.subr.bf16.mxu0 0
        %904 = vmatpush2.bf16.msra.mxu0 0
        %905 = vmatprep.mubr.bf16.mxu0 0
        %906 = vmatmul.mubr.bf16.gmra.mxu0 %v871
        %v907 = vpop.f32.mrf.mxu0
        %v908 = vadd.f32 0.0, %v907
        %v909 = vpop.f32.mrf.mxu0
        %v910 = vpop.f32.mrf.mxu0
        %v911 = vpop.f32.mrf.mxu0
        %912 = vdwg.mxu0
        %vm913 = vcmask 516096
        %914 = vst.msk [vmem:[%s626] sm:$0x1] %vm913, %v908
        %v915 = vld [vmem:[%s644] sm:$0x1]
        %v916 = vpack.c.bf16 %v908, %v908
        %v917 = vld [vmem:[%s8] sm:$0xf]
        %v918 = vld [vmem:[%s8 + $0x4] sm:$0xf]
        %v919 = vld [vmem:[%s8 + $0x8] sm:$0xf]
        %v920 = vld [vmem:[%s8 + $0xc] sm:$0xf]
        %v921 = vld [vmem:[%s8 + $0x10] sm:$0xf]
        %v922 = vld [vmem:[%s8 + $0x14] sm:$0xf]
        %v923 = vld [vmem:[%s8 + $0x18] sm:$0xf]
        %v924 = vld [vmem:[%s8 + $0x1c] sm:$0xf]
        %v933 = vunpack.c.l.b16 %v917
        %v934 = vunpack.c.l.b16 %v918
        %v935 = vunpack.c.l.b16 %v919
        %v936 = vunpack.c.l.b16 %v920
        %v937 = vunpack.c.l.b16 %v921
        %v938 = vunpack.c.l.b16 %v922
        %v939 = vunpack.c.l.b16 %v923
        %v940 = vunpack.c.l.b16 %v924
        %v941 = vpack.c.b16 %v934, %v933
        %v942 = vpack.c.b16 %v936, %v935
        %v943 = vpack.c.b16 %v938, %v937
        %v944 = vpack.c.b16 %v940, %v939
        %v950 = vsel %vm813, %v916, 0
        %952 = vmatprep.subr.bf16.mxu0 0
        %953 = vmatpush1.bf16.msra.mxu0 0
        %954 = vmatprep.subr.bf16.mxu0 0
        %955 = vmatpush1.bf16.msra.mxu0 0
        %956 = vmatprep.subr.bf16.mxu0 0
        %957 = vmatpush1.bf16.msra.mxu0 0
        %958 = vmatprep.subr.bf16.mxu0 0
        %959 = vmatpush1.bf16.msra.mxu0 0
        %960 = vmatprep.subr.bf16.mxu0 0
        %961 = vmatpush1.bf16.msra.mxu0 %v944
        %962 = vmatprep.subr.bf16.mxu0 0
        %963 = vmatpush1.bf16.msra.mxu0 %v943
        %964 = vmatprep.subr.bf16.mxu0 0
        %965 = vmatpush1.bf16.msra.mxu0 %v942
        %966 = vmatprep.subr.bf16.mxu0 0
        %967 = vmatpush1.bf16.msra.mxu0 %v941
        %968 = vmatprep.subr.bf16.mxu0 0
        %969 = vmatpush2.bf16.msra.mxu0 0
        %970 = vmatprep.subr.bf16.mxu0 0
        %971 = vmatpush2.bf16.msra.mxu0 0
        %972 = vmatprep.subr.bf16.mxu0 0
        %973 = vmatpush2.bf16.msra.mxu0 0
        %974 = vmatprep.subr.bf16.mxu0 0
        %975 = vmatpush2.bf16.msra.mxu0 0
        %976 = vmatprep.subr.bf16.mxu0 0
        %977 = vmatpush2.bf16.msra.mxu0 0
        %978 = vmatprep.subr.bf16.mxu0 0
        %979 = vmatpush2.bf16.msra.mxu0 0
        %980 = vmatprep.subr.bf16.mxu0 0
        %981 = vmatpush2.bf16.msra.mxu0 0
        %982 = vmatprep.subr.bf16.mxu0 0
        %983 = vmatpush2.bf16.msra.mxu0 0
        %984 = vmatprep.mubr.bf16.mxu0 0
        %985 = vmatmul.mubr.bf16.gmra.mxu0 %v950
        %v986 = vpop.f32.mrf.mxu0
        %v987 = vadd.f32 0.0, %v986
        %v988 = vpop.f32.mrf.mxu0
        %v989 = vpop.f32.mrf.mxu0
        %v990 = vpop.f32.mrf.mxu0
        %991 = vdwg.mxu0
        %v992 = vadd.f32 %v915, %v987
        %v993 = vld [vmem:[%s631] sm:$0xff]
        %v994 = vld [vmem:[%s631 + $0x8] sm:$0xff]
        %v995 = vld [vmem:[%s631 + $0x10] sm:$0xff]
        %v996 = vld [vmem:[%s631 + $0x18] sm:$0xff]
        %v997 = vld [vmem:[%s631 + $0x20] sm:$0xff]
        %v998 = vld [vmem:[%s631 + $0x28] sm:$0xff]
        %v999 = vld [vmem:[%s631 + $0x30] sm:$0xff]
        %v1000 = vld [vmem:[%s631 + $0x38] sm:$0xff]
        %v1001 = vld [vmem:[%s631 + $0x40] sm:$0xff]
        %v1002 = vld [vmem:[%s631 + $0x48] sm:$0xff]
        %v1003 = vld [vmem:[%s631 + $0x50] sm:$0xff]
        %v1004 = vld [vmem:[%s631 + $0x58] sm:$0xff]
        %v1005 = vld [vmem:[%s631 + $0x60] sm:$0xff]
        %v1006 = vld [vmem:[%s631 + $0x68] sm:$0xff]
        %v1007 = vld [vmem:[%s631 + $0x70] sm:$0xff]
        %v1008 = vld [vmem:[%s631 + $0x78] sm:$0xff]
        %v1009 = vld [vmem:[%s631 + $0x80] sm:$0xff]
        %v1010 = vld [vmem:[%s631 + $0x88] sm:$0xff]
        %v1011 = vld [vmem:[%s631 + $0x90] sm:$0xff]
        %v1012 = vld [vmem:[%s631 + $0x98] sm:$0xff]
        %v1013 = vld [vmem:[%s631 + $0xa0] sm:$0xff]
        %v1014 = vld [vmem:[%s631 + $0xa8] sm:$0xff]
        %v1015 = vld [vmem:[%s631 + $0xb0] sm:$0xff]
        %v1016 = vld [vmem:[%s631 + $0xb8] sm:$0xff]
        %v1017 = vld [vmem:[%s631 + $0xc0] sm:$0xff]
        %v1018 = vld [vmem:[%s631 + $0xc8] sm:$0xff]
        %v1019 = vld [vmem:[%s631 + $0xd0] sm:$0xff]
        %v1020 = vld [vmem:[%s631 + $0xd8] sm:$0xff]
        %v1021 = vld [vmem:[%s631 + $0xe0] sm:$0xff]
        %v1022 = vld [vmem:[%s631 + $0xe8] sm:$0xff]
        %v1023 = vld [vmem:[%s631 + $0xf0] sm:$0xff]
        %v1024 = vld [vmem:[%s631 + $0xf8] sm:$0xff]
        %v1025 = vpack.c.bf16 %v994, %v993
        %v1026 = vpack.c.bf16 %v996, %v995
        %v1027 = vpack.c.bf16 %v998, %v997
        %v1028 = vpack.c.bf16 %v1000, %v999
        %v1029 = vpack.c.bf16 %v1002, %v1001
        %v1030 = vpack.c.bf16 %v1004, %v1003
        %v1031 = vpack.c.bf16 %v1006, %v1005
        %v1032 = vpack.c.bf16 %v1008, %v1007
        %v1033 = vpack.c.bf16 %v1010, %v1009
        %v1034 = vpack.c.bf16 %v1012, %v1011
        %v1035 = vpack.c.bf16 %v1014, %v1013
        %v1036 = vpack.c.bf16 %v1016, %v1015
        %v1037 = vpack.c.bf16 %v1018, %v1017
        %v1038 = vpack.c.bf16 %v1020, %v1019
        %v1039 = vpack.c.bf16 %v1022, %v1021
        %v1040 = vpack.c.bf16 %v1024, %v1023
        %v1041 = vld [vmem:[%s9] sm:$0x3]
        %v1043 = vlaneseq
        %v1044 = vshrl.u32 %v1043, 7
        %v1045 = vsub.s32 0, %v1044
        %v1046 = vrot.slane %v992, %v1045
        %vm1048 = vcmask 31744
        %v1050 = vsel %vm1048, %v1025, 0
        %v1053 = vsel %vm1048, %v1026, 0
        %v1056 = vsel %vm1048, %v1027, 0
        %v1059 = vsel %vm1048, %v1028, 0
        %v1062 = vsel %vm1048, %v1029, 0
        %v1065 = vsel %vm1048, %v1030, 0
        %v1068 = vsel %vm1048, %v1031, 0
        %v1071 = vsel %vm1048, %v1032, 0
        %v1074 = vsel %vm1048, %v1033, 0
        %v1077 = vsel %vm1048, %v1034, 0
        %v1080 = vsel %vm1048, %v1035, 0
        %v1083 = vsel %vm1048, %v1036, 0
        %v1086 = vsel %vm1048, %v1037, 0
        %v1089 = vsel %vm1048, %v1038, 0
        %v1092 = vsel %vm1048, %v1039, 0
        %v1095 = vsel %vm1048, %v1040, 0
        %vm1097 = vcmask 1041408
        %v1099 = vsel %vm1097, %v1041, 0
        %1101 = vmatprep.subr.bf16.mxu0 0
        %1102 = vmatpush1.bf16.msra.mxu0 0
        %1103 = vmatprep.subr.bf16.mxu0 0
        %1104 = vmatpush1.bf16.msra.mxu0 0
        %1105 = vmatprep.subr.bf16.mxu0 0
        %1106 = vmatpush1.bf16.msra.mxu0 0
        %1107 = vmatprep.subr.bf16.mxu0 0
        %1108 = vmatpush1.bf16.msra.mxu0 0
        %1109 = vmatprep.subr.bf16.mxu0 0
        %1110 = vmatpush1.bf16.msra.mxu0 0
        %1111 = vmatprep.subr.bf16.mxu0 0
        %1112 = vmatpush1.bf16.msra.mxu0 0
        %1113 = vmatprep.subr.bf16.mxu0 0
        %1114 = vmatpush1.bf16.msra.mxu0 0
        %1115 = vmatprep.subr.bf16.mxu0 0
        %1116 = vmatpush1.bf16.msra.mxu0 %v1099
        %1117 = vmatprep.subr.bf16.mxu0 0
        %1118 = vmatpush2.bf16.msra.mxu0 0
        %1119 = vmatprep.subr.bf16.mxu0 0
        %1120 = vmatpush2.bf16.msra.mxu0 0
        %1121 = vmatprep.subr.bf16.mxu0 0
        %1122 = vmatpush2.bf16.msra.mxu0 0
        %1123 = vmatprep.subr.bf16.mxu0 0
        %1124 = vmatpush2.bf16.msra.mxu0 0
        %1125 = vmatprep.subr.bf16.mxu0 0
        %1126 = vmatpush2.bf16.msra.mxu0 0
        %1127 = vmatprep.subr.bf16.mxu0 0
        %1128 = vmatpush2.bf16.msra.mxu0 0
        %1129 = vmatprep.subr.bf16.mxu0 0
        %1130 = vmatpush2.bf16.msra.mxu0 0
        %1131 = vmatprep.subr.bf16.mxu0 0
        %1132 = vmatpush2.bf16.msra.mxu0 0
        %1133 = vmatprep.mubr.bf16.mxu0 0
        %1134 = vmatmul.mubr.bf16.gmra.mxu0 %v1050
        %v1135 = vpop.f32.mrf.mxu0
        %v1136 = vadd.f32 %v1046, %v1135
        %v1137 = vpop.f32.mrf.mxu0
        %v1138 = vpop.f32.mrf.mxu0
        %v1139 = vadd.f32 %v1046, %v1138
        %v1140 = vpop.f32.mrf.mxu0
        %1141 = vmatprep.mubr.bf16.mxu0 0
        %1142 = vmatmul.mubr.bf16.gmra.mxu0 %v1053
        %v1143 = vpop.f32.mrf.mxu0
        %v1144 = vadd.f32 %v1046, %v1143
        %v1145 = vpop.f32.mrf.mxu0
        %v1146 = vpop.f32.mrf.mxu0
        %v1147 = vadd.f32 %v1046, %v1146
        %v1148 = vpop.f32.mrf.mxu0
        %1149 = vmatprep.mubr.bf16.mxu0 0
        %1150 = vmatmul.mubr.bf16.gmra.mxu0 %v1056
        %v1151 = vpop.f32.mrf.mxu0
        %v1152 = vadd.f32 %v1046, %v1151
        %v1153 = vpop.f32.mrf.mxu0
        %v1154 = vpop.f32.mrf.mxu0
        %v1155 = vadd.f32 %v1046, %v1154
        %v1156 = vpop.f32.mrf.mxu0
        %1157 = vmatprep.mubr.bf16.mxu0 0
        %1158 = vmatmul.mubr.bf16.gmra.mxu0 %v1059
        %v1159 = vpop.f32.mrf.mxu0
        %v1160 = vadd.f32 %v1046, %v1159
        %v1161 = vpop.f32.mrf.mxu0
        %v1162 = vpop.f32.mrf.mxu0
        %v1163 = vadd.f32 %v1046, %v1162
        %v1164 = vpop.f32.mrf.mxu0
        %1165 = vmatprep.mubr.bf16.mxu0 0
        %1166 = vmatmul.mubr.bf16.gmra.mxu0 %v1062
        %v1167 = vpop.f32.mrf.mxu0
        %v1168 = vadd.f32 %v1046, %v1167
        %v1169 = vpop.f32.mrf.mxu0
        %v1170 = vpop.f32.mrf.mxu0
        %v1171 = vadd.f32 %v1046, %v1170
        %v1172 = vpop.f32.mrf.mxu0
        %1173 = vmatprep.mubr.bf16.mxu0 0
        %1174 = vmatmul.mubr.bf16.gmra.mxu0 %v1065
        %v1175 = vpop.f32.mrf.mxu0
        %v1176 = vadd.f32 %v1046, %v1175
        %v1177 = vpop.f32.mrf.mxu0
        %v1178 = vpop.f32.mrf.mxu0
        %v1179 = vadd.f32 %v1046, %v1178
        %v1180 = vpop.f32.mrf.mxu0
        %1181 = vmatprep.mubr.bf16.mxu0 0
        %1182 = vmatmul.mubr.bf16.gmra.mxu0 %v1068
        %v1183 = vpop.f32.mrf.mxu0
        %v1184 = vadd.f32 %v1046, %v1183
        %v1185 = vpop.f32.mrf.mxu0
        %v1186 = vpop.f32.mrf.mxu0
        %v1187 = vadd.f32 %v1046, %v1186
        %v1188 = vpop.f32.mrf.mxu0
        %1189 = vmatprep.mubr.bf16.mxu0 0
        %1190 = vmatmul.mubr.bf16.gmra.mxu0 %v1071
        %v1191 = vpop.f32.mrf.mxu0
        %v1192 = vadd.f32 %v1046, %v1191
        %v1193 = vpop.f32.mrf.mxu0
        %v1194 = vpop.f32.mrf.mxu0
        %v1195 = vadd.f32 %v1046, %v1194
        %v1196 = vpop.f32.mrf.mxu0
        %1197 = vmatprep.mubr.bf16.mxu0 0
        %1198 = vmatmul.mubr.bf16.gmra.mxu0 %v1074
        %v1199 = vpop.f32.mrf.mxu0
        %v1200 = vadd.f32 %v1046, %v1199
        %v1201 = vpop.f32.mrf.mxu0
        %v1202 = vpop.f32.mrf.mxu0
        %v1203 = vadd.f32 %v1046, %v1202
        %v1204 = vpop.f32.mrf.mxu0
        %1205 = vmatprep.mubr.bf16.mxu0 0
        %1206 = vmatmul.mubr.bf16.gmra.mxu0 %v1077
        %v1207 = vpop.f32.mrf.mxu0
        %v1208 = vadd.f32 %v1046, %v1207
        %v1209 = vpop.f32.mrf.mxu0
        %v1210 = vpop.f32.mrf.mxu0
        %v1211 = vadd.f32 %v1046, %v1210
        %v1212 = vpop.f32.mrf.mxu0
        %1213 = vmatprep.mubr.bf16.mxu0 0
        %1214 = vmatmul.mubr.bf16.gmra.mxu0 %v1080
        %v1215 = vpop.f32.mrf.mxu0
        %v1216 = vadd.f32 %v1046, %v1215
        %v1217 = vpop.f32.mrf.mxu0
        %v1218 = vpop.f32.mrf.mxu0
        %v1219 = vadd.f32 %v1046, %v1218
        %v1220 = vpop.f32.mrf.mxu0
        %1221 = vmatprep.mubr.bf16.mxu0 0
        %1222 = vmatmul.mubr.bf16.gmra.mxu0 %v1083
        %v1223 = vpop.f32.mrf.mxu0
        %v1224 = vadd.f32 %v1046, %v1223
        %v1225 = vpop.f32.mrf.mxu0
        %v1226 = vpop.f32.mrf.mxu0
        %v1227 = vadd.f32 %v1046, %v1226
        %v1228 = vpop.f32.mrf.mxu0
        %1229 = vmatprep.mubr.bf16.mxu0 0
        %1230 = vmatmul.mubr.bf16.gmra.mxu0 %v1086
        %v1231 = vpop.f32.mrf.mxu0
        %v1232 = vadd.f32 %v1046, %v1231
        %v1233 = vpop.f32.mrf.mxu0
        %v1234 = vpop.f32.mrf.mxu0
        %v1235 = vadd.f32 %v1046, %v1234
        %v1236 = vpop.f32.mrf.mxu0
        %1237 = vmatprep.mubr.bf16.mxu0 0
        %1238 = vmatmul.mubr.bf16.gmra.mxu0 %v1089
        %v1239 = vpop.f32.mrf.mxu0
        %v1240 = vadd.f32 %v1046, %v1239
        %v1241 = vpop.f32.mrf.mxu0
        %v1242 = vpop.f32.mrf.mxu0
        %v1243 = vadd.f32 %v1046, %v1242
        %v1244 = vpop.f32.mrf.mxu0
        %1245 = vmatprep.mubr.bf16.mxu0 0
        %1246 = vmatmul.mubr.bf16.gmra.mxu0 %v1092
        %v1247 = vpop.f32.mrf.mxu0
        %v1248 = vadd.f32 %v1046, %v1247
        %v1249 = vpop.f32.mrf.mxu0
        %v1250 = vpop.f32.mrf.mxu0
        %v1251 = vadd.f32 %v1046, %v1250
        %v1252 = vpop.f32.mrf.mxu0
        %1253 = vmatprep.mubr.bf16.mxu0 0
        %1254 = vmatmul.mubr.bf16.gmra.mxu0 %v1095
        %v1255 = vpop.f32.mrf.mxu0
        %v1256 = vadd.f32 %v1046, %v1255
        %v1257 = vpop.f32.mrf.mxu0
        %v1258 = vpop.f32.mrf.mxu0
        %v1259 = vadd.f32 %v1046, %v1258
        %v1260 = vpop.f32.mrf.mxu0
        %1261 = vdwg.mxu0
        %v1262 = vpack.c.bf16 %v1139, %v1136
        %v1263 = vpack.c.bf16 %v1147, %v1144
        %v1264 = vpack.c.bf16 %v1155, %v1152
        %v1265 = vpack.c.bf16 %v1163, %v1160
        %v1266 = vpack.c.bf16 %v1171, %v1168
        %v1267 = vpack.c.bf16 %v1179, %v1176
        %v1268 = vpack.c.bf16 %v1187, %v1184
        %v1269 = vpack.c.bf16 %v1195, %v1192
        %v1270 = vpack.c.bf16 %v1203, %v1200
        %v1271 = vpack.c.bf16 %v1211, %v1208
        %v1272 = vpack.c.bf16 %v1219, %v1216
        %v1273 = vpack.c.bf16 %v1227, %v1224
        %v1274 = vpack.c.bf16 %v1235, %v1232
        %v1275 = vpack.c.bf16 %v1243, %v1240
        %v1276 = vpack.c.bf16 %v1251, %v1248
        %v1277 = vpack.c.bf16 %v1259, %v1256
        %v1278 = vpack.c.bf16 %v754, %v751
        %v1279 = vpack.c.bf16 %v762, %v759
        %v1280 = vpack.c.bf16 %v770, %v767
        %v1281 = vpack.c.bf16 %v778, %v775
        %v1282 = vpack.c.bf16 %v786, %v783
        %v1283 = vpack.c.bf16 %v794, %v791
        %v1284 = vpack.c.bf16 %v802, %v799
        %v1285 = vpack.c.bf16 %v810, %v807
        %v1286 = vld [vmem:[%s10] sm:$0xf]
        %v1287 = vld [vmem:[%s10 + $0x4] sm:$0xf]
        %v1288 = vld [vmem:[%s10 + $0x8] sm:$0xf]
        %v1289 = vld [vmem:[%s10 + $0xc] sm:$0xf]
        %v1290 = vld [vmem:[%s10 + $0x10] sm:$0xf]
        %v1291 = vld [vmem:[%s10 + $0x14] sm:$0xf]
        %v1292 = vld [vmem:[%s10 + $0x18] sm:$0xf]
        %v1293 = vld [vmem:[%s10 + $0x1c] sm:$0xf]
        %v1302 = vunpack.c.l.b16 %v1286
        %v1303 = vunpack.c.l.b16 %v1287
        %v1304 = vunpack.c.l.b16 %v1288
        %v1305 = vunpack.c.l.b16 %v1289
        %v1306 = vunpack.c.l.b16 %v1290
        %v1307 = vunpack.c.l.b16 %v1291
        %v1308 = vunpack.c.l.b16 %v1292
        %v1309 = vunpack.c.l.b16 %v1293
        %v1310 = vpack.c.b16 %v1303, %v1302
        %v1311 = vpack.c.b16 %v1305, %v1304
        %v1312 = vpack.c.b16 %v1307, %v1306
        %v1313 = vpack.c.b16 %v1309, %v1308
        %v1319 = vsel %vm813, %v1262, 0
        %v1322 = vsel %vm813, %v1263, 0
        %v1325 = vsel %vm813, %v1264, 0
        %v1328 = vsel %vm813, %v1265, 0
        %v1331 = vsel %vm813, %v1266, 0
        %v1334 = vsel %vm813, %v1267, 0
        %v1337 = vsel %vm813, %v1268, 0
        %v1340 = vsel %vm813, %v1269, 0
        %v1343 = vsel %vm813, %v1270, 0
        %v1346 = vsel %vm813, %v1271, 0
        %v1349 = vsel %vm813, %v1272, 0
        %v1352 = vsel %vm813, %v1273, 0
        %v1355 = vsel %vm813, %v1274, 0
        %v1358 = vsel %vm813, %v1275, 0
        %v1361 = vsel %vm813, %v1276, 0
        %v1364 = vsel %vm813, %v1277, 0
        %1366 = vmatprep.subr.bf16.mxu0 0
        %1367 = vmatpush1.bf16.msra.mxu0 0
        %1368 = vmatprep.subr.bf16.mxu0 0
        %1369 = vmatpush1.bf16.msra.mxu0 0
        %1370 = vmatprep.subr.bf16.mxu0 0
        %1371 = vmatpush1.bf16.msra.mxu0 0
        %1372 = vmatprep.subr.bf16.mxu0 0
        %1373 = vmatpush1.bf16.msra.mxu0 0
        %1374 = vmatprep.subr.bf16.mxu0 0
        %1375 = vmatpush1.bf16.msra.mxu0 %v1313
        %1376 = vmatprep.subr.bf16.mxu0 0
        %1377 = vmatpush1.bf16.msra.mxu0 %v1312
        %1378 = vmatprep.subr.bf16.mxu0 0
        %1379 = vmatpush1.bf16.msra.mxu0 %v1311
        %1380 = vmatprep.subr.bf16.mxu0 0
        %1381 = vmatpush1.bf16.msra.mxu0 %v1310
        %1382 = vmatprep.subr.bf16.mxu0 0
        %1383 = vmatpush2.bf16.msra.mxu0 0
        %1384 = vmatprep.subr.bf16.mxu0 0
        %1385 = vmatpush2.bf16.msra.mxu0 0
        %1386 = vmatprep.subr.bf16.mxu0 0
        %1387 = vmatpush2.bf16.msra.mxu0 0
        %1388 = vmatprep.subr.bf16.mxu0 0
        %1389 = vmatpush2.bf16.msra.mxu0 0
        %1390 = vmatprep.subr.bf16.mxu0 0
        %1391 = vmatpush2.bf16.msra.mxu0 0
        %1392 = vmatprep.subr.bf16.mxu0 0
        %1393 = vmatpush2.bf16.msra.mxu0 0
        %1394 = vmatprep.subr.bf16.mxu0 0
        %1395 = vmatpush2.bf16.msra.mxu0 0
        %1396 = vmatprep.subr.bf16.mxu0 0
        %1397 = vmatpush2.bf16.msra.mxu0 0
        %1398 = vmatprep.mubr.bf16.mxu0 0
        %1399 = vmatmul.mubr.bf16.gmra.mxu0 %v1319
        %v1400 = vpop.f32.mrf.mxu0
        %v1401 = vadd.f32 0.0, %v1400
        %v1402 = vpop.f32.mrf.mxu0
        %v1403 = vpop.f32.mrf.mxu0
        %v1404 = vadd.f32 0.0, %v1403
        %v1405 = vpop.f32.mrf.mxu0
        %1406 = vmatprep.mubr.bf16.mxu0 0
        %1407 = vmatmul.mubr.bf16.gmra.mxu0 %v1322
        %v1408 = vpop.f32.mrf.mxu0
        %v1409 = vadd.f32 0.0, %v1408
        %v1410 = vpop.f32.mrf.mxu0
        %v1411 = vpop.f32.mrf.mxu0
        %v1412 = vadd.f32 0.0, %v1411
        %v1413 = vpop.f32.mrf.mxu0
        %1414 = vmatprep.mubr.bf16.mxu0 0
        %1415 = vmatmul.mubr.bf16.gmra.mxu0 %v1325
        %v1416 = vpop.f32.mrf.mxu0
        %v1417 = vadd.f32 0.0, %v1416
        %v1418 = vpop.f32.mrf.mxu0
        %v1419 = vpop.f32.mrf.mxu0
        %v1420 = vadd.f32 0.0, %v1419
        %v1421 = vpop.f32.mrf.mxu0
        %1422 = vmatprep.mubr.bf16.mxu0 0
        %1423 = vmatmul.mubr.bf16.gmra.mxu0 %v1328
        %v1424 = vpop.f32.mrf.mxu0
        %v1425 = vadd.f32 0.0, %v1424
        %v1426 = vpop.f32.mrf.mxu0
        %v1427 = vpop.f32.mrf.mxu0
        %v1428 = vadd.f32 0.0, %v1427
        %v1429 = vpop.f32.mrf.mxu0
        %1430 = vmatprep.mubr.bf16.mxu0 0
        %1431 = vmatmul.mubr.bf16.gmra.mxu0 %v1331
        %v1432 = vpop.f32.mrf.mxu0
        %v1433 = vadd.f32 0.0, %v1432
        %v1434 = vpop.f32.mrf.mxu0
        %v1435 = vpop.f32.mrf.mxu0
        %v1436 = vadd.f32 0.0, %v1435
        %v1437 = vpop.f32.mrf.mxu0
        %1438 = vmatprep.mubr.bf16.mxu0 0
        %1439 = vmatmul.mubr.bf16.gmra.mxu0 %v1334
        %v1440 = vpop.f32.mrf.mxu0
        %v1441 = vadd.f32 0.0, %v1440
        %v1442 = vpop.f32.mrf.mxu0
        %v1443 = vpop.f32.mrf.mxu0
        %v1444 = vadd.f32 0.0, %v1443
        %v1445 = vpop.f32.mrf.mxu0
        %1446 = vmatprep.mubr.bf16.mxu0 0
        %1447 = vmatmul.mubr.bf16.gmra.mxu0 %v1337
        %v1448 = vpop.f32.mrf.mxu0
        %v1449 = vadd.f32 0.0, %v1448
        %v1450 = vpop.f32.mrf.mxu0
        %v1451 = vpop.f32.mrf.mxu0
        %v1452 = vadd.f32 0.0, %v1451
        %v1453 = vpop.f32.mrf.mxu0
        %1454 = vmatprep.mubr.bf16.mxu0 0
        %1455 = vmatmul.mubr.bf16.gmra.mxu0 %v1340
        %v1456 = vpop.f32.mrf.mxu0
        %v1457 = vadd.f32 0.0, %v1456
        %v1458 = vpop.f32.mrf.mxu0
        %v1459 = vpop.f32.mrf.mxu0
        %v1460 = vadd.f32 0.0, %v1459
        %v1461 = vpop.f32.mrf.mxu0
        %1462 = vmatprep.mubr.bf16.mxu0 0
        %1463 = vmatmul.mubr.bf16.gmra.mxu0 %v1343
        %v1464 = vpop.f32.mrf.mxu0
        %v1465 = vadd.f32 0.0, %v1464
        %v1466 = vpop.f32.mrf.mxu0
        %v1467 = vpop.f32.mrf.mxu0
        %v1468 = vadd.f32 0.0, %v1467
        %v1469 = vpop.f32.mrf.mxu0
        %1470 = vmatprep.mubr.bf16.mxu0 0
        %1471 = vmatmul.mubr.bf16.gmra.mxu0 %v1346
        %v1472 = vpop.f32.mrf.mxu0
        %v1473 = vadd.f32 0.0, %v1472
        %v1474 = vpop.f32.mrf.mxu0
        %v1475 = vpop.f32.mrf.mxu0
        %v1476 = vadd.f32 0.0, %v1475
        %v1477 = vpop.f32.mrf.mxu0
        %1478 = vmatprep.mubr.bf16.mxu0 0
        %1479 = vmatmul.mubr.bf16.gmra.mxu0 %v1349
        %v1480 = vpop.f32.mrf.mxu0
        %v1481 = vadd.f32 0.0, %v1480
        %v1482 = vpop.f32.mrf.mxu0
        %v1483 = vpop.f32.mrf.mxu0
        %v1484 = vadd.f32 0.0, %v1483
        %v1485 = vpop.f32.mrf.mxu0
        %1486 = vmatprep.mubr.bf16.mxu0 0
        %1487 = vmatmul.mubr.bf16.gmra.mxu0 %v1352
        %v1488 = vpop.f32.mrf.mxu0
        %v1489 = vadd.f32 0.0, %v1488
        %v1490 = vpop.f32.mrf.mxu0
        %v1491 = vpop.f32.mrf.mxu0
        %v1492 = vadd.f32 0.0, %v1491
        %v1493 = vpop.f32.mrf.mxu0
        %1494 = vmatprep.mubr.bf16.mxu0 0
        %1495 = vmatmul.mubr.bf16.gmra.mxu0 %v1355
        %v1496 = vpop.f32.mrf.mxu0
        %v1497 = vadd.f32 0.0, %v1496
        %v1498 = vpop.f32.mrf.mxu0
        %v1499 = vpop.f32.mrf.mxu0
        %v1500 = vadd.f32 0.0, %v1499
        %v1501 = vpop.f32.mrf.mxu0
        %1502 = vmatprep.mubr.bf16.mxu0 0
        %1503 = vmatmul.mubr.bf16.gmra.mxu0 %v1358
        %v1504 = vpop.f32.mrf.mxu0
        %v1505 = vadd.f32 0.0, %v1504
        %v1506 = vpop.f32.mrf.mxu0
        %v1507 = vpop.f32.mrf.mxu0
        %v1508 = vadd.f32 0.0, %v1507
        %v1509 = vpop.f32.mrf.mxu0
        %1510 = vmatprep.mubr.bf16.mxu0 0
        %1511 = vmatmul.mubr.bf16.gmra.mxu0 %v1361
        %v1512 = vpop.f32.mrf.mxu0
        %v1513 = vadd.f32 0.0, %v1512
        %v1514 = vpop.f32.mrf.mxu0
        %v1515 = vpop.f32.mrf.mxu0
        %v1516 = vadd.f32 0.0, %v1515
        %v1517 = vpop.f32.mrf.mxu0
        %1518 = vmatprep.mubr.bf16.mxu0 0
        %1519 = vmatmul.mubr.bf16.gmra.mxu0 %v1364
        %v1520 = vpop.f32.mrf.mxu0
        %v1521 = vadd.f32 0.0, %v1520
        %v1522 = vpop.f32.mrf.mxu0
        %v1523 = vpop.f32.mrf.mxu0
        %v1524 = vadd.f32 0.0, %v1523
        %v1525 = vpop.f32.mrf.mxu0
        %1526 = vdwg.mxu0
        %v1527 = vld [vmem:[%s11] sm:$0xf]
        %v1528 = vld [vmem:[%s11 + $0x4] sm:$0xf]
        %v1529 = vld [vmem:[%s11 + $0x8] sm:$0xf]
        %v1530 = vld [vmem:[%s11 + $0xc] sm:$0xf]
        %v1531 = vld [vmem:[%s11 + $0x10] sm:$0xf]
        %v1532 = vld [vmem:[%s11 + $0x14] sm:$0xf]
        %v1533 = vld [vmem:[%s11 + $0x18] sm:$0xf]
        %v1534 = vld [vmem:[%s11 + $0x1c] sm:$0xf]
        %v1543 = vunpack.c.l.b16 %v1527
        %v1544 = vunpack.c.l.b16 %v1528
        %v1545 = vunpack.c.l.b16 %v1529
        %v1546 = vunpack.c.l.b16 %v1530
        %v1547 = vunpack.c.l.b16 %v1531
        %v1548 = vunpack.c.l.b16 %v1532
        %v1549 = vunpack.c.l.b16 %v1533
        %v1550 = vunpack.c.l.b16 %v1534
        %v1551 = vpack.c.b16 %v1544, %v1543
        %v1552 = vpack.c.b16 %v1546, %v1545
        %v1553 = vpack.c.b16 %v1548, %v1547
        %v1554 = vpack.c.b16 %v1550, %v1549
        %v1560 = vsel %vm813, %v1278, 0
        %v1563 = vsel %vm813, %v1279, 0
        %v1566 = vsel %vm813, %v1280, 0
        %v1569 = vsel %vm813, %v1281, 0
        %v1572 = vsel %vm813, %v1282, 0
        %v1575 = vsel %vm813, %v1283, 0
        %v1578 = vsel %vm813, %v1284, 0
        %v1581 = vsel %vm813, %v1285, 0
        %1583 = vmatprep.subr.bf16.mxu0 0
        %1584 = vmatpush1.bf16.msra.mxu0 0
        %1585 = vmatprep.subr.bf16.mxu0 0
        %1586 = vmatpush1.bf16.msra.mxu0 0
        %1587 = vmatprep.subr.bf16.mxu0 0
        %1588 = vmatpush1.bf16.msra.mxu0 0
        %1589 = vmatprep.subr.bf16.mxu0 0
        %1590 = vmatpush1.bf16.msra.mxu0 0
        %1591 = vmatprep.subr.bf16.mxu0 0
        %1592 = vmatpush1.bf16.msra.mxu0 %v1554
        %1593 = vmatprep.subr.bf16.mxu0 0
        %1594 = vmatpush1.bf16.msra.mxu0 %v1553
        %1595 = vmatprep.subr.bf16.mxu0 0
        %1596 = vmatpush1.bf16.msra.mxu0 %v1552
        %1597 = vmatprep.subr.bf16.mxu0 0
        %1598 = vmatpush1.bf16.msra.mxu0 %v1551
        %1599 = vmatprep.subr.bf16.mxu0 0
        %1600 = vmatpush2.bf16.msra.mxu0 0
        %1601 = vmatprep.subr.bf16.mxu0 0
        %1602 = vmatpush2.bf16.msra.mxu0 0
        %1603 = vmatprep.subr.bf16.mxu0 0
        %1604 = vmatpush2.bf16.msra.mxu0 0
        %1605 = vmatprep.subr.bf16.mxu0 0
        %1606 = vmatpush2.bf16.msra.mxu0 0
        %1607 = vmatprep.subr.bf16.mxu0 0
        %1608 = vmatpush2.bf16.msra.mxu0 0
        %1609 = vmatprep.subr.bf16.mxu0 0
        %1610 = vmatpush2.bf16.msra.mxu0 0
        %1611 = vmatprep.subr.bf16.mxu0 0
        %1612 = vmatpush2.bf16.msra.mxu0 0
        %1613 = vmatprep.subr.bf16.mxu0 0
        %1614 = vmatpush2.bf16.msra.mxu0 0
        %1615 = vmatprep.mubr.bf16.mxu0 0
        %1616 = vmatmul.mubr.bf16.gmra.mxu0 %v1560
        %v1617 = vpop.f32.mrf.mxu0
        %v1618 = vadd.f32 0.0, %v1617
        %v1619 = vpop.f32.mrf.mxu0
        %v1620 = vpop.f32.mrf.mxu0
        %v1621 = vadd.f32 0.0, %v1620
        %v1622 = vpop.f32.mrf.mxu0
        %1623 = vmatprep.mubr.bf16.mxu0 0
        %1624 = vmatmul.mubr.bf16.gmra.mxu0 %v1563
        %v1625 = vpop.f32.mrf.mxu0
        %v1626 = vadd.f32 0.0, %v1625
        %v1627 = vpop.f32.mrf.mxu0
        %v1628 = vpop.f32.mrf.mxu0
        %v1629 = vadd.f32 0.0, %v1628
        %v1630 = vpop.f32.mrf.mxu0
        %1631 = vmatprep.mubr.bf16.mxu0 0
        %1632 = vmatmul.mubr.bf16.gmra.mxu0 %v1566
        %v1633 = vpop.f32.mrf.mxu0
        %v1634 = vadd.f32 0.0, %v1633
        %v1635 = vpop.f32.mrf.mxu0
        %v1636 = vpop.f32.mrf.mxu0
        %v1637 = vadd.f32 0.0, %v1636
        %v1638 = vpop.f32.mrf.mxu0
        %1639 = vmatprep.mubr.bf16.mxu0 0
        %1640 = vmatmul.mubr.bf16.gmra.mxu0 %v1569
        %v1641 = vpop.f32.mrf.mxu0
        %v1642 = vadd.f32 0.0, %v1641
        %v1643 = vpop.f32.mrf.mxu0
        %v1644 = vpop.f32.mrf.mxu0
        %v1645 = vadd.f32 0.0, %v1644
        %v1646 = vpop.f32.mrf.mxu0
        %1647 = vmatprep.mubr.bf16.mxu0 0
        %1648 = vmatmul.mubr.bf16.gmra.mxu0 %v1572
        %v1649 = vpop.f32.mrf.mxu0
        %v1650 = vadd.f32 0.0, %v1649
        %v1651 = vpop.f32.mrf.mxu0
        %v1652 = vpop.f32.mrf.mxu0
        %v1653 = vadd.f32 0.0, %v1652
        %v1654 = vpop.f32.mrf.mxu0
        %1655 = vmatprep.mubr.bf16.mxu0 0
        %1656 = vmatmul.mubr.bf16.gmra.mxu0 %v1575
        %v1657 = vpop.f32.mrf.mxu0
        %v1658 = vadd.f32 0.0, %v1657
        %v1659 = vpop.f32.mrf.mxu0
        %v1660 = vpop.f32.mrf.mxu0
        %v1661 = vadd.f32 0.0, %v1660
        %v1662 = vpop.f32.mrf.mxu0
        %1663 = vmatprep.mubr.bf16.mxu0 0
        %1664 = vmatmul.mubr.bf16.gmra.mxu0 %v1578
        %v1665 = vpop.f32.mrf.mxu0
        %v1666 = vadd.f32 0.0, %v1665
        %v1667 = vpop.f32.mrf.mxu0
        %v1668 = vpop.f32.mrf.mxu0
        %v1669 = vadd.f32 0.0, %v1668
        %v1670 = vpop.f32.mrf.mxu0
        %1671 = vmatprep.mubr.bf16.mxu0 0
        %1672 = vmatmul.mubr.bf16.gmra.mxu0 %v1581
        %v1673 = vpop.f32.mrf.mxu0
        %v1674 = vadd.f32 0.0, %v1673
        %v1675 = vpop.f32.mrf.mxu0
        %v1676 = vpop.f32.mrf.mxu0
        %v1677 = vadd.f32 0.0, %v1676
        %v1678 = vpop.f32.mrf.mxu0
        %1679 = vdwg.mxu0
        %v1680 = vld [vmem:[%s12] sm:$0xf]
        %v1681 = vld [vmem:[%s12 + $0x4] sm:$0xf]
        %v1682 = vld [vmem:[%s12 + $0x8] sm:$0xf]
        %v1683 = vld [vmem:[%s12 + $0xc] sm:$0xf]
        %v1684 = vld [vmem:[%s12 + $0x10] sm:$0xf]
        %v1685 = vld [vmem:[%s12 + $0x14] sm:$0xf]
        %v1686 = vld [vmem:[%s12 + $0x18] sm:$0xf]
        %v1687 = vld [vmem:[%s12 + $0x1c] sm:$0xf]
        %v1696 = vunpack.c.l.b16 %v1680
        %v1697 = vunpack.c.l.b16 %v1681
        %v1698 = vunpack.c.l.b16 %v1682
        %v1699 = vunpack.c.l.b16 %v1683
        %v1700 = vunpack.c.l.b16 %v1684
        %v1701 = vunpack.c.l.b16 %v1685
        %v1702 = vunpack.c.l.b16 %v1686
        %v1703 = vunpack.c.l.b16 %v1687
        %v1704 = vpack.c.b16 %v1697, %v1696
        %v1705 = vpack.c.b16 %v1699, %v1698
        %v1706 = vpack.c.b16 %v1701, %v1700
        %v1707 = vpack.c.b16 %v1703, %v1702
        %1712 = vmatprep.subr.bf16.mxu0 0
        %1713 = vmatpush1.bf16.msra.mxu0 0
        %1714 = vmatprep.subr.bf16.mxu0 0
        %1715 = vmatpush1.bf16.msra.mxu0 0
        %1716 = vmatprep.subr.bf16.mxu0 0
        %1717 = vmatpush1.bf16.msra.mxu0 0
        %1718 = vmatprep.subr.bf16.mxu0 0
        %1719 = vmatpush1.bf16.msra.mxu0 0
        %1720 = vmatprep.subr.bf16.mxu0 0
        %1721 = vmatpush1.bf16.msra.mxu0 %v1707
        %1722 = vmatprep.subr.bf16.mxu0 0
        %1723 = vmatpush1.bf16.msra.mxu0 %v1706
        %1724 = vmatprep.subr.bf16.mxu0 0
        %1725 = vmatpush1.bf16.msra.mxu0 %v1705
        %1726 = vmatprep.subr.bf16.mxu0 0
        %1727 = vmatpush1.bf16.msra.mxu0 %v1704
        %1728 = vmatprep.subr.bf16.mxu0 0
        %1729 = vmatpush2.bf16.msra.mxu0 0
        %1730 = vmatprep.subr.bf16.mxu0 0
        %1731 = vmatpush2.bf16.msra.mxu0 0
        %1732 = vmatprep.subr.bf16.mxu0 0
        %1733 = vmatpush2.bf16.msra.mxu0 0
        %1734 = vmatprep.subr.bf16.mxu0 0
        %1735 = vmatpush2.bf16.msra.mxu0 0
        %1736 = vmatprep.subr.bf16.mxu0 0
        %1737 = vmatpush2.bf16.msra.mxu0 0
        %1738 = vmatprep.subr.bf16.mxu0 0
        %1739 = vmatpush2.bf16.msra.mxu0 0
        %1740 = vmatprep.subr.bf16.mxu0 0
        %1741 = vmatpush2.bf16.msra.mxu0 0
        %1742 = vmatprep.subr.bf16.mxu0 0
        %1743 = vmatpush2.bf16.msra.mxu0 0
        %1744 = vmatprep.mubr.bf16.mxu0 0
        %1745 = vmatmul.mubr.bf16.gmra.mxu0 %v1560
        %v1746 = vpop.f32.mrf.mxu0
        %v1747 = vadd.f32 0.0, %v1746
        %v1748 = vpop.f32.mrf.mxu0
        %v1749 = vpop.f32.mrf.mxu0
        %v1750 = vadd.f32 0.0, %v1749
        %v1751 = vpop.f32.mrf.mxu0
        %1752 = vmatprep.mubr.bf16.mxu0 0
        %1753 = vmatmul.mubr.bf16.gmra.mxu0 %v1563
        %v1754 = vpop.f32.mrf.mxu0
        %v1755 = vadd.f32 0.0, %v1754
        %v1756 = vpop.f32.mrf.mxu0
        %v1757 = vpop.f32.mrf.mxu0
        %v1758 = vadd.f32 0.0, %v1757
        %v1759 = vpop.f32.mrf.mxu0
        %1760 = vmatprep.mubr.bf16.mxu0 0
        %1761 = vmatmul.mubr.bf16.gmra.mxu0 %v1566
        %v1762 = vpop.f32.mrf.mxu0
        %v1763 = vadd.f32 0.0, %v1762
        %v1764 = vpop.f32.mrf.mxu0
        %v1765 = vpop.f32.mrf.mxu0
        %v1766 = vadd.f32 0.0, %v1765
        %v1767 = vpop.f32.mrf.mxu0
        %1768 = vmatprep.mubr.bf16.mxu0 0
        %1769 = vmatmul.mubr.bf16.gmra.mxu0 %v1569
        %v1770 = vpop.f32.mrf.mxu0
        %v1771 = vadd.f32 0.0, %v1770
        %v1772 = vpop.f32.mrf.mxu0
        %v1773 = vpop.f32.mrf.mxu0
        %v1774 = vadd.f32 0.0, %v1773
        %v1775 = vpop.f32.mrf.mxu0
        %1776 = vmatprep.mubr.bf16.mxu0 0
        %1777 = vmatmul.mubr.bf16.gmra.mxu0 %v1572
        %v1778 = vpop.f32.mrf.mxu0
        %v1779 = vadd.f32 0.0, %v1778
        %v1780 = vpop.f32.mrf.mxu0
        %v1781 = vpop.f32.mrf.mxu0
        %v1782 = vadd.f32 0.0, %v1781
        %v1783 = vpop.f32.mrf.mxu0
        %1784 = vmatprep.mubr.bf16.mxu0 0
        %1785 = vmatmul.mubr.bf16.gmra.mxu0 %v1575
        %v1786 = vpop.f32.mrf.mxu0
        %v1787 = vadd.f32 0.0, %v1786
        %v1788 = vpop.f32.mrf.mxu0
        %v1789 = vpop.f32.mrf.mxu0
        %v1790 = vadd.f32 0.0, %v1789
        %v1791 = vpop.f32.mrf.mxu0
        %1792 = vmatprep.mubr.bf16.mxu0 0
        %1793 = vmatmul.mubr.bf16.gmra.mxu0 %v1578
        %v1794 = vpop.f32.mrf.mxu0
        %v1795 = vadd.f32 0.0, %v1794
        %v1796 = vpop.f32.mrf.mxu0
        %v1797 = vpop.f32.mrf.mxu0
        %v1798 = vadd.f32 0.0, %v1797
        %v1799 = vpop.f32.mrf.mxu0
        %1800 = vmatprep.mubr.bf16.mxu0 0
        %1801 = vmatmul.mubr.bf16.gmra.mxu0 %v1581
        %v1802 = vpop.f32.mrf.mxu0
        %v1803 = vadd.f32 0.0, %v1802
        %v1804 = vpop.f32.mrf.mxu0
        %v1805 = vpop.f32.mrf.mxu0
        %v1806 = vadd.f32 0.0, %v1805
        %v1807 = vpop.f32.mrf.mxu0
        %1808 = vdwg.mxu0
        %v1809 = vpack.c.bf16 %v1404, %v1401
        %v1810 = vpack.c.bf16 %v1412, %v1409
        %v1811 = vpack.c.bf16 %v1420, %v1417
        %v1812 = vpack.c.bf16 %v1428, %v1425
        %v1813 = vpack.c.bf16 %v1436, %v1433
        %v1814 = vpack.c.bf16 %v1444, %v1441
        %v1815 = vpack.c.bf16 %v1452, %v1449
        %v1816 = vpack.c.bf16 %v1460, %v1457
        %v1817 = vpack.c.bf16 %v1468, %v1465
        %v1818 = vpack.c.bf16 %v1476, %v1473
        %v1819 = vpack.c.bf16 %v1484, %v1481
        %v1820 = vpack.c.bf16 %v1492, %v1489
        %v1821 = vpack.c.bf16 %v1500, %v1497
        %v1822 = vpack.c.bf16 %v1508, %v1505
        %v1823 = vpack.c.bf16 %v1516, %v1513
        %v1824 = vpack.c.bf16 %v1524, %v1521
        %v1825 = vpack.c.bf16 %v1621, %v1618
        %v1826 = vpack.c.bf16 %v1629, %v1626
        %v1827 = vpack.c.bf16 %v1637, %v1634
        %v1828 = vpack.c.bf16 %v1645, %v1642
        %v1829 = vpack.c.bf16 %v1653, %v1650
        %v1830 = vpack.c.bf16 %v1661, %v1658
        %v1831 = vpack.c.bf16 %v1669, %v1666
        %v1832 = vpack.c.bf16 %v1677, %v1674
        %v1834 = vsel %vm813, %v1809, 0
        %v1837 = vsel %vm813, %v1810, 0
        %v1840 = vsel %vm813, %v1811, 0
        %v1843 = vsel %vm813, %v1812, 0
        %v1846 = vsel %vm813, %v1813, 0
        %v1849 = vsel %vm813, %v1814, 0
        %v1852 = vsel %vm813, %v1815, 0
        %v1855 = vsel %vm813, %v1816, 0
        %v1858 = vsel %vm813, %v1817, 0
        %v1861 = vsel %vm813, %v1818, 0
        %v1864 = vsel %vm813, %v1819, 0
        %v1867 = vsel %vm813, %v1820, 0
        %v1870 = vsel %vm813, %v1821, 0
        %v1873 = vsel %vm813, %v1822, 0
        %v1876 = vsel %vm813, %v1823, 0
        %v1879 = vsel %vm813, %v1824, 0
        %v1882 = vsel %vm813, %v1825, 0
        %v1885 = vsel %vm813, %v1826, 0
        %v1888 = vsel %vm813, %v1827, 0
        %v1891 = vsel %vm813, %v1828, 0
        %v1894 = vsel %vm813, %v1829, 0
        %v1897 = vsel %vm813, %v1830, 0
        %v1900 = vsel %vm813, %v1831, 0
        %v1903 = vsel %vm813, %v1832, 0
        %1905 = vmatprep.subr.bf16.mxu0 0
        %1906 = vmatpush1.bf16.xpose.msra.mxu0 %v1903
        %1907 = vmatprep.subr.bf16.mxu0 0
        %1908 = vmatpush1.bf16.xpose.msra.mxu0 %v1900
        %1909 = vmatprep.subr.bf16.mxu0 0
        %1910 = vmatpush1.bf16.xpose.msra.mxu0 %v1897
        %1911 = vmatprep.subr.bf16.mxu0 0
        %1912 = vmatpush1.bf16.xpose.msra.mxu0 %v1894
        %1913 = vmatprep.subr.bf16.mxu0 0
        %1914 = vmatpush1.bf16.xpose.msra.mxu0 %v1891
        %1915 = vmatprep.subr.bf16.mxu0 0
        %1916 = vmatpush1.bf16.xpose.msra.mxu0 %v1888
        %1917 = vmatprep.subr.bf16.mxu0 0
        %1918 = vmatpush1.bf16.xpose.msra.mxu0 %v1885
        %1919 = vmatprep.subr.bf16.mxu0 0
        %1920 = vmatpush1.bf16.xpose.msra.mxu0 %v1882
        %1921 = vmatprep.subr.bf16.mxu0 0
        %1922 = vmatpush2.bf16.xpose.msra.mxu0 0
        %1923 = vmatprep.subr.bf16.mxu0 0
        %1924 = vmatpush2.bf16.xpose.msra.mxu0 0
        %1925 = vmatprep.subr.bf16.mxu0 0
        %1926 = vmatpush2.bf16.xpose.msra.mxu0 0
        %1927 = vmatprep.subr.bf16.mxu0 0
        %1928 = vmatpush2.bf16.xpose.msra.mxu0 0
        %1929 = vmatprep.subr.bf16.mxu0 0
        %1930 = vmatpush2.bf16.xpose.msra.mxu0 0
        %1931 = vmatprep.subr.bf16.mxu0 0
        %1932 = vmatpush2.bf16.xpose.msra.mxu0 0
        %1933 = vmatprep.subr.bf16.mxu0 0
        %1934 = vmatpush2.bf16.xpose.msra.mxu0 0
        %1935 = vmatprep.subr.bf16.mxu0 0
        %1936 = vmatpush2.bf16.xpose.msra.mxu0 0
        %1937 = vmatprep.mubr.bf16.mxu0 0
        %1938 = vmatmul.mubr.bf16.gmra.mxu0 %v1834
        %v1939 = vpop.f32.mrf.mxu0
        %v1940 = vadd.f32 0.0, %v1939
        %v1941 = vpop.f32.mrf.mxu0
        %v1942 = vpop.f32.mrf.mxu0
        %v1943 = vadd.f32 0.0, %v1942
        %v1944 = vpop.f32.mrf.mxu0
        %1945 = vmatprep.mubr.bf16.mxu0 0
        %1946 = vmatmul.mubr.bf16.gmra.mxu0 %v1837
        %v1947 = vpop.f32.mrf.mxu0
        %v1948 = vadd.f32 0.0, %v1947
        %v1949 = vpop.f32.mrf.mxu0
        %v1950 = vpop.f32.mrf.mxu0
        %v1951 = vadd.f32 0.0, %v1950
        %v1952 = vpop.f32.mrf.mxu0
        %1953 = vmatprep.mubr.bf16.mxu0 0
        %1954 = vmatmul.mubr.bf16.gmra.mxu0 %v1840
        %v1955 = vpop.f32.mrf.mxu0
        %v1956 = vadd.f32 0.0, %v1955
        %v1957 = vpop.f32.mrf.mxu0
        %v1958 = vpop.f32.mrf.mxu0
        %v1959 = vadd.f32 0.0, %v1958
        %v1960 = vpop.f32.mrf.mxu0
        %1961 = vmatprep.mubr.bf16.mxu0 0
        %1962 = vmatmul.mubr.bf16.gmra.mxu0 %v1843
        %v1963 = vpop.f32.mrf.mxu0
        %v1964 = vadd.f32 0.0, %v1963
        %v1965 = vpop.f32.mrf.mxu0
        %v1966 = vpop.f32.mrf.mxu0
        %v1967 = vadd.f32 0.0, %v1966
        %v1968 = vpop.f32.mrf.mxu0
        %1969 = vmatprep.mubr.bf16.mxu0 0
        %1970 = vmatmul.mubr.bf16.gmra.mxu0 %v1846
        %v1971 = vpop.f32.mrf.mxu0
        %v1972 = vadd.f32 0.0, %v1971
        %v1973 = vpop.f32.mrf.mxu0
        %v1974 = vpop.f32.mrf.mxu0
        %v1975 = vadd.f32 0.0, %v1974
        %v1976 = vpop.f32.mrf.mxu0
        %1977 = vmatprep.mubr.bf16.mxu0 0
        %1978 = vmatmul.mubr.bf16.gmra.mxu0 %v1849
        %v1979 = vpop.f32.mrf.mxu0
        %v1980 = vadd.f32 0.0, %v1979
        %v1981 = vpop.f32.mrf.mxu0
        %v1982 = vpop.f32.mrf.mxu0
        %v1983 = vadd.f32 0.0, %v1982
        %v1984 = vpop.f32.mrf.mxu0
        %1985 = vmatprep.mubr.bf16.mxu0 0
        %1986 = vmatmul.mubr.bf16.gmra.mxu0 %v1852
        %v1987 = vpop.f32.mrf.mxu0
        %v1988 = vadd.f32 0.0, %v1987
        %v1989 = vpop.f32.mrf.mxu0
        %v1990 = vpop.f32.mrf.mxu0
        %v1991 = vadd.f32 0.0, %v1990
        %v1992 = vpop.f32.mrf.mxu0
        %1993 = vmatprep.mubr.bf16.mxu0 0
        %1994 = vmatmul.mubr.bf16.gmra.mxu0 %v1855
        %v1995 = vpop.f32.mrf.mxu0
        %v1996 = vadd.f32 0.0, %v1995
        %v1997 = vpop.f32.mrf.mxu0
        %v1998 = vpop.f32.mrf.mxu0
        %v1999 = vadd.f32 0.0, %v1998
        %v2000 = vpop.f32.mrf.mxu0
        %2001 = vmatprep.mubr.bf16.mxu0 0
        %2002 = vmatmul.mubr.bf16.gmra.mxu0 %v1858
        %v2003 = vpop.f32.mrf.mxu0
        %v2004 = vadd.f32 0.0, %v2003
        %v2005 = vpop.f32.mrf.mxu0
        %v2006 = vpop.f32.mrf.mxu0
        %v2007 = vadd.f32 0.0, %v2006
        %v2008 = vpop.f32.mrf.mxu0
        %2009 = vmatprep.mubr.bf16.mxu0 0
        %2010 = vmatmul.mubr.bf16.gmra.mxu0 %v1861
        %v2011 = vpop.f32.mrf.mxu0
        %v2012 = vadd.f32 0.0, %v2011
        %v2013 = vpop.f32.mrf.mxu0
        %v2014 = vpop.f32.mrf.mxu0
        %v2015 = vadd.f32 0.0, %v2014
        %v2016 = vpop.f32.mrf.mxu0
        %2017 = vmatprep.mubr.bf16.mxu0 0
        %2018 = vmatmul.mubr.bf16.gmra.mxu0 %v1864
        %v2019 = vpop.f32.mrf.mxu0
        %v2020 = vadd.f32 0.0, %v2019
        %v2021 = vpop.f32.mrf.mxu0
        %v2022 = vpop.f32.mrf.mxu0
        %v2023 = vadd.f32 0.0, %v2022
        %v2024 = vpop.f32.mrf.mxu0
        %2025 = vmatprep.mubr.bf16.mxu0 0
        %2026 = vmatmul.mubr.bf16.gmra.mxu0 %v1867
        %v2027 = vpop.f32.mrf.mxu0
        %v2028 = vadd.f32 0.0, %v2027
        %v2029 = vpop.f32.mrf.mxu0
        %v2030 = vpop.f32.mrf.mxu0
        %v2031 = vadd.f32 0.0, %v2030
        %v2032 = vpop.f32.mrf.mxu0
        %2033 = vmatprep.mubr.bf16.mxu0 0
        %2034 = vmatmul.mubr.bf16.gmra.mxu0 %v1870
        %v2035 = vpop.f32.mrf.mxu0
        %v2036 = vadd.f32 0.0, %v2035
        %v2037 = vpop.f32.mrf.mxu0
        %v2038 = vpop.f32.mrf.mxu0
        %v2039 = vadd.f32 0.0, %v2038
        %v2040 = vpop.f32.mrf.mxu0
        %2041 = vmatprep.mubr.bf16.mxu0 0
        %2042 = vmatmul.mubr.bf16.gmra.mxu0 %v1873
        %v2043 = vpop.f32.mrf.mxu0
        %v2044 = vadd.f32 0.0, %v2043
        %v2045 = vpop.f32.mrf.mxu0
        %v2046 = vpop.f32.mrf.mxu0
        %v2047 = vadd.f32 0.0, %v2046
        %v2048 = vpop.f32.mrf.mxu0
        %2049 = vmatprep.mubr.bf16.mxu0 0
        %2050 = vmatmul.mubr.bf16.gmra.mxu0 %v1876
        %v2051 = vpop.f32.mrf.mxu0
        %v2052 = vadd.f32 0.0, %v2051
        %v2053 = vpop.f32.mrf.mxu0
        %v2054 = vpop.f32.mrf.mxu0
        %v2055 = vadd.f32 0.0, %v2054
        %v2056 = vpop.f32.mrf.mxu0
        %2057 = vmatprep.mubr.bf16.mxu0 0
        %2058 = vmatmul.mubr.bf16.gmra.mxu0 %v1879
        %v2059 = vpop.f32.mrf.mxu0
        %v2060 = vadd.f32 0.0, %v2059
        %v2061 = vpop.f32.mrf.mxu0
        %v2062 = vpop.f32.mrf.mxu0
        %v2063 = vadd.f32 0.0, %v2062
        %v2064 = vpop.f32.mrf.mxu0
        %2065 = vdwg.mxu0
        %v2066 = vmul.f32 %v1940, 0.125
        %v2067 = vmul.f32 %v1943, 0.125
        %v2068 = vmul.f32 %v1948, 0.125
        %v2069 = vmul.f32 %v1951, 0.125
        %v2070 = vmul.f32 %v1956, 0.125
        %v2071 = vmul.f32 %v1959, 0.125
        %v2072 = vmul.f32 %v1964, 0.125
        %v2073 = vmul.f32 %v1967, 0.125
        %v2074 = vmul.f32 %v1972, 0.125
        %v2075 = vmul.f32 %v1975, 0.125
        %v2076 = vmul.f32 %v1980, 0.125
        %v2077 = vmul.f32 %v1983, 0.125
        %v2078 = vmul.f32 %v1988, 0.125
        %v2079 = vmul.f32 %v1991, 0.125
        %v2080 = vmul.f32 %v1996, 0.125
        %v2081 = vmul.f32 %v1999, 0.125
        %v2082 = vmul.f32 %v2004, 0.125
        %v2083 = vmul.f32 %v2007, 0.125
        %v2084 = vmul.f32 %v2012, 0.125
        %v2085 = vmul.f32 %v2015, 0.125
        %v2086 = vmul.f32 %v2020, 0.125
        %v2087 = vmul.f32 %v2023, 0.125
        %v2088 = vmul.f32 %v2028, 0.125
        %v2089 = vmul.f32 %v2031, 0.125
        %v2090 = vmul.f32 %v2036, 0.125
        %v2091 = vmul.f32 %v2039, 0.125
        %v2092 = vmul.f32 %v2044, 0.125
        %v2093 = vmul.f32 %v2047, 0.125
        %v2094 = vmul.f32 %v2052, 0.125
        %v2095 = vmul.f32 %v2055, 0.125
        %v2096 = vmul.f32 %v2060, 0.125
        %v2097 = vmul.f32 %v2063, 0.125
        %v2098 = vlaneseq
        %v2099 = vand.u32 %v2098, 127
        %vm2100 = vcmp.lt.s32.totalorder %v2099, 8
        %v2101 = vsel %vm2100, %v2066, -1e+30
        %v2102 = vsel %vm2100, %v2067, -1e+30
        %v2103 = vsel %vm2100, %v2068, -1e+30
        %v2104 = vsel %vm2100, %v2069, -1e+30
        %v2105 = vsel %vm2100, %v2070, -1e+30
        %v2106 = vsel %vm2100, %v2071, -1e+30
        %v2107 = vsel %vm2100, %v2072, -1e+30
        %v2108 = vsel %vm2100, %v2073, -1e+30
        %v2109 = vsel %vm2100, %v2074, -1e+30
        %v2110 = vsel %vm2100, %v2075, -1e+30
        %v2111 = vsel %vm2100, %v2076, -1e+30
        %v2112 = vsel %vm2100, %v2077, -1e+30
        %v2113 = vsel %vm2100, %v2078, -1e+30
        %v2114 = vsel %vm2100, %v2079, -1e+30
        %v2115 = vsel %vm2100, %v2080, -1e+30
        %v2116 = vsel %vm2100, %v2081, -1e+30
        %v2117 = vsel %vm2100, %v2082, -1e+30
        %v2118 = vsel %vm2100, %v2083, -1e+30
        %v2119 = vsel %vm2100, %v2084, -1e+30
        %v2120 = vsel %vm2100, %v2085, -1e+30
        %v2121 = vsel %vm2100, %v2086, -1e+30
        %v2122 = vsel %vm2100, %v2087, -1e+30
        %v2123 = vsel %vm2100, %v2088, -1e+30
        %v2124 = vsel %vm2100, %v2089, -1e+30
        %v2125 = vsel %vm2100, %v2090, -1e+30
        %v2126 = vsel %vm2100, %v2091, -1e+30
        %v2127 = vsel %vm2100, %v2092, -1e+30
        %v2128 = vsel %vm2100, %v2093, -1e+30
        %v2129 = vsel %vm2100, %v2094, -1e+30
        %v2130 = vsel %vm2100, %v2095, -1e+30
        %v2131 = vsel %vm2100, %v2096, -1e+30
        %v2132 = vsel %vm2100, %v2097, -1e+30
        %2133 = vmax.xlane.f32.xlu0 %v2101
        %v2134 = vpop.xlane.xlu0 %2133
        %2135 = vmax.xlane.f32.xlu0 %v2102
        %v2136 = vpop.xlane.xlu0 %2135
        %2137 = vmax.xlane.f32.xlu0 %v2103
        %v2138 = vpop.xlane.xlu0 %2137
        %2139 = vmax.xlane.f32.xlu0 %v2104
        %v2140 = vpop.xlane.xlu0 %2139
        %2141 = vmax.xlane.f32.xlu0 %v2105
        %v2142 = vpop.xlane.xlu0 %2141
        %2143 = vmax.xlane.f32.xlu0 %v2106
        %v2144 = vpop.xlane.xlu0 %2143
        %2145 = vmax.xlane.f32.xlu0 %v2107
        %v2146 = vpop.xlane.xlu0 %2145
        %2147 = vmax.xlane.f32.xlu0 %v2108
        %v2148 = vpop.xlane.xlu0 %2147
        %2149 = vmax.xlane.f32.xlu0 %v2109
        %v2150 = vpop.xlane.xlu0 %2149
        %2151 = vmax.xlane.f32.xlu0 %v2110
        %v2152 = vpop.xlane.xlu0 %2151
        %2153 = vmax.xlane.f32.xlu0 %v2111
        %v2154 = vpop.xlane.xlu0 %2153
        %2155 = vmax.xlane.f32.xlu0 %v2112
        %v2156 = vpop.xlane.xlu0 %2155
        %2157 = vmax.xlane.f32.xlu0 %v2113
        %v2158 = vpop.xlane.xlu0 %2157
        %2159 = vmax.xlane.f32.xlu0 %v2114
        %v2160 = vpop.xlane.xlu0 %2159
        %2161 = vmax.xlane.f32.xlu0 %v2115
        %v2162 = vpop.xlane.xlu0 %2161
        %2163 = vmax.xlane.f32.xlu0 %v2116
        %v2164 = vpop.xlane.xlu0 %2163
        %2165 = vmax.xlane.f32.xlu0 %v2117
        %v2166 = vpop.xlane.xlu0 %2165
        %2167 = vmax.xlane.f32.xlu0 %v2118
        %v2168 = vpop.xlane.xlu0 %2167
        %2169 = vmax.xlane.f32.xlu0 %v2119
        %v2170 = vpop.xlane.xlu0 %2169
        %2171 = vmax.xlane.f32.xlu0 %v2120
        %v2172 = vpop.xlane.xlu0 %2171
        %2173 = vmax.xlane.f32.xlu0 %v2121
        %v2174 = vpop.xlane.xlu0 %2173
        %2175 = vmax.xlane.f32.xlu0 %v2122
        %v2176 = vpop.xlane.xlu0 %2175
        %2177 = vmax.xlane.f32.xlu0 %v2123
        %v2178 = vpop.xlane.xlu0 %2177
        %2179 = vmax.xlane.f32.xlu0 %v2124
        %v2180 = vpop.xlane.xlu0 %2179
        %2181 = vmax.xlane.f32.xlu0 %v2125
        %v2182 = vpop.xlane.xlu0 %2181
        %2183 = vmax.xlane.f32.xlu0 %v2126
        %v2184 = vpop.xlane.xlu0 %2183
        %2185 = vmax.xlane.f32.xlu0 %v2127
        %v2186 = vpop.xlane.xlu0 %2185
        %2187 = vmax.xlane.f32.xlu0 %v2128
        %v2188 = vpop.xlane.xlu0 %2187
        %2189 = vmax.xlane.f32.xlu0 %v2129
        %v2190 = vpop.xlane.xlu0 %2189
        %2191 = vmax.xlane.f32.xlu0 %v2130
        %v2192 = vpop.xlane.xlu0 %2191
        %2193 = vmax.xlane.f32.xlu0 %v2131
        %v2194 = vpop.xlane.xlu0 %2193
        %2195 = vmax.xlane.f32.xlu0 %v2132
        %v2196 = vpop.xlane.xlu0 %2195
        %v2197 = vsub.f32 %v2101, %v2134
        %v2198 = vsub.f32 %v2102, %v2136
        %v2199 = vsub.f32 %v2103, %v2138
        %v2200 = vsub.f32 %v2104, %v2140
        %v2201 = vsub.f32 %v2105, %v2142
        %v2202 = vsub.f32 %v2106, %v2144
        %v2203 = vsub.f32 %v2107, %v2146
        %v2204 = vsub.f32 %v2108, %v2148
        %v2205 = vsub.f32 %v2109, %v2150
        %v2206 = vsub.f32 %v2110, %v2152
        %v2207 = vsub.f32 %v2111, %v2154
        %v2208 = vsub.f32 %v2112, %v2156
        %v2209 = vsub.f32 %v2113, %v2158
        %v2210 = vsub.f32 %v2114, %v2160
        %v2211 = vsub.f32 %v2115, %v2162
        %v2212 = vsub.f32 %v2116, %v2164
        %v2213 = vsub.f32 %v2117, %v2166
        %v2214 = vsub.f32 %v2118, %v2168
        %v2215 = vsub.f32 %v2119, %v2170
        %v2216 = vsub.f32 %v2120, %v2172
        %v2217 = vsub.f32 %v2121, %v2174
        %v2218 = vsub.f32 %v2122, %v2176
        %v2219 = vsub.f32 %v2123, %v2178
        %v2220 = vsub.f32 %v2124, %v2180
        %v2221 = vsub.f32 %v2125, %v2182
        %v2222 = vsub.f32 %v2126, %v2184
        %v2223 = vsub.f32 %v2127, %v2186
        %v2224 = vsub.f32 %v2128, %v2188
        %v2225 = vsub.f32 %v2129, %v2190
        %v2226 = vsub.f32 %v2130, %v2192
        %v2227 = vsub.f32 %v2131, %v2194
        %v2228 = vsub.f32 %v2132, %v2196
        %v2229 = vmul.f32 %v2197, 1.442695
        %v2230 = vpow.pop %v2229
        %v2231 = vmul.f32 %v2198, 1.442695
        %v2232 = vpow.pop %v2231
        %v2233 = vmul.f32 %v2199, 1.442695
        %v2234 = vpow.pop %v2233
        %v2235 = vmul.f32 %v2200, 1.442695
        %v2236 = vpow.pop %v2235
        %v2237 = vmul.f32 %v2201, 1.442695
        %v2238 = vpow.pop %v2237
        %v2239 = vmul.f32 %v2202, 1.442695
        %v2240 = vpow.pop %v2239
        %v2241 = vmul.f32 %v2203, 1.442695
        %v2242 = vpow.pop %v2241
        %v2243 = vmul.f32 %v2204, 1.442695
        %v2244 = vpow.pop %v2243
        %v2245 = vmul.f32 %v2205, 1.442695
        %v2246 = vpow.pop %v2245
        %v2247 = vmul.f32 %v2206, 1.442695
        %v2248 = vpow.pop %v2247
        %v2249 = vmul.f32 %v2207, 1.442695
        %v2250 = vpow.pop %v2249
        %v2251 = vmul.f32 %v2208, 1.442695
        %v2252 = vpow.pop %v2251
        %v2253 = vmul.f32 %v2209, 1.442695
        %v2254 = vpow.pop %v2253
        %v2255 = vmul.f32 %v2210, 1.442695
        %v2256 = vpow.pop %v2255
        %v2257 = vmul.f32 %v2211, 1.442695
        %v2258 = vpow.pop %v2257
        %v2259 = vmul.f32 %v2212, 1.442695
        %v2260 = vpow.pop %v2259
        %v2261 = vmul.f32 %v2213, 1.442695
        %v2262 = vpow.pop %v2261
        %v2263 = vmul.f32 %v2214, 1.442695
        %v2264 = vpow.pop %v2263
        %v2265 = vmul.f32 %v2215, 1.442695
        %v2266 = vpow.pop %v2265
        %v2267 = vmul.f32 %v2216, 1.442695
        %v2268 = vpow.pop %v2267
        %v2269 = vmul.f32 %v2217, 1.442695
        %v2270 = vpow.pop %v2269
        %v2271 = vmul.f32 %v2218, 1.442695
        %v2272 = vpow.pop %v2271
        %v2273 = vmul.f32 %v2219, 1.442695
        %v2274 = vpow.pop %v2273
        %v2275 = vmul.f32 %v2220, 1.442695
        %v2276 = vpow.pop %v2275
        %v2277 = vmul.f32 %v2221, 1.442695
        %v2278 = vpow.pop %v2277
        %v2279 = vmul.f32 %v2222, 1.442695
        %v2280 = vpow.pop %v2279
        %v2281 = vmul.f32 %v2223, 1.442695
        %v2282 = vpow.pop %v2281
        %v2283 = vmul.f32 %v2224, 1.442695
        %v2284 = vpow.pop %v2283
        %v2285 = vmul.f32 %v2225, 1.442695
        %v2286 = vpow.pop %v2285
        %v2287 = vmul.f32 %v2226, 1.442695
        %v2288 = vpow.pop %v2287
        %v2289 = vmul.f32 %v2227, 1.442695
        %v2290 = vpow.pop %v2289
        %v2291 = vmul.f32 %v2228, 1.442695
        %v2292 = vpow.pop %v2291
        %2293 = vadd.xlane.f32.xlu0 %v2230
        %v2294 = vpop.xlane.xlu0 %2293
        %2295 = vadd.xlane.f32.xlu0 %v2232
        %v2296 = vpop.xlane.xlu0 %2295
        %2297 = vadd.xlane.f32.xlu0 %v2234
        %v2298 = vpop.xlane.xlu0 %2297
        %2299 = vadd.xlane.f32.xlu0 %v2236
        %v2300 = vpop.xlane.xlu0 %2299
        %2301 = vadd.xlane.f32.xlu0 %v2238
        %v2302 = vpop.xlane.xlu0 %2301
        %2303 = vadd.xlane.f32.xlu0 %v2240
        %v2304 = vpop.xlane.xlu0 %2303
        %2305 = vadd.xlane.f32.xlu0 %v2242
        %v2306 = vpop.xlane.xlu0 %2305
        %2307 = vadd.xlane.f32.xlu0 %v2244
        %v2308 = vpop.xlane.xlu0 %2307
        %2309 = vadd.xlane.f32.xlu0 %v2246
        %v2310 = vpop.xlane.xlu0 %2309
        %2311 = vadd.xlane.f32.xlu0 %v2248
        %v2312 = vpop.xlane.xlu0 %2311
        %2313 = vadd.xlane.f32.xlu0 %v2250
        %v2314 = vpop.xlane.xlu0 %2313
        %2315 = vadd.xlane.f32.xlu0 %v2252
        %v2316 = vpop.xlane.xlu0 %2315
        %2317 = vadd.xlane.f32.xlu0 %v2254
        %v2318 = vpop.xlane.xlu0 %2317
        %2319 = vadd.xlane.f32.xlu0 %v2256
        %v2320 = vpop.xlane.xlu0 %2319
        %2321 = vadd.xlane.f32.xlu0 %v2258
        %v2322 = vpop.xlane.xlu0 %2321
        %2323 = vadd.xlane.f32.xlu0 %v2260
        %v2324 = vpop.xlane.xlu0 %2323
        %2325 = vadd.xlane.f32.xlu0 %v2262
        %v2326 = vpop.xlane.xlu0 %2325
        %2327 = vadd.xlane.f32.xlu0 %v2264
        %v2328 = vpop.xlane.xlu0 %2327
        %2329 = vadd.xlane.f32.xlu0 %v2266
        %v2330 = vpop.xlane.xlu0 %2329
        %2331 = vadd.xlane.f32.xlu0 %v2268
        %v2332 = vpop.xlane.xlu0 %2331
        %2333 = vadd.xlane.f32.xlu0 %v2270
        %v2334 = vpop.xlane.xlu0 %2333
        %2335 = vadd.xlane.f32.xlu0 %v2272
        %v2336 = vpop.xlane.xlu0 %2335
        %2337 = vadd.xlane.f32.xlu0 %v2274
        %v2338 = vpop.xlane.xlu0 %2337
        %2339 = vadd.xlane.f32.xlu0 %v2276
        %v2340 = vpop.xlane.xlu0 %2339
        %2341 = vadd.xlane.f32.xlu0 %v2278
        %v2342 = vpop.xlane.xlu0 %2341
        %2343 = vadd.xlane.f32.xlu0 %v2280
        %v2344 = vpop.xlane.xlu0 %2343
        %2345 = vadd.xlane.f32.xlu0 %v2282
        %v2346 = vpop.xlane.xlu0 %2345
        %2347 = vadd.xlane.f32.xlu0 %v2284
        %v2348 = vpop.xlane.xlu0 %2347
        %2349 = vadd.xlane.f32.xlu0 %v2286
        %v2350 = vpop.xlane.xlu0 %2349
        %2351 = vadd.xlane.f32.xlu0 %v2288
        %v2352 = vpop.xlane.xlu0 %2351
        %2353 = vadd.xlane.f32.xlu0 %v2290
        %v2354 = vpop.xlane.xlu0 %2353
        %2355 = vadd.xlane.f32.xlu0 %v2292
        %v2356 = vpop.xlane.xlu0 %2355
        %v2357 = vpack.c.bf16 %v2232, %v2230
        %v2358 = vpack.c.bf16 %v2236, %v2234
        %v2359 = vpack.c.bf16 %v2240, %v2238
        %v2360 = vpack.c.bf16 %v2244, %v2242
        %v2361 = vpack.c.bf16 %v2248, %v2246
        %v2362 = vpack.c.bf16 %v2252, %v2250
        %v2363 = vpack.c.bf16 %v2256, %v2254
        %v2364 = vpack.c.bf16 %v2260, %v2258
        %v2365 = vpack.c.bf16 %v2264, %v2262
        %v2366 = vpack.c.bf16 %v2268, %v2266
        %v2367 = vpack.c.bf16 %v2272, %v2270
        %v2368 = vpack.c.bf16 %v2276, %v2274
        %v2369 = vpack.c.bf16 %v2280, %v2278
        %v2370 = vpack.c.bf16 %v2284, %v2282
        %v2371 = vpack.c.bf16 %v2288, %v2286
        %v2372 = vpack.c.bf16 %v2292, %v2290
        %v2373 = vpack.c.bf16 %v1750, %v1747
        %v2374 = vpack.c.bf16 %v1758, %v1755
        %v2375 = vpack.c.bf16 %v1766, %v1763
        %v2376 = vpack.c.bf16 %v1774, %v1771
        %v2377 = vpack.c.bf16 %v1782, %v1779
        %v2378 = vpack.c.bf16 %v1790, %v1787
        %v2379 = vpack.c.bf16 %v1798, %v1795
        %v2380 = vpack.c.bf16 %v1806, %v1803
        %2381 = vmatprep.subr.bf16.mxu0 0
        %2382 = vmatpush1.bf16.msra.mxu0 %v2380
        %2383 = vmatprep.subr.bf16.mxu0 0
        %2384 = vmatpush1.bf16.msra.mxu0 %v2379
        %2385 = vmatprep.subr.bf16.mxu0 0
        %2386 = vmatpush1.bf16.msra.mxu0 %v2378
        %2387 = vmatprep.subr.bf16.mxu0 0
        %2388 = vmatpush1.bf16.msra.mxu0 %v2377
        %2389 = vmatprep.subr.bf16.mxu0 0
        %2390 = vmatpush1.bf16.msra.mxu0 %v2376
        %2391 = vmatprep.subr.bf16.mxu0 0
        %2392 = vmatpush1.bf16.msra.mxu0 %v2375
        %2393 = vmatprep.subr.bf16.mxu0 0
        %2394 = vmatpush1.bf16.msra.mxu0 %v2374
        %2395 = vmatprep.subr.bf16.mxu0 0
        %2396 = vmatpush1.bf16.msra.mxu0 %v2373
        %2397 = vmatprep.subr.bf16.mxu0 0
        %2398 = vmatpush2.bf16.msra.mxu0 0
        %2399 = vmatprep.subr.bf16.mxu0 0
        %2400 = vmatpush2.bf16.msra.mxu0 0
        %2401 = vmatprep.subr.bf16.mxu0 0
        %2402 = vmatpush2.bf16.msra.mxu0 0
        %2403 = vmatprep.subr.bf16.mxu0 0
        %2404 = vmatpush2.bf16.msra.mxu0 0
        %2405 = vmatprep.subr.bf16.mxu0 0
        %2406 = vmatpush2.bf16.msra.mxu0 0
        %2407 = vmatprep.subr.bf16.mxu0 0
        %2408 = vmatpush2.bf16.msra.mxu0 0
        %2409 = vmatprep.subr.bf16.mxu0 0
        %2410 = vmatpush2.bf16.msra.mxu0 0
        %2411 = vmatprep.subr.bf16.mxu0 0
        %2412 = vmatpush2.bf16.msra.mxu0 0
        %2413 = vmatprep.mubr.bf16.mxu0 0
        %2414 = vmatmul.mubr.bf16.gmra.mxu0 %v2357
        %v2415 = vpop.f32.mrf.mxu0
        %v2416 = vadd.f32 0.0, %v2415
        %v2417 = vpop.f32.mrf.mxu0
        %v2418 = vpop.f32.mrf.mxu0
        %v2419 = vadd.f32 0.0, %v2418
        %v2420 = vpop.f32.mrf.mxu0
        %2421 = vmatprep.mubr.bf16.mxu0 0
        %2422 = vmatmul.mubr.bf16.gmra.mxu0 %v2358
        %v2423 = vpop.f32.mrf.mxu0
        %v2424 = vadd.f32 0.0, %v2423
        %v2425 = vpop.f32.mrf.mxu0
        %v2426 = vpop.f32.mrf.mxu0
        %v2427 = vadd.f32 0.0, %v2426
        %v2428 = vpop.f32.mrf.mxu0
        %2429 = vmatprep.mubr.bf16.mxu0 0
        %2430 = vmatmul.mubr.bf16.gmra.mxu0 %v2359
        %v2431 = vpop.f32.mrf.mxu0
        %v2432 = vadd.f32 0.0, %v2431
        %v2433 = vpop.f32.mrf.mxu0
        %v2434 = vpop.f32.mrf.mxu0
        %v2435 = vadd.f32 0.0, %v2434
        %v2436 = vpop.f32.mrf.mxu0
        %2437 = vmatprep.mubr.bf16.mxu0 0
        %2438 = vmatmul.mubr.bf16.gmra.mxu0 %v2360
        %v2439 = vpop.f32.mrf.mxu0
        %v2440 = vadd.f32 0.0, %v2439
        %v2441 = vpop.f32.mrf.mxu0
        %v2442 = vpop.f32.mrf.mxu0
        %v2443 = vadd.f32 0.0, %v2442
        %v2444 = vpop.f32.mrf.mxu0
        %2445 = vmatprep.mubr.bf16.mxu0 0
        %2446 = vmatmul.mubr.bf16.gmra.mxu0 %v2361
        %v2447 = vpop.f32.mrf.mxu0
        %v2448 = vadd.f32 0.0, %v2447
        %v2449 = vpop.f32.mrf.mxu0
        %v2450 = vpop.f32.mrf.mxu0
        %v2451 = vadd.f32 0.0, %v2450
        %v2452 = vpop.f32.mrf.mxu0
        %2453 = vmatprep.mubr.bf16.mxu0 0
        %2454 = vmatmul.mubr.bf16.gmra.mxu0 %v2362
        %v2455 = vpop.f32.mrf.mxu0
        %v2456 = vadd.f32 0.0, %v2455
        %v2457 = vpop.f32.mrf.mxu0
        %v2458 = vpop.f32.mrf.mxu0
        %v2459 = vadd.f32 0.0, %v2458
        %v2460 = vpop.f32.mrf.mxu0
        %2461 = vmatprep.mubr.bf16.mxu0 0
        %2462 = vmatmul.mubr.bf16.gmra.mxu0 %v2363
        %v2463 = vpop.f32.mrf.mxu0
        %v2464 = vadd.f32 0.0, %v2463
        %v2465 = vpop.f32.mrf.mxu0
        %v2466 = vpop.f32.mrf.mxu0
        %v2467 = vadd.f32 0.0, %v2466
        %v2468 = vpop.f32.mrf.mxu0
        %2469 = vmatprep.mubr.bf16.mxu0 0
        %2470 = vmatmul.mubr.bf16.gmra.mxu0 %v2364
        %v2471 = vpop.f32.mrf.mxu0
        %v2472 = vadd.f32 0.0, %v2471
        %v2473 = vpop.f32.mrf.mxu0
        %v2474 = vpop.f32.mrf.mxu0
        %v2475 = vadd.f32 0.0, %v2474
        %v2476 = vpop.f32.mrf.mxu0
        %2477 = vmatprep.mubr.bf16.mxu0 0
        %2478 = vmatmul.mubr.bf16.gmra.mxu0 %v2365
        %v2479 = vpop.f32.mrf.mxu0
        %v2480 = vadd.f32 0.0, %v2479
        %v2481 = vpop.f32.mrf.mxu0
        %v2482 = vpop.f32.mrf.mxu0
        %v2483 = vadd.f32 0.0, %v2482
        %v2484 = vpop.f32.mrf.mxu0
        %2485 = vmatprep.mubr.bf16.mxu0 0
        %2486 = vmatmul.mubr.bf16.gmra.mxu0 %v2366
        %v2487 = vpop.f32.mrf.mxu0
        %v2488 = vadd.f32 0.0, %v2487
        %v2489 = vpop.f32.mrf.mxu0
        %v2490 = vpop.f32.mrf.mxu0
        %v2491 = vadd.f32 0.0, %v2490
        %v2492 = vpop.f32.mrf.mxu0
        %2493 = vmatprep.mubr.bf16.mxu0 0
        %2494 = vmatmul.mubr.bf16.gmra.mxu0 %v2367
        %v2495 = vpop.f32.mrf.mxu0
        %v2496 = vadd.f32 0.0, %v2495
        %v2497 = vpop.f32.mrf.mxu0
        %v2498 = vpop.f32.mrf.mxu0
        %v2499 = vadd.f32 0.0, %v2498
        %v2500 = vpop.f32.mrf.mxu0
        %2501 = vmatprep.mubr.bf16.mxu0 0
        %2502 = vmatmul.mubr.bf16.gmra.mxu0 %v2368
        %v2503 = vpop.f32.mrf.mxu0
        %v2504 = vadd.f32 0.0, %v2503
        %v2505 = vpop.f32.mrf.mxu0
        %v2506 = vpop.f32.mrf.mxu0
        %v2507 = vadd.f32 0.0, %v2506
        %v2508 = vpop.f32.mrf.mxu0
        %2509 = vmatprep.mubr.bf16.mxu0 0
        %2510 = vmatmul.mubr.bf16.gmra.mxu0 %v2369
        %v2511 = vpop.f32.mrf.mxu0
        %v2512 = vadd.f32 0.0, %v2511
        %v2513 = vpop.f32.mrf.mxu0
        %v2514 = vpop.f32.mrf.mxu0
        %v2515 = vadd.f32 0.0, %v2514
        %v2516 = vpop.f32.mrf.mxu0
        %2517 = vmatprep.mubr.bf16.mxu0 0
        %2518 = vmatmul.mubr.bf16.gmra.mxu0 %v2370
        %v2519 = vpop.f32.mrf.mxu0
        %v2520 = vadd.f32 0.0, %v2519
        %v2521 = vpop.f32.mrf.mxu0
        %v2522 = vpop.f32.mrf.mxu0
        %v2523 = vadd.f32 0.0, %v2522
        %v2524 = vpop.f32.mrf.mxu0
        %2525 = vmatprep.mubr.bf16.mxu0 0
        %2526 = vmatmul.mubr.bf16.gmra.mxu0 %v2371
        %v2527 = vpop.f32.mrf.mxu0
        %v2528 = vadd.f32 0.0, %v2527
        %v2529 = vpop.f32.mrf.mxu0
        %v2530 = vpop.f32.mrf.mxu0
        %v2531 = vadd.f32 0.0, %v2530
        %v2532 = vpop.f32.mrf.mxu0
        %2533 = vmatprep.mubr.bf16.mxu0 0
        %2534 = vmatmul.mubr.bf16.gmra.mxu0 %v2372
        %v2535 = vpop.f32.mrf.mxu0
        %v2536 = vadd.f32 0.0, %v2535
        %v2537 = vpop.f32.mrf.mxu0
        %v2538 = vpop.f32.mrf.mxu0
        %v2539 = vadd.f32 0.0, %v2538
        %v2540 = vpop.f32.mrf.mxu0
        %2541 = vdwg.mxu0
        %v2542 = vrcp.pop %v2294
        %v2543 = vrcp.pop %v2296
        %v2544 = vrcp.pop %v2298
        %v2545 = vrcp.pop %v2300
        %v2546 = vrcp.pop %v2302
        %v2547 = vrcp.pop %v2304
        %v2548 = vrcp.pop %v2306
        %v2549 = vrcp.pop %v2308
        %v2550 = vrcp.pop %v2310
        %v2551 = vrcp.pop %v2312
        %v2552 = vrcp.pop %v2314
        %v2553 = vrcp.pop %v2316
        %v2554 = vrcp.pop %v2318
        %v2555 = vrcp.pop %v2320
        %v2556 = vrcp.pop %v2322
        %v2557 = vrcp.pop %v2324
        %v2558 = vrcp.pop %v2326
        %v2559 = vrcp.pop %v2328
        %v2560 = vrcp.pop %v2330
        %v2561 = vrcp.pop %v2332
        %v2562 = vrcp.pop %v2334
        %v2563 = vrcp.pop %v2336
        %v2564 = vrcp.pop %v2338
        %v2565 = vrcp.pop %v2340
        %v2566 = vrcp.pop %v2342
        %v2567 = vrcp.pop %v2344
        %v2568 = vrcp.pop %v2346
        %v2569 = vrcp.pop %v2348
        %v2570 = vrcp.pop %v2350
        %v2571 = vrcp.pop %v2352
        %v2572 = vrcp.pop %v2354
        %v2573 = vrcp.pop %v2356
        %v2574 = vmul.f32 %v2416, %v2542
        %v2575 = vmul.f32 %v2419, %v2543
        %v2576 = vmul.f32 %v2424, %v2544
        %v2577 = vmul.f32 %v2427, %v2545
        %v2578 = vmul.f32 %v2432, %v2546
        %v2579 = vmul.f32 %v2435, %v2547
        %v2580 = vmul.f32 %v2440, %v2548
        %v2581 = vmul.f32 %v2443, %v2549
        %v2582 = vmul.f32 %v2448, %v2550
        %v2583 = vmul.f32 %v2451, %v2551
        %v2584 = vmul.f32 %v2456, %v2552
        %v2585 = vmul.f32 %v2459, %v2553
        %v2586 = vmul.f32 %v2464, %v2554
        %v2587 = vmul.f32 %v2467, %v2555
        %v2588 = vmul.f32 %v2472, %v2556
        %v2589 = vmul.f32 %v2475, %v2557
        %v2590 = vmul.f32 %v2480, %v2558
        %v2591 = vmul.f32 %v2483, %v2559
        %v2592 = vmul.f32 %v2488, %v2560
        %v2593 = vmul.f32 %v2491, %v2561
        %v2594 = vmul.f32 %v2496, %v2562
        %v2595 = vmul.f32 %v2499, %v2563
        %v2596 = vmul.f32 %v2504, %v2564
        %v2597 = vmul.f32 %v2507, %v2565
        %v2598 = vmul.f32 %v2512, %v2566
        %v2599 = vmul.f32 %v2515, %v2567
        %v2600 = vmul.f32 %v2520, %v2568
        %v2601 = vmul.f32 %v2523, %v2569
        %v2602 = vmul.f32 %v2528, %v2570
        %v2603 = vmul.f32 %v2531, %v2571
        %v2604 = vmul.f32 %v2536, %v2572
        %v2605 = vmul.f32 %v2539, %v2573
        %v2606 = vpack.c.bf16 %v2575, %v2574
        %v2607 = vpack.c.bf16 %v2577, %v2576
        %v2608 = vpack.c.bf16 %v2579, %v2578
        %v2609 = vpack.c.bf16 %v2581, %v2580
        %v2610 = vpack.c.bf16 %v2583, %v2582
        %v2611 = vpack.c.bf16 %v2585, %v2584
        %v2612 = vpack.c.bf16 %v2587, %v2586
        %v2613 = vpack.c.bf16 %v2589, %v2588
        %v2614 = vpack.c.bf16 %v2591, %v2590
        %v2615 = vpack.c.bf16 %v2593, %v2592
        %v2616 = vpack.c.bf16 %v2595, %v2594
        %v2617 = vpack.c.bf16 %v2597, %v2596
        %v2618 = vpack.c.bf16 %v2599, %v2598
        %v2619 = vpack.c.bf16 %v2601, %v2600
        %v2620 = vpack.c.bf16 %v2603, %v2602
        %v2621 = vpack.c.bf16 %v2605, %v2604
        %v2622 = vld [vmem:[%s13] sm:$0xf]
        %v2623 = vld [vmem:[%s13 + $0x4] sm:$0xf]
        %v2624 = vld [vmem:[%s13 + $0x8] sm:$0xf]
        %v2625 = vld [vmem:[%s13 + $0xc] sm:$0xf]
        %v2626 = vld [vmem:[%s13 + $0x10] sm:$0xf]
        %v2627 = vld [vmem:[%s13 + $0x14] sm:$0xf]
        %v2628 = vld [vmem:[%s13 + $0x18] sm:$0xf]
        %v2629 = vld [vmem:[%s13 + $0x1c] sm:$0xf]
        %v2638 = vunpack.c.l.b16 %v2622
        %v2639 = vunpack.c.l.b16 %v2623
        %v2640 = vunpack.c.l.b16 %v2624
        %v2641 = vunpack.c.l.b16 %v2625
        %v2642 = vunpack.c.l.b16 %v2626
        %v2643 = vunpack.c.l.b16 %v2627
        %v2644 = vunpack.c.l.b16 %v2628
        %v2645 = vunpack.c.l.b16 %v2629
        %v2646 = vpack.c.b16 %v2639, %v2638
        %v2647 = vpack.c.b16 %v2641, %v2640
        %v2648 = vpack.c.b16 %v2643, %v2642
        %v2649 = vpack.c.b16 %v2645, %v2644
        %v2655 = vsel %vm813, %v2606, 0
        %v2658 = vsel %vm813, %v2607, 0
        %v2661 = vsel %vm813, %v2608, 0
        %v2664 = vsel %vm813, %v2609, 0
        %v2667 = vsel %vm813, %v2610, 0
        %v2670 = vsel %vm813, %v2611, 0
        %v2673 = vsel %vm813, %v2612, 0
        %v2676 = vsel %vm813, %v2613, 0
        %v2679 = vsel %vm813, %v2614, 0
        %v2682 = vsel %vm813, %v2615, 0
        %v2685 = vsel %vm813, %v2616, 0
        %v2688 = vsel %vm813, %v2617, 0
        %v2691 = vsel %vm813, %v2618, 0
        %v2694 = vsel %vm813, %v2619, 0
        %v2697 = vsel %vm813, %v2620, 0
        %v2700 = vsel %vm813, %v2621, 0
        %2702 = vmatprep.subr.bf16.mxu0 0
        %2703 = vmatpush1.bf16.msra.mxu0 0
        %2704 = vmatprep.subr.bf16.mxu0 0
        %2705 = vmatpush1.bf16.msra.mxu0 0
        %2706 = vmatprep.subr.bf16.mxu0 0
        %2707 = vmatpush1.bf16.msra.mxu0 0
        %2708 = vmatprep.subr.bf16.mxu0 0
        %2709 = vmatpush1.bf16.msra.mxu0 0
        %2710 = vmatprep.subr.bf16.mxu0 0
        %2711 = vmatpush1.bf16.msra.mxu0 %v2649
        %2712 = vmatprep.subr.bf16.mxu0 0
        %2713 = vmatpush1.bf16.msra.mxu0 %v2648
        %2714 = vmatprep.subr.bf16.mxu0 0
        %2715 = vmatpush1.bf16.msra.mxu0 %v2647
        %2716 = vmatprep.subr.bf16.mxu0 0
        %2717 = vmatpush1.bf16.msra.mxu0 %v2646
        %2718 = vmatprep.subr.bf16.mxu0 0
        %2719 = vmatpush2.bf16.msra.mxu0 0
        %2720 = vmatprep.subr.bf16.mxu0 0
        %2721 = vmatpush2.bf16.msra.mxu0 0
        %2722 = vmatprep.subr.bf16.mxu0 0
        %2723 = vmatpush2.bf16.msra.mxu0 0
        %2724 = vmatprep.subr.bf16.mxu0 0
        %2725 = vmatpush2.bf16.msra.mxu0 0
        %2726 = vmatprep.subr.bf16.mxu0 0
        %2727 = vmatpush2.bf16.msra.mxu0 0
        %2728 = vmatprep.subr.bf16.mxu0 0
        %2729 = vmatpush2.bf16.msra.mxu0 0
        %2730 = vmatprep.subr.bf16.mxu0 0
        %2731 = vmatpush2.bf16.msra.mxu0 0
        %2732 = vmatprep.subr.bf16.mxu0 0
        %2733 = vmatpush2.bf16.msra.mxu0 0
        %2734 = vmatprep.mubr.bf16.mxu0 0
        %2735 = vmatmul.mubr.bf16.gmra.mxu0 %v2655
        %v2736 = vpop.f32.mrf.mxu0
        %v2737 = vadd.f32 0.0, %v2736
        %v2738 = vpop.f32.mrf.mxu0
        %v2739 = vpop.f32.mrf.mxu0
        %v2740 = vadd.f32 0.0, %v2739
        %v2741 = vpop.f32.mrf.mxu0
        %2742 = vmatprep.mubr.bf16.mxu0 0
        %2743 = vmatmul.mubr.bf16.gmra.mxu0 %v2658
        %v2744 = vpop.f32.mrf.mxu0
        %v2745 = vadd.f32 0.0, %v2744
        %v2746 = vpop.f32.mrf.mxu0
        %v2747 = vpop.f32.mrf.mxu0
        %v2748 = vadd.f32 0.0, %v2747
        %v2749 = vpop.f32.mrf.mxu0
        %2750 = vmatprep.mubr.bf16.mxu0 0
        %2751 = vmatmul.mubr.bf16.gmra.mxu0 %v2661
        %v2752 = vpop.f32.mrf.mxu0
        %v2753 = vadd.f32 0.0, %v2752
        %v2754 = vpop.f32.mrf.mxu0
        %v2755 = vpop.f32.mrf.mxu0
        %v2756 = vadd.f32 0.0, %v2755
        %v2757 = vpop.f32.mrf.mxu0
        %2758 = vmatprep.mubr.bf16.mxu0 0
        %2759 = vmatmul.mubr.bf16.gmra.mxu0 %v2664
        %v2760 = vpop.f32.mrf.mxu0
        %v2761 = vadd.f32 0.0, %v2760
        %v2762 = vpop.f32.mrf.mxu0
        %v2763 = vpop.f32.mrf.mxu0
        %v2764 = vadd.f32 0.0, %v2763
        %v2765 = vpop.f32.mrf.mxu0
        %2766 = vmatprep.mubr.bf16.mxu0 0
        %2767 = vmatmul.mubr.bf16.gmra.mxu0 %v2667
        %v2768 = vpop.f32.mrf.mxu0
        %v2769 = vadd.f32 0.0, %v2768
        %v2770 = vpop.f32.mrf.mxu0
        %v2771 = vpop.f32.mrf.mxu0
        %v2772 = vadd.f32 0.0, %v2771
        %v2773 = vpop.f32.mrf.mxu0
        %2774 = vmatprep.mubr.bf16.mxu0 0
        %2775 = vmatmul.mubr.bf16.gmra.mxu0 %v2670
        %v2776 = vpop.f32.mrf.mxu0
        %v2777 = vadd.f32 0.0, %v2776
        %v2778 = vpop.f32.mrf.mxu0
        %v2779 = vpop.f32.mrf.mxu0
        %v2780 = vadd.f32 0.0, %v2779
        %v2781 = vpop.f32.mrf.mxu0
        %2782 = vmatprep.mubr.bf16.mxu0 0
        %2783 = vmatmul.mubr.bf16.gmra.mxu0 %v2673
        %v2784 = vpop.f32.mrf.mxu0
        %v2785 = vadd.f32 0.0, %v2784
        %v2786 = vpop.f32.mrf.mxu0
        %v2787 = vpop.f32.mrf.mxu0
        %v2788 = vadd.f32 0.0, %v2787
        %v2789 = vpop.f32.mrf.mxu0
        %2790 = vmatprep.mubr.bf16.mxu0 0
        %2791 = vmatmul.mubr.bf16.gmra.mxu0 %v2676
        %v2792 = vpop.f32.mrf.mxu0
        %v2793 = vadd.f32 0.0, %v2792
        %v2794 = vpop.f32.mrf.mxu0
        %v2795 = vpop.f32.mrf.mxu0
        %v2796 = vadd.f32 0.0, %v2795
        %v2797 = vpop.f32.mrf.mxu0
        %2798 = vmatprep.mubr.bf16.mxu0 0
        %2799 = vmatmul.mubr.bf16.gmra.mxu0 %v2679
        %v2800 = vpop.f32.mrf.mxu0
        %v2801 = vadd.f32 0.0, %v2800
        %v2802 = vpop.f32.mrf.mxu0
        %v2803 = vpop.f32.mrf.mxu0
        %v2804 = vadd.f32 0.0, %v2803
        %v2805 = vpop.f32.mrf.mxu0
        %2806 = vmatprep.mubr.bf16.mxu0 0
        %2807 = vmatmul.mubr.bf16.gmra.mxu0 %v2682
        %v2808 = vpop.f32.mrf.mxu0
        %v2809 = vadd.f32 0.0, %v2808
        %v2810 = vpop.f32.mrf.mxu0
        %v2811 = vpop.f32.mrf.mxu0
        %v2812 = vadd.f32 0.0, %v2811
        %v2813 = vpop.f32.mrf.mxu0
        %2814 = vmatprep.mubr.bf16.mxu0 0
        %2815 = vmatmul.mubr.bf16.gmra.mxu0 %v2685
        %v2816 = vpop.f32.mrf.mxu0
        %v2817 = vadd.f32 0.0, %v2816
        %v2818 = vpop.f32.mrf.mxu0
        %v2819 = vpop.f32.mrf.mxu0
        %v2820 = vadd.f32 0.0, %v2819
        %v2821 = vpop.f32.mrf.mxu0
        %2822 = vmatprep.mubr.bf16.mxu0 0
        %2823 = vmatmul.mubr.bf16.gmra.mxu0 %v2688
        %v2824 = vpop.f32.mrf.mxu0
        %v2825 = vadd.f32 0.0, %v2824
        %v2826 = vpop.f32.mrf.mxu0
        %v2827 = vpop.f32.mrf.mxu0
        %v2828 = vadd.f32 0.0, %v2827
        %v2829 = vpop.f32.mrf.mxu0
        %2830 = vmatprep.mubr.bf16.mxu0 0
        %2831 = vmatmul.mubr.bf16.gmra.mxu0 %v2691
        %v2832 = vpop.f32.mrf.mxu0
        %v2833 = vadd.f32 0.0, %v2832
        %v2834 = vpop.f32.mrf.mxu0
        %v2835 = vpop.f32.mrf.mxu0
        %v2836 = vadd.f32 0.0, %v2835
        %v2837 = vpop.f32.mrf.mxu0
        %2838 = vmatprep.mubr.bf16.mxu0 0
        %2839 = vmatmul.mubr.bf16.gmra.mxu0 %v2694
        %v2840 = vpop.f32.mrf.mxu0
        %v2841 = vadd.f32 0.0, %v2840
        %v2842 = vpop.f32.mrf.mxu0
        %v2843 = vpop.f32.mrf.mxu0
        %v2844 = vadd.f32 0.0, %v2843
        %v2845 = vpop.f32.mrf.mxu0
        %2846 = vmatprep.mubr.bf16.mxu0 0
        %2847 = vmatmul.mubr.bf16.gmra.mxu0 %v2697
        %v2848 = vpop.f32.mrf.mxu0
        %v2849 = vadd.f32 0.0, %v2848
        %v2850 = vpop.f32.mrf.mxu0
        %v2851 = vpop.f32.mrf.mxu0
        %v2852 = vadd.f32 0.0, %v2851
        %v2853 = vpop.f32.mrf.mxu0
        %2854 = vmatprep.mubr.bf16.mxu0 0
        %2855 = vmatmul.mubr.bf16.gmra.mxu0 %v2700
        %v2856 = vpop.f32.mrf.mxu0
        %v2857 = vadd.f32 0.0, %v2856
        %v2858 = vpop.f32.mrf.mxu0
        %v2859 = vpop.f32.mrf.mxu0
        %v2860 = vadd.f32 0.0, %v2859
        %v2861 = vpop.f32.mrf.mxu0
        %2862 = vdwg.mxu0
        %v2863 = vadd.f32 %v1136, %v2737
        %v2864 = vadd.f32 %v1139, %v2740
        %v2865 = vadd.f32 %v1144, %v2745
        %v2866 = vadd.f32 %v1147, %v2748
        %v2867 = vadd.f32 %v1152, %v2753
        %v2868 = vadd.f32 %v1155, %v2756
        %v2869 = vadd.f32 %v1160, %v2761
        %v2870 = vadd.f32 %v1163, %v2764
        %v2871 = vadd.f32 %v1168, %v2769
        %v2872 = vadd.f32 %v1171, %v2772
        %v2873 = vadd.f32 %v1176, %v2777
        %v2874 = vadd.f32 %v1179, %v2780
        %v2875 = vadd.f32 %v1184, %v2785
        %v2876 = vadd.f32 %v1187, %v2788
        %v2877 = vadd.f32 %v1192, %v2793
        %v2878 = vadd.f32 %v1195, %v2796
        %v2879 = vadd.f32 %v1200, %v2801
        %v2880 = vadd.f32 %v1203, %v2804
        %v2881 = vadd.f32 %v1208, %v2809
        %v2882 = vadd.f32 %v1211, %v2812
        %v2883 = vadd.f32 %v1216, %v2817
        %v2884 = vadd.f32 %v1219, %v2820
        %v2885 = vadd.f32 %v1224, %v2825
        %v2886 = vadd.f32 %v1227, %v2828
        %v2887 = vadd.f32 %v1232, %v2833
        %v2888 = vadd.f32 %v1235, %v2836
        %v2889 = vadd.f32 %v1240, %v2841
        %v2890 = vadd.f32 %v1243, %v2844
        %v2891 = vadd.f32 %v1248, %v2849
        %v2892 = vadd.f32 %v1251, %v2852
        %v2893 = vadd.f32 %v1256, %v2857
        %v2894 = vadd.f32 %v1259, %v2860
        %v2895 = vld [vmem:[%s14] sm:$0x3]
        %v2896 = vpack.c.bf16 %v2864, %v2863
        %v2897 = vpack.c.bf16 %v2866, %v2865
        %v2898 = vpack.c.bf16 %v2868, %v2867
        %v2899 = vpack.c.bf16 %v2870, %v2869
        %v2900 = vpack.c.bf16 %v2872, %v2871
        %v2901 = vpack.c.bf16 %v2874, %v2873
        %v2902 = vpack.c.bf16 %v2876, %v2875
        %v2903 = vpack.c.bf16 %v2878, %v2877
        %v2904 = vpack.c.bf16 %v2880, %v2879
        %v2905 = vpack.c.bf16 %v2882, %v2881
        %v2906 = vpack.c.bf16 %v2884, %v2883
        %v2907 = vpack.c.bf16 %v2886, %v2885
        %v2908 = vpack.c.bf16 %v2888, %v2887
        %v2909 = vpack.c.bf16 %v2890, %v2889
        %v2910 = vpack.c.bf16 %v2892, %v2891
        %v2911 = vpack.c.bf16 %v2894, %v2893
        %v2913 = vsel %vm813, %v2895, 0
        %v2916 = vsel %vm813, %v2896, 0
        %v2919 = vsel %vm813, %v2897, 0
        %v2922 = vsel %vm813, %v2898, 0
        %v2925 = vsel %vm813, %v2899, 0
        %v2928 = vsel %vm813, %v2900, 0
        %v2931 = vsel %vm813, %v2901, 0
        %v2934 = vsel %vm813, %v2902, 0
        %v2937 = vsel %vm813, %v2903, 0
        %v2940 = vsel %vm813, %v2904, 0
        %v2943 = vsel %vm813, %v2905, 0
        %v2946 = vsel %vm813, %v2906, 0
        %v2949 = vsel %vm813, %v2907, 0
        %v2952 = vsel %vm813, %v2908, 0
        %v2955 = vsel %vm813, %v2909, 0
        %v2958 = vsel %vm813, %v2910, 0
        %v2961 = vsel %vm813, %v2911, 0
        %2963 = vmatprep.subr.bf16.mxu0 0
        %2964 = vmatpush1.bf16.xpose.msra.mxu0 %v2937
        %2965 = vmatprep.subr.bf16.mxu0 0
        %2966 = vmatpush1.bf16.xpose.msra.mxu0 %v2934
        %2967 = vmatprep.subr.bf16.mxu0 0
        %2968 = vmatpush1.bf16.xpose.msra.mxu0 %v2931
        %2969 = vmatprep.subr.bf16.mxu0 0
        %2970 = vmatpush1.bf16.xpose.msra.mxu0 %v2928
        %2971 = vmatprep.subr.bf16.mxu0 0
        %2972 = vmatpush1.bf16.xpose.msra.mxu0 %v2925
        %2973 = vmatprep.subr.bf16.mxu0 0
        %2974 = vmatpush1.bf16.xpose.msra.mxu0 %v2922
        %2975 = vmatprep.subr.bf16.mxu0 0
        %2976 = vmatpush1.bf16.xpose.msra.mxu0 %v2919
        %2977 = vmatprep.subr.bf16.mxu0 0
        %2978 = vmatpush1.bf16.xpose.msra.mxu0 %v2916
        %2979 = vmatprep.subr.bf16.mxu0 0
        %2980 = vmatpush2.bf16.xpose.msra.mxu0 %v2961
        %2981 = vmatprep.subr.bf16.mxu0 0
        %2982 = vmatpush2.bf16.xpose.msra.mxu0 %v2958
        %2983 = vmatprep.subr.bf16.mxu0 0
        %2984 = vmatpush2.bf16.xpose.msra.mxu0 %v2955
        %2985 = vmatprep.subr.bf16.mxu0 0
        %2986 = vmatpush2.bf16.xpose.msra.mxu0 %v2952
        %2987 = vmatprep.subr.bf16.mxu0 0
        %2988 = vmatpush2.bf16.xpose.msra.mxu0 %v2949
        %2989 = vmatprep.subr.bf16.mxu0 0
        %2990 = vmatpush2.bf16.xpose.msra.mxu0 %v2946
        %2991 = vmatprep.subr.bf16.mxu0 0
        %2992 = vmatpush2.bf16.xpose.msra.mxu0 %v2943
        %2993 = vmatprep.subr.bf16.mxu0 0
        %2994 = vmatpush2.bf16.xpose.msra.mxu0 %v2940
        %2995 = vmatprep.mubr.bf16.mxu0 0
        %2996 = vmatmul.mubr.bf16.gmra.mxu0 %v2913
        %v2997 = vpop.f32.mrf.mxu0
        %v2998 = vadd.f32 0.0, %v2997
        %v2999 = vpop.f32.mrf.mxu0
        %v3000 = vadd.f32 0.0, %v2999
        %v3001 = vpop.f32.mrf.mxu0
        %v3002 = vpop.f32.mrf.mxu0
        %3003 = vdwg.mxu0
        %s3004 = sld [smem:[#allocation2 + %s37]]
        %s3005 = sld [smem:[#allocation5 + %s37]]
        %v3006 = vld [vmem:[%s636] sm:$0xff]
        %v3007 = vstv %s3005
        %v3008 = vmul.f32 %v3007, %v2998
        %v3009 = vmul.f32 %v3007, %v3000
        %v3012 = vcombine.low %v3008, %v3009
        %v3014 = vsub.f32 %v3006, %v3012
        %v3015 = vstv %s3004
        %v3016 = vmul.f32 %v3014, %v3015
        %3017 = vst [vmem:[%s649] sm:$0xff] %v3016
        %p3018 = scmp.lt.s32.totalorder %s37, 1
        %s3019 = scalar_select %p3018, %s37, 1
        %s3020 = smul.addr %s3019, 2
        %s3021 = smul.addr %s3020, 4
        %s3022 = scalar_lea.vmem %s15, %s3021
        %s3023 = sand.u32 %s406, 1
        %s3024 = scalar_lea.sflag [#allocation3], %s3023
        %s3025 = sand.u32 %s406, 1
        %s3026 = smul.addr %s3025, 8
        %s3027 = scalar_lea.vmem [#allocation7], %s3026
        %s3028 = sand.u32 %s432, 1
        %s3029 = scalar_lea.sflag [#allocation9], %s3028
        %s3030 = sand.u32 %s432, 1
        %s3031 = scalar_lea.vmem [#allocation8], %s3030
        // Predicated region
        $region89: #{_generator_step.1} parent=79 // pred_check
          %p3032 = pneg %p390
        $region90: #{_generator_step.1} parent=79 // pred_check_branch
          %3034 = sbr.rel (%p3032) target = $region92
        $region91: #{_generator_step.1} parent=79 // pred_region
          _
        $region92: #{_generator_step.1} parent=79 // pred_fallthru
          _
        // Predicated region
        $region93: #{_generator_step.1} parent=79 // pred_check
          %p3035 = pneg %p416
        $region94: #{_generator_step.1} parent=79 // pred_check_branch
          %3037 = sbr.rel (%p3035) target = $region96
        $region95: #{_generator_step.1} parent=79 // pred_region
          %s3039 = ssub.s32 128, 128
          %3040 = vsyncadd %s3024, %s3039
          %s3041 = smul.addr %s37, 128
          %s3042 = scalar_lea.hbm %s16, %s3041
          %s3044 = sshll.u32 %s3027, 4
          %s3045 = int_to_ptr.vmem [resolvable:$true] %s3044
          %3047 = dma.vmem_to_hbm [thread:$0]  %s3045, 128, %s3042, %s3024
        $region96: #{_generator_step.1} parent=79 // pred_fallthru
          _
        // Predicated region
        $region97: #{_generator_step.1} parent=79 // pred_check
          %p3048 = pneg %p442
        $region98: #{_generator_step.1} parent=79 // pred_check_branch
          %3050 = sbr.rel (%p3048) target = $region100
        $region99: #{_generator_step.1} parent=79 // pred_region
          %s3052 = ssub.s32 16, 16
          %3053 = vsyncadd %s3029, %s3052
          %s3054 = smul.addr %s37, 16
          %s3055 = scalar_lea.hbm %s17, %s3054
          %s3057 = sshll.u32 %s3031, 4
          %s3058 = int_to_ptr.vmem [resolvable:$true] %s3057
          %3060 = dma.vmem_to_hbm [thread:$0]  %s3058, 16, %s3055, %s3029
        $region100: #{_generator_step.1} parent=79 // pred_fallthru
          _
      $region80: #{_generator_step.1} parent=5 // pred_fallthru
        _
      %p3061 = scmp.le.s32.totalorder 2, %s32
      // Predicated region
      $region101: #{_generator_step.1} parent=5 // pred_check
        %p3062 = pneg %p3061
      $region102: #{_generator_step.1} parent=5 // pred_check_branch
        %3064 = sbr.rel (%p3062) target = $region104
      $region103: #{_generator_step.1} parent=5 // pred_region
        %s3065 = ssub.s32 %s32, 2
        // Predicated region
        $region105: #{_generator_step.1} parent=103 // pred_check
          %p3066 = pneg %p396
        $region106: #{_generator_step.1} parent=103 // pred_check_branch
          %3068 = sbr.rel (%p3066) target = $region108
        $region107: #{_generator_step.1} parent=103 // pred_region
          %p3069 = scmp.lt.s32.totalorder %s38, 1
          %s3070 = scalar_select %p3069, %s38, 1
          %s3071 = smul.addr %s3070, 2
          %s3072 = smul.addr %s3071, 4
          %s3073 = scalar_lea.vmem %s15, %s3072
        $region108: #{_generator_step.1} parent=103 // pred_fallthru
          _
        // Predicated region
        $region109: #{_generator_step.1} parent=103 // pred_check
          %p3074 = pneg %p422
        $region110: #{_generator_step.1} parent=103 // pred_check_branch
          %3076 = sbr.rel (%p3074) target = $region112
        $region111: #{_generator_step.1} parent=103 // pred_region
          %s3077 = sand.u32 %s407, 1
          %s3078 = scalar_lea.sflag [#allocation3], %s3077
          %s3079 = sand.u32 %s407, 1
          %s3080 = smul.addr %s3079, 8
          %s3081 = scalar_lea.vmem [#allocation7], %s3080
          %3082 = dma.done %s3078, 128
        $region112: #{_generator_step.1} parent=103 // pred_fallthru
          _
        // Predicated region
        $region113: #{_generator_step.1} parent=103 // pred_check
          %p3083 = pneg %p448
        $region114: #{_generator_step.1} parent=103 // pred_check_branch
          %3085 = sbr.rel (%p3083) target = $region116
        $region115: #{_generator_step.1} parent=103 // pred_region
          %s3086 = sand.u32 %s433, 1
          %s3087 = scalar_lea.sflag [#allocation9], %s3086
          %s3088 = sand.u32 %s433, 1
          %s3089 = scalar_lea.vmem [#allocation8], %s3088
          %3090 = dma.done %s3087, 16
        $region116: #{_generator_step.1} parent=103 // pred_fallthru
          _
      $region104: #{_generator_step.1} parent=5 // pred_fallthru
        _
    $region6: #{_generator_step.1} parent=1 // loop_footer
      %s36 = sadd.s32 1, %s32
    $region7: #{_generator_step.1} parent=1 // loop_footer_branch
      %31 = sbr.rel target = $region3
    $region8: #{_generator_step.1} parent=1 // loop_exit
      _
    %3091 = vsyncpa [#allocation3], 1
    %s3092 = scalar_lea.sflag [#allocation3], 1
    %3093 = vsyncpa %s3092, 1
    %3094 = vsyncpa [#allocation9], 1
    %s3095 = scalar_lea.sflag [#allocation9], 1
    %3096 = vsyncpa %s3095, 1
    %3097 = vsyncpa [#allocation4], 1
    %s3098 = scalar_lea.sflag [#allocation4], 1
    %3099 = vsyncpa %s3098, 1
    %3100 = vsyncpa [#allocation6], 1

</llo_original>
